<compile_context>
chip_gen: v7x
topology: tpu7x:2x2x1
jax: 0.10.0
libtpu: 0.0.40
codegen_flags: <defaults>
</compile_context>

<pallas_src>
import math

import jax
import jax.numpy as jnp
from jax.experimental import pallas as pl
from jax.experimental.pallas import tpu as pltpu

# ---- module-consistent config -------------------------------------------
B, S, H = 2, 8, 32
NUM_HEADS = 4
HEAD_DIM = H // NUM_HEADS               # 8
NUM_KV_HEADS = 2                        # GQA
GROUP = NUM_HEADS // NUM_KV_HEADS       # 2
KV_WIDTH = 2 * NUM_KV_HEADS * HEAD_DIM  # 32, packed per row: [k0 | v0 | k1 | v1]
INTERMEDIATE = 4 * H                    # 128
EPS = 1e-5                              # layer_norm_epsilon
M_RESIDUAL = None                       # config.m_residual (None -> no scaling)
ROPE_THETA = 10000.0
ROWS = B * S                            # 16


def _layer_norm(x, g, b):
    mu = jnp.mean(x, axis=-1, keepdims=True)
    var = jnp.mean(jnp.square(x - mu), axis=-1, keepdims=True)
    return (x - mu) * jax.lax.rsqrt(var + EPS) * g + b


def _block_kernel(hs_ref, wsq_ref, wmlp_ref, aux_ref, out_ref, kv_ref, o_scratch):
    hidden = hs_ref[...]                         # (ROWS, H)

    # ---- unpack fused parameter slabs (static value slices) ----
    wsq = wsq_ref[...]                           # (5H, H)
    w_kv = wsq[0 * H:1 * H]
    w_q = wsq[1 * H:2 * H]                       # 1/sqrt(head_dim) pre-folded
    w_o = wsq[2 * H:3 * H]
    r_q = wsq[3 * H:4 * H]                       # block-diag rotate_half (q layout)
    r_kv = wsq[4 * H:5 * H]                      # rotate_half on key lanes only

    wmlp = wmlp_ref[...]                         # (2H+1, INTERMEDIATE)
    w_fc = wmlp[0:H]                             # (H, INTERMEDIATE)
    w_projT = wmlp[H:2 * H]                      # (H, INTERMEDIATE) == W_proj.T
    b_fc = wmlp[2 * H:2 * H + 1]                 # (1, INTERMEDIATE)

    aux = aux_ref[...]                           # (82, H)
    cos_q = aux[0 * ROWS:1 * ROWS]
    sin_q = aux[1 * ROWS:2 * ROWS]
    cos_kv = aux[2 * ROWS:3 * ROWS]
    sin_kv = aux[3 * ROWS:4 * ROWS]
    moff = 4 * ROWS
    mask_bias = aux[moff:moff + S, 0:S]          # (S, S) additive causal mask
    voff = moff + S

    def vrow(i):
        return aux[voff + i:voff + i + 1, :]     # (1, H)

    lnkv_g, lnkv_b = vrow(0), vrow(1)
    ln1_g, ln1_b = vrow(2), vrow(3)
    ln2_g, ln2_b = vrow(4), vrow(5)
    b_kv, b_q, b_o, b_proj = vrow(6), vrow(7), vrow(8), vrow(9)

    # ---- KeyValueProjection + RoPE on keys; packed lane-dense KV output ----
    x_kv = _layer_norm(hidden, lnkv_g, lnkv_b)
    kv = jnp.dot(x_kv, w_kv, preferred_element_type=jnp.float32) + b_kv
    # key lanes: k*cos + rotate_half(k)*sin ; value lanes: cos=1, sin=0 -> passthrough
    kv = kv * cos_kv + jnp.dot(kv, r_kv, preferred_element_type=jnp.float32) * sin_kv
    kv_ref[...] = kv

    # ---- ln_1 + query projection (scale folded in) + RoPE ----
    x1 = _layer_norm(hidden, ln1_g, ln1_b)
    q = jnp.dot(x1, w_q, preferred_element_type=jnp.float32) + b_q
    q = q * cos_q + jnp.dot(q, r_q, preferred_element_type=jnp.float32) * sin_q

    # ---- causal GQA attention; pack per-head outputs, fused out-projection ----
    for b in range(B):
        r0 = b * S
        for h in range(NUM_HEADS):
            g = h // GROUP
            q_h = q[r0:r0 + S, h * HEAD_DIM:(h + 1) * HEAD_DIM]
            k_h = kv[r0:r0 + S, g * 2 * HEAD_DIM:g * 2 * HEAD_DIM + HEAD_DIM]
            v_h = kv[r0:r0 + S, g * 2 * HEAD_DIM + HEAD_DIM:(g + 1) * 2 * HEAD_DIM]
            s = jax.lax.dot_general(q_h, k_h, (((1,), (1,)), ((), ())),
                                    preferred_element_type=jnp.float32)
            s = s + mask_bias
            s = s - jnp.max(s, axis=-1, keepdims=True)
            p = jnp.exp(s)
            p = p * pl.reciprocal(jnp.sum(p, axis=-1, keepdims=True), approx=True)
            o_scratch[r0:r0 + S, h * HEAD_DIM:(h + 1) * HEAD_DIM] = jnp.dot(
                p, v_h, preferred_element_type=jnp.float32)

    attn_out = jnp.dot(o_scratch[...], w_o, preferred_element_type=jnp.float32) + b_o
    if M_RESIDUAL is not None:
        attn_out = attn_out * M_RESIDUAL
    hidden = hidden + attn_out

    # ---- ln_2 + MLP + residual ----
    x2 = _layer_norm(hidden, ln2_g, ln2_b)
    f = jnp.dot(x2, w_fc, preferred_element_type=jnp.float32) + b_fc
    f = jax.nn.gelu(f, approximate=True)
    m = jax.lax.dot_general(f, w_projT, (((1,), (1,)), ((), ())),
                            preferred_element_type=jnp.float32) + b_proj
    if M_RESIDUAL is not None:
        m = m * M_RESIDUAL
    out_ref[...] = hidden + m


def _rotate_half_matrix(dim):
    # (x @ R)[c] = -x[c + dim/2] for c < dim/2, +x[c - dim/2] otherwise
    half = dim // 2
    idx = jnp.arange(half)
    r = jnp.zeros((dim, dim), jnp.float32)
    r = r.at[idx + half, idx].set(-1.0)
    r = r.at[idx, idx + half].set(1.0)
    return r


@jax.jit
def gpt_crosslayer_block(hidden_states, params, cos, sin):
    (lnkv_g, lnkv_b, wkv, bkv, ln1_g, ln1_b, wq, bq, wo, bo,
     ln2_g, ln2_b, wfc, bfc, wproj, bproj) = params

    scale = 1.0 / math.sqrt(HEAD_DIM)
    rot = _rotate_half_matrix(HEAD_DIM)

    # packed square weights: [W_kv; W_q*scale; W_o; R_q; R_kv]  -> (5H, H)
    r_q = jnp.kron(jnp.eye(NUM_HEADS, dtype=jnp.float32), rot)
    kv_blk = jnp.zeros((2 * HEAD_DIM, 2 * HEAD_DIM), jnp.float32)
    kv_blk = kv_blk.at[:HEAD_DIM, :HEAD_DIM].set(rot)
    r_kv = jnp.kron(jnp.eye(NUM_KV_HEADS, dtype=jnp.float32), kv_blk)
    w_sq = jnp.concatenate([wkv, wq * scale, wo, r_q, r_kv], axis=0)

    # packed MLP weights: [W_fc; W_proj^T; b_fc]  -> (2H+1, INTERMEDIATE)
    w_mlp = jnp.concatenate([wfc, wproj.T, bfc], axis=0)

    # aux slab: RoPE tables for the packed layouts, causal mask, LN/bias vectors
    cos_q = jnp.tile(cos, (B, NUM_HEADS))                                  # (ROWS, H)
    sin_q = jnp.tile(sin, (B, NUM_HEADS))
    cos_kv = jnp.tile(jnp.concatenate([cos, jnp.ones_like(cos)], -1), (B, NUM_KV_HEADS))
    sin_kv = jnp.tile(jnp.concatenate([sin, jnp.zeros_like(sin)], -1), (B, NUM_KV_HEADS))
    causal = jnp.tril(jnp.ones((S, S), bool))
    mask_bias = jnp.where(causal, 0.0, -1e30).astype(jnp.float32)
    mask_pad = jnp.concatenate([mask_bias, jnp.zeros((S, H - S), jnp.float32)], -1)
    vecs = jnp.concatenate([lnkv_g, lnkv_b, ln1_g, ln1_b, ln2_g, ln2_b,
                            bkv, bq * scale, bo, bproj], axis=0)           # (10, H)
    aux = jnp.concatenate([cos_q, sin_q, cos_kv, sin_kv, mask_pad, vecs], axis=0)

    hidden2d = hidden_states.reshape(ROWS, H)

    out2d, kv2d = pl.pallas_call(
        _block_kernel,
        out_shape=(jax.ShapeDtypeStruct((ROWS, H), jnp.float32),
                   jax.ShapeDtypeStruct((ROWS, KV_WIDTH), jnp.float32)),
        scratch_shapes=[pltpu.VMEM((ROWS, H), jnp.float32)],
    )(hidden2d, w_sq, w_mlp, aux)

    out = out2d.reshape(B, S, H)
    kv4 = kv2d.reshape(B, S, NUM_KV_HEADS, 2 * HEAD_DIM).transpose(0, 2, 1, 3)
    key = kv4[..., :HEAD_DIM]
    value = kv4[..., HEAD_DIM:]
    return out, key, value


# ---- deterministic synthetic parameters (no checkpoint load) -------------
def init_params(key):
    std = 0.02
    ks = jax.random.split(key, 5)

    def lin(k, fan_in, fan_out):
        kw, kb = jax.random.split(k)
        w = jax.random.normal(kw, (fan_in, fan_out), jnp.float32) * std
        b = jax.random.normal(kb, (1, fan_out), jnp.float32) * std
        return w, b

    kv_out = 2 * NUM_KV_HEADS * HEAD_DIM
    lnkv_g, lnkv_b = jnp.ones((1, H), jnp.float32), jnp.zeros((1, H), jnp.float32)
    wkv, bkv = lin(ks[0], H, kv_out)
    ln1_g, ln1_b = jnp.ones((1, H), jnp.float32), jnp.zeros((1, H), jnp.float32)
    wq, bq = lin(ks[1], H, H)
    wo, bo = lin(ks[2], H, H)
    ln2_g, ln2_b = jnp.ones((1, H), jnp.float32), jnp.zeros((1, H), jnp.float32)
    wfc, bfc = lin(ks[3], H, INTERMEDIATE)
    wproj, bproj = lin(ks[4], INTERMEDIATE, H)
    return [lnkv_g, lnkv_b, wkv, bkv, ln1_g, ln1_b, wq, bq, wo, bo,
            ln2_g, ln2_b, wfc, bfc, wproj, bproj]


def rope_cos_sin(seq, dim, theta=ROPE_THETA):
    inv = 1.0 / (theta ** (jnp.arange(0, dim, 2, dtype=jnp.float32) / dim))
    t = jnp.arange(seq, dtype=jnp.float32)
    freqs = jnp.outer(t, inv)
    emb = jnp.concatenate([freqs, freqs], axis=-1)
    return jnp.cos(emb), jnp.sin(emb)


# ---- pure-JAX reference for a sanity check -------------------------------
def reference(hidden, params, cos, sin):
    (lnkv_g, lnkv_b, wkv, bkv, ln1_g, ln1_b, wq, bq, wo, bo,
     ln2_g, ln2_b, wfc, bfc, wproj, bproj) = params

    def ln(x, g, b):
        mu = x.mean(-1, keepdims=True)
        var = ((x - mu) ** 2).mean(-1, keepdims=True)
        return (x - mu) / jnp.sqrt(var + EPS) * g + b

    def rot_half(x):
        x1, x2 = x[..., : HEAD_DIM // 2], x[..., HEAD_DIM // 2:]
        return jnp.concatenate([-x2, x1], axis=-1)

    def rope(x):
        return x * cos + rot_half(x) * sin

    kv = ln(hidden, lnkv_g, lnkv_b) @ wkv + bkv
    kv = kv.reshape(B, S, NUM_KV_HEADS, 2 * HEAD_DIM).transpose(0, 2, 1, 3)
    k, v = jnp.split(kv, 2, axis=-1)
    k = rope(k)

    x1 = ln(hidden, ln1_g, ln1_b)
    q = (x1 @ wq + bq).reshape(B, S, NUM_HEADS, HEAD_DIM).transpose(0, 2, 1, 3)
    q = rope(q)
    k_rep = jnp.repeat(k, GROUP, axis=1)
    v_rep = jnp.repeat(v, GROUP, axis=1)
    scores = jnp.einsum('bhqd,bhkd->bhqk', q, k_rep) / math.sqrt(HEAD_DIM)
    mask = jnp.tril(jnp.ones((S, S), bool))
    scores = jnp.where(mask, scores, -1e30)
    p = jax.nn.softmax(scores, axis=-1)
    o = jnp.einsum('bhqk,bhkd->bhqd', p, v_rep).transpose(0, 2, 1, 3).reshape(B, S, H)
    hidden = hidden + (o @ wo + bo)
    x2 = ln(hidden, ln2_g, ln2_b)
    m = jax.nn.gelu(x2 @ wfc + bfc, approximate=True) @ wproj + bproj
    return hidden + m, k, v


if __name__ == "__main__":
    key = jax.random.PRNGKey(0)
    k_x, k_p = jax.random.split(key)
    hidden_states = jax.random.normal(k_x, (B, S, H), jnp.float32)
    params = init_params(k_p)
    cos, sin = rope_cos_sin(S, HEAD_DIM)

    out, k_out, v_out = jax.block_until_ready(
        gpt_crosslayer_block(hidden_states, params, cos, sin))

    ref_out, ref_k, ref_v = reference(hidden_states, params, cos, sin)
    assert jnp.allclose(out, ref_out, rtol=3e-2, atol=3e-2)
    assert jnp.allclose(k_out, ref_k, rtol=3e-2, atol=3e-2)
    assert jnp.allclose(v_out, ref_v, rtol=3e-2, atol=3e-2)

    # TODO(synk): past_key_values cache update and the padding-free (cu_seqlens)
    # / flash-attention dispatch paths are not modeled in this kernel.
    print("KERNEL_OK")
</pallas_src>

<mosaic_0001>
module attributes {stable_mosaic.version = 11 : i64} {
  func.func @_block_kernel(%arg0: memref<16x32xf32, #tpu.memory_space<vmem>>, %arg1: memref<160x32xf32, #tpu.memory_space<vmem>>, %arg2: memref<65x128xf32, #tpu.memory_space<vmem>>, %arg3: memref<82x32xf32, #tpu.memory_space<vmem>>, %arg4: memref<16x32xf32, #tpu.memory_space<vmem>>, %arg5: memref<16x32xf32, #tpu.memory_space<vmem>>, %arg6: memref<16x32xf32, #tpu.memory_space<vmem>>) attributes {dimension_semantics = [], scalar_prefetch = 0 : i64, scratch_operands = 1 : i64, tpu.core_type = #tpu.core_type<tc>} {
    %c0 = arith.constant 0 : index
    %c0_0 = arith.constant 0 : index
    %0 = vector.load %arg0[%c0, %c0_0] : memref<16x32xf32, #tpu.memory_space<vmem>>, vector<16x32xf32>
    %c0_1 = arith.constant 0 : index
    %c0_2 = arith.constant 0 : index
    %1 = vector.load %arg1[%c0_1, %c0_2] : memref<160x32xf32, #tpu.memory_space<vmem>>, vector<160x32xf32>
    %2 = vector.extract_strided_slice %1 {offsets = [0, 0], sizes = [32, 32], strides = [1, 1]} : vector<160x32xf32> to vector<32x32xf32>
    %3 = vector.extract_strided_slice %1 {offsets = [32, 0], sizes = [32, 32], strides = [1, 1]} : vector<160x32xf32> to vector<32x32xf32>
    %4 = vector.extract_strided_slice %1 {offsets = [64, 0], sizes = [32, 32], strides = [1, 1]} : vector<160x32xf32> to vector<32x32xf32>
    %5 = vector.extract_strided_slice %1 {offsets = [96, 0], sizes = [32, 32], strides = [1, 1]} : vector<160x32xf32> to vector<32x32xf32>
    %6 = vector.extract_strided_slice %1 {offsets = [128, 0], sizes = [32, 32], strides = [1, 1]} : vector<160x32xf32> to vector<32x32xf32>
    %c0_3 = arith.constant 0 : index
    %c0_4 = arith.constant 0 : index
    %7 = vector.load %arg2[%c0_3, %c0_4] : memref<65x128xf32, #tpu.memory_space<vmem>>, vector<65x128xf32>
    %8 = vector.extract_strided_slice %7 {offsets = [0, 0], sizes = [32, 128], strides = [1, 1]} : vector<65x128xf32> to vector<32x128xf32>
    %9 = vector.extract_strided_slice %7 {offsets = [32, 0], sizes = [32, 128], strides = [1, 1]} : vector<65x128xf32> to vector<32x128xf32>
    %10 = vector.extract_strided_slice %7 {offsets = [64, 0], sizes = [1, 128], strides = [1, 1]} : vector<65x128xf32> to vector<1x128xf32>
    %c0_5 = arith.constant 0 : index
    %c0_6 = arith.constant 0 : index
    %11 = vector.load %arg3[%c0_5, %c0_6] : memref<82x32xf32, #tpu.memory_space<vmem>>, vector<82x32xf32>
    %12 = vector.extract_strided_slice %11 {offsets = [0, 0], sizes = [16, 32], strides = [1, 1]} : vector<82x32xf32> to vector<16x32xf32>
    %13 = vector.extract_strided_slice %11 {offsets = [16, 0], sizes = [16, 32], strides = [1, 1]} : vector<82x32xf32> to vector<16x32xf32>
    %14 = vector.extract_strided_slice %11 {offsets = [32, 0], sizes = [16, 32], strides = [1, 1]} : vector<82x32xf32> to vector<16x32xf32>
    %15 = vector.extract_strided_slice %11 {offsets = [48, 0], sizes = [16, 32], strides = [1, 1]} : vector<82x32xf32> to vector<16x32xf32>
    %16 = vector.extract_strided_slice %11 {offsets = [64, 0], sizes = [8, 8], strides = [1, 1]} : vector<82x32xf32> to vector<8x8xf32>
    %17 = vector.extract_strided_slice %11 {offsets = [72, 0], sizes = [1, 32], strides = [1, 1]} : vector<82x32xf32> to vector<1x32xf32>
    %18 = vector.extract_strided_slice %11 {offsets = [73, 0], sizes = [1, 32], strides = [1, 1]} : vector<82x32xf32> to vector<1x32xf32>
    %19 = vector.extract_strided_slice %11 {offsets = [74, 0], sizes = [1, 32], strides = [1, 1]} : vector<82x32xf32> to vector<1x32xf32>
    %20 = vector.extract_strided_slice %11 {offsets = [75, 0], sizes = [1, 32], strides = [1, 1]} : vector<82x32xf32> to vector<1x32xf32>
    %21 = vector.extract_strided_slice %11 {offsets = [76, 0], sizes = [1, 32], strides = [1, 1]} : vector<82x32xf32> to vector<1x32xf32>
    %22 = vector.extract_strided_slice %11 {offsets = [77, 0], sizes = [1, 32], strides = [1, 1]} : vector<82x32xf32> to vector<1x32xf32>
    %23 = vector.extract_strided_slice %11 {offsets = [78, 0], sizes = [1, 32], strides = [1, 1]} : vector<82x32xf32> to vector<1x32xf32>
    %24 = vector.extract_strided_slice %11 {offsets = [79, 0], sizes = [1, 32], strides = [1, 1]} : vector<82x32xf32> to vector<1x32xf32>
    %25 = vector.extract_strided_slice %11 {offsets = [80, 0], sizes = [1, 32], strides = [1, 1]} : vector<82x32xf32> to vector<1x32xf32>
    %26 = vector.extract_strided_slice %11 {offsets = [81, 0], sizes = [1, 32], strides = [1, 1]} : vector<82x32xf32> to vector<1x32xf32>
    %cst = arith.constant dense<0.000000e+00> : vector<16xf32>
    %27 = vector.multi_reduction <add>, %0, %cst [1] : vector<16x32xf32> to vector<16xf32>
    %28 = vector.shape_cast %27 : vector<16xf32> to vector<16x1xf32>
    %cst_7 = arith.constant 3.200000e+01 : f32
    %29 = vector.broadcast %cst_7 : f32 to vector<16x1xf32>
    %30 = arith.divf %28, %29 : vector<16x1xf32>
    %31 = vector.broadcast %30 : vector<16x1xf32> to vector<16x32xf32>
    %32 = arith.subf %0, %31 : vector<16x32xf32>
    %33 = arith.mulf %32, %32 : vector<16x32xf32>
    %cst_8 = arith.constant dense<0.000000e+00> : vector<16xf32>
    %34 = vector.multi_reduction <add>, %33, %cst_8 [1] : vector<16x32xf32> to vector<16xf32>
    %35 = vector.shape_cast %34 : vector<16xf32> to vector<16x1xf32>
    %cst_9 = arith.constant 3.200000e+01 : f32
    %36 = vector.broadcast %cst_9 : f32 to vector<16x1xf32>
    %37 = arith.divf %35, %36 : vector<16x1xf32>
    %38 = vector.broadcast %30 : vector<16x1xf32> to vector<16x32xf32>
    %39 = arith.subf %0, %38 : vector<16x32xf32>
    %cst_10 = arith.constant 9.99999974E-6 : f32
    %40 = vector.broadcast %cst_10 : f32 to vector<16x1xf32>
    %41 = arith.addf %37, %40 : vector<16x1xf32>
    %42 = math.rsqrt %41 : vector<16x1xf32>
    %43 = vector.broadcast %42 : vector<16x1xf32> to vector<16x32xf32>
    %44 = arith.mulf %39, %43 : vector<16x32xf32>
    %45 = vector.broadcast %17 : vector<1x32xf32> to vector<16x32xf32>
    %46 = arith.mulf %44, %45 : vector<16x32xf32>
    %47 = vector.broadcast %18 : vector<1x32xf32> to vector<16x32xf32>
    %48 = arith.addf %46, %47 : vector<16x32xf32>
    %cst_11 = arith.constant dense<0.000000e+00> : vector<16x32xf32>
    %49 = tpu.matmul %48, %2, %cst_11 {dimension_numbers = #tpu.dot_dimension_numbers<[1], [0], [0], [1], [0, 0, 1, 1], [], []>} : vector<16x32xf32>, vector<32x32xf32>, vector<16x32xf32> -> vector<16x32xf32>
    %50 = vector.broadcast %23 : vector<1x32xf32> to vector<16x32xf32>
    %51 = arith.addf %49, %50 : vector<16x32xf32>
    %52 = arith.mulf %51, %14 : vector<16x32xf32>
    %cst_12 = arith.constant dense<0.000000e+00> : vector<16x32xf32>
    %53 = tpu.matmul %51, %6, %cst_12 {dimension_numbers = #tpu.dot_dimension_numbers<[1], [0], [0], [1], [0, 0, 1, 1], [], []>} : vector<16x32xf32>, vector<32x32xf32>, vector<16x32xf32> -> vector<16x32xf32>
    %54 = arith.mulf %53, %15 : vector<16x32xf32>
    %55 = arith.addf %52, %54 : vector<16x32xf32>
    %c0_13 = arith.constant 0 : index
    %c0_14 = arith.constant 0 : index
    %56 = vector.load %arg5[%c0_13, %c0_14] : memref<16x32xf32, #tpu.memory_space<vmem>>, vector<16x32xf32>
    tpu.vector_store %arg5[%c0_13, %c0_14], %55 {strides = array<i32>} : memref<16x32xf32, #tpu.memory_space<vmem>>, vector<16x32xf32>,
    %cst_15 = arith.constant dense<0.000000e+00> : vector<16xf32>
    %57 = vector.multi_reduction <add>, %0, %cst_15 [1] : vector<16x32xf32> to vector<16xf32>
    %58 = vector.shape_cast %57 : vector<16xf32> to vector<16x1xf32>
    %cst_16 = arith.constant 3.200000e+01 : f32
    %59 = vector.broadcast %cst_16 : f32 to vector<16x1xf32>
    %60 = arith.divf %58, %59 : vector<16x1xf32>
    %61 = vector.broadcast %60 : vector<16x1xf32> to vector<16x32xf32>
    %62 = arith.subf %0, %61 : vector<16x32xf32>
    %63 = arith.mulf %62, %62 : vector<16x32xf32>
    %cst_17 = arith.constant dense<0.000000e+00> : vector<16xf32>
    %64 = vector.multi_reduction <add>, %63, %cst_17 [1] : vector<16x32xf32> to vector<16xf32>
    %65 = vector.shape_cast %64 : vector<16xf32> to vector<16x1xf32>
    %cst_18 = arith.constant 3.200000e+01 : f32
    %66 = vector.broadcast %cst_18 : f32 to vector<16x1xf32>
    %67 = arith.divf %65, %66 : vector<16x1xf32>
    %68 = vector.broadcast %60 : vector<16x1xf32> to vector<16x32xf32>
    %69 = arith.subf %0, %68 : vector<16x32xf32>
    %cst_19 = arith.constant 9.99999974E-6 : f32
    %70 = vector.broadcast %cst_19 : f32 to vector<16x1xf32>
    %71 = arith.addf %67, %70 : vector<16x1xf32>
    %72 = math.rsqrt %71 : vector<16x1xf32>
    %73 = vector.broadcast %72 : vector<16x1xf32> to vector<16x32xf32>
    %74 = arith.mulf %69, %73 : vector<16x32xf32>
    %75 = vector.broadcast %19 : vector<1x32xf32> to vector<16x32xf32>
    %76 = arith.mulf %74, %75 : vector<16x32xf32>
    %77 = vector.broadcast %20 : vector<1x32xf32> to vector<16x32xf32>
    %78 = arith.addf %76, %77 : vector<16x32xf32>
    %cst_20 = arith.constant dense<0.000000e+00> : vector<16x32xf32>
    %79 = tpu.matmul %78, %3, %cst_20 {dimension_numbers = #tpu.dot_dimension_numbers<[1], [0], [0], [1], [0, 0, 1, 1], [], []>} : vector<16x32xf32>, vector<32x32xf32>, vector<16x32xf32> -> vector<16x32xf32>
    %80 = vector.broadcast %24 : vector<1x32xf32> to vector<16x32xf32>
    %81 = arith.addf %79, %80 : vector<16x32xf32>
    %82 = arith.mulf %81, %12 : vector<16x32xf32>
    %cst_21 = arith.constant dense<0.000000e+00> : vector<16x32xf32>
    %83 = tpu.matmul %81, %5, %cst_21 {dimension_numbers = #tpu.dot_dimension_numbers<[1], [0], [0], [1], [0, 0, 1, 1], [], []>} : vector<16x32xf32>, vector<32x32xf32>, vector<16x32xf32> -> vector<16x32xf32>
    %84 = arith.mulf %83, %13 : vector<16x32xf32>
    %85 = arith.addf %82, %84 : vector<16x32xf32>
    %86 = vector.extract_strided_slice %85 {offsets = [0, 0], sizes = [8, 8], strides = [1, 1]} : vector<16x32xf32> to vector<8x8xf32>
    %87 = vector.extract_strided_slice %55 {offsets = [0, 0], sizes = [8, 8], strides = [1, 1]} : vector<16x32xf32> to vector<8x8xf32>
    %88 = vector.extract_strided_slice %55 {offsets = [0, 8], sizes = [8, 8], strides = [1, 1]} : vector<16x32xf32> to vector<8x8xf32>
    %cst_22 = arith.constant dense<0.000000e+00> : vector<8x8xf32>
    %89 = tpu.matmul %86, %87, %cst_22 {dimension_numbers = #tpu.dot_dimension_numbers<[1], [1], [0], [0], [0, 0, 1, 0], [], []>} : vector<8x8xf32>, vector<8x8xf32>, vector<8x8xf32> -> vector<8x8xf32>
    %90 = arith.addf %89, %16 : vector<8x8xf32>
    %cst_23 = arith.constant dense<0xFF800000> : vector<8xf32>
    %91 = vector.multi_reduction <maximumf>, %90, %cst_23 [1] : vector<8x8xf32> to vector<8xf32>
    %92 = vector.shape_cast %91 : vector<8xf32> to vector<8x1xf32>
    %93 = vector.broadcast %92 : vector<8x1xf32> to vector<8x8xf32>
    %94 = arith.subf %90, %93 : vector<8x8xf32>
    %95 = math.exp %94 : vector<8x8xf32>
    %cst_24 = arith.constant dense<0.000000e+00> : vector<8xf32>
    %96 = vector.multi_reduction <add>, %95, %cst_24 [1] : vector<8x8xf32> to vector<8xf32>
    %97 = vector.shape_cast %96 : vector<8xf32> to vector<8x1xf32>
    %98 = tpu.reciprocal %97 {approx = true} : vector<8x1xf32> -> vector<8x1xf32>
    %99 = vector.broadcast %98 : vector<8x1xf32> to vector<8x8xf32>
    %100 = arith.mulf %95, %99 : vector<8x8xf32>
    %cst_25 = arith.constant dense<0.000000e+00> : vector<8x8xf32>
    %101 = tpu.matmul %100, %88, %cst_25 {dimension_numbers = #tpu.dot_dimension_numbers<[1], [0], [0], [1], [0, 0, 1, 1], [], []>} : vector<8x8xf32>, vector<8x8xf32>, vector<8x8xf32> -> vector<8x8xf32>
    %c0_26 = arith.constant 0 : index
    %c0_27 = arith.constant 0 : index
    %102 = vector.load %arg6[%c0_26, %c0_27] : memref<16x32xf32, #tpu.memory_space<vmem>>, vector<8x8xf32>
    tpu.vector_store %arg6[%c0_26, %c0_27], %101 {strides = array<i32>} : memref<16x32xf32, #tpu.memory_space<vmem>>, vector<8x8xf32>,
    %103 = vector.extract_strided_slice %85 {offsets = [0, 8], sizes = [8, 8], strides = [1, 1]} : vector<16x32xf32> to vector<8x8xf32>
    %104 = vector.extract_strided_slice %55 {offsets = [0, 0], sizes = [8, 8], strides = [1, 1]} : vector<16x32xf32> to vector<8x8xf32>
    %105 = vector.extract_strided_slice %55 {offsets = [0, 8], sizes = [8, 8], strides = [1, 1]} : vector<16x32xf32> to vector<8x8xf32>
    %cst_28 = arith.constant dense<0.000000e+00> : vector<8x8xf32>
    %106 = tpu.matmul %103, %104, %cst_28 {dimension_numbers = #tpu.dot_dimension_numbers<[1], [1], [0], [0], [0, 0, 1, 0], [], []>} : vector<8x8xf32>, vector<8x8xf32>, vector<8x8xf32> -> vector<8x8xf32>
    %107 = arith.addf %106, %16 : vector<8x8xf32>
    %cst_29 = arith.constant dense<0xFF800000> : vector<8xf32>
    %108 = vector.multi_reduction <maximumf>, %107, %cst_29 [1] : vector<8x8xf32> to vector<8xf32>
    %109 = vector.shape_cast %108 : vector<8xf32> to vector<8x1xf32>
    %110 = vector.broadcast %109 : vector<8x1xf32> to vector<8x8xf32>
    %111 = arith.subf %107, %110 : vector<8x8xf32>
    %112 = math.exp %111 : vector<8x8xf32>
    %cst_30 = arith.constant dense<0.000000e+00> : vector<8xf32>
    %113 = vector.multi_reduction <add>, %112, %cst_30 [1] : vector<8x8xf32> to vector<8xf32>
    %114 = vector.shape_cast %113 : vector<8xf32> to vector<8x1xf32>
    %115 = tpu.reciprocal %114 {approx = true} : vector<8x1xf32> -> vector<8x1xf32>
    %116 = vector.broadcast %115 : vector<8x1xf32> to vector<8x8xf32>
    %117 = arith.mulf %112, %116 : vector<8x8xf32>
    %cst_31 = arith.constant dense<0.000000e+00> : vector<8x8xf32>
    %118 = tpu.matmul %117, %105, %cst_31 {dimension_numbers = #tpu.dot_dimension_numbers<[1], [0], [0], [1], [0, 0, 1, 1], [], []>} : vector<8x8xf32>, vector<8x8xf32>, vector<8x8xf32> -> vector<8x8xf32>
    %c0_32 = arith.constant 0 : index
    %c8 = arith.constant 8 : index
    %119 = vector.load %arg6[%c0_32, %c8] : memref<16x32xf32, #tpu.memory_space<vmem>>, vector<8x8xf32>
    tpu.vector_store %arg6[%c0_32, %c8], %118 {strides = array<i32>} : memref<16x32xf32, #tpu.memory_space<vmem>>, vector<8x8xf32>,
    %120 = vector.extract_strided_slice %85 {offsets = [0, 16], sizes = [8, 8], strides = [1, 1]} : vector<16x32xf32> to vector<8x8xf32>
    %121 = vector.extract_strided_slice %55 {offsets = [0, 16], sizes = [8, 8], strides = [1, 1]} : vector<16x32xf32> to vector<8x8xf32>
    %122 = vector.extract_strided_slice %55 {offsets = [0, 24], sizes = [8, 8], strides = [1, 1]} : vector<16x32xf32> to vector<8x8xf32>
    %cst_33 = arith.constant dense<0.000000e+00> : vector<8x8xf32>
    %123 = tpu.matmul %120, %121, %cst_33 {dimension_numbers = #tpu.dot_dimension_numbers<[1], [1], [0], [0], [0, 0, 1, 0], [], []>} : vector<8x8xf32>, vector<8x8xf32>, vector<8x8xf32> -> vector<8x8xf32>
    %124 = arith.addf %123, %16 : vector<8x8xf32>
    %cst_34 = arith.constant dense<0xFF800000> : vector<8xf32>
    %125 = vector.multi_reduction <maximumf>, %124, %cst_34 [1] : vector<8x8xf32> to vector<8xf32>
    %126 = vector.shape_cast %125 : vector<8xf32> to vector<8x1xf32>
    %127 = vector.broadcast %126 : vector<8x1xf32> to vector<8x8xf32>
    %128 = arith.subf %124, %127 : vector<8x8xf32>
    %129 = math.exp %128 : vector<8x8xf32>
    %cst_35 = arith.constant dense<0.000000e+00> : vector<8xf32>
    %130 = vector.multi_reduction <add>, %129, %cst_35 [1] : vector<8x8xf32> to vector<8xf32>
    %131 = vector.shape_cast %130 : vector<8xf32> to vector<8x1xf32>
    %132 = tpu.reciprocal %131 {approx = true} : vector<8x1xf32> -> vector<8x1xf32>
    %133 = vector.broadcast %132 : vector<8x1xf32> to vector<8x8xf32>
    %134 = arith.mulf %129, %133 : vector<8x8xf32>
    %cst_36 = arith.constant dense<0.000000e+00> : vector<8x8xf32>
    %135 = tpu.matmul %134, %122, %cst_36 {dimension_numbers = #tpu.dot_dimension_numbers<[1], [0], [0], [1], [0, 0, 1, 1], [], []>} : vector<8x8xf32>, vector<8x8xf32>, vector<8x8xf32> -> vector<8x8xf32>
    %c0_37 = arith.constant 0 : index
    %c16 = arith.constant 16 : index
    %136 = vector.load %arg6[%c0_37, %c16] : memref<16x32xf32, #tpu.memory_space<vmem>>, vector<8x8xf32>
    tpu.vector_store %arg6[%c0_37, %c16], %135 {strides = array<i32>} : memref<16x32xf32, #tpu.memory_space<vmem>>, vector<8x8xf32>,
    %137 = vector.extract_strided_slice %85 {offsets = [0, 24], sizes = [8, 8], strides = [1, 1]} : vector<16x32xf32> to vector<8x8xf32>
    %138 = vector.extract_strided_slice %55 {offsets = [0, 16], sizes = [8, 8], strides = [1, 1]} : vector<16x32xf32> to vector<8x8xf32>
    %139 = vector.extract_strided_slice %55 {offsets = [0, 24], sizes = [8, 8], strides = [1, 1]} : vector<16x32xf32> to vector<8x8xf32>
    %cst_38 = arith.constant dense<0.000000e+00> : vector<8x8xf32>
    %140 = tpu.matmul %137, %138, %cst_38 {dimension_numbers = #tpu.dot_dimension_numbers<[1], [1], [0], [0], [0, 0, 1, 0], [], []>} : vector<8x8xf32>, vector<8x8xf32>, vector<8x8xf32> -> vector<8x8xf32>
    %141 = arith.addf %140, %16 : vector<8x8xf32>
    %cst_39 = arith.constant dense<0xFF800000> : vector<8xf32>
    %142 = vector.multi_reduction <maximumf>, %141, %cst_39 [1] : vector<8x8xf32> to vector<8xf32>
    %143 = vector.shape_cast %142 : vector<8xf32> to vector<8x1xf32>
    %144 = vector.broadcast %143 : vector<8x1xf32> to vector<8x8xf32>
    %145 = arith.subf %141, %144 : vector<8x8xf32>
    %146 = math.exp %145 : vector<8x8xf32>
    %cst_40 = arith.constant dense<0.000000e+00> : vector<8xf32>
    %147 = vector.multi_reduction <add>, %146, %cst_40 [1] : vector<8x8xf32> to vector<8xf32>
    %148 = vector.shape_cast %147 : vector<8xf32> to vector<8x1xf32>
    %149 = tpu.reciprocal %148 {approx = true} : vector<8x1xf32> -> vector<8x1xf32>
    %150 = vector.broadcast %149 : vector<8x1xf32> to vector<8x8xf32>
    %151 = arith.mulf %146, %150 : vector<8x8xf32>
    %cst_41 = arith.constant dense<0.000000e+00> : vector<8x8xf32>
    %152 = tpu.matmul %151, %139, %cst_41 {dimension_numbers = #tpu.dot_dimension_numbers<[1], [0], [0], [1], [0, 0, 1, 1], [], []>} : vector<8x8xf32>, vector<8x8xf32>, vector<8x8xf32> -> vector<8x8xf32>
    %c0_42 = arith.constant 0 : index
    %c24 = arith.constant 24 : index
    %153 = vector.load %arg6[%c0_42, %c24] : memref<16x32xf32, #tpu.memory_space<vmem>>, vector<8x8xf32>
    tpu.vector_store %arg6[%c0_42, %c24], %152 {strides = array<i32>} : memref<16x32xf32, #tpu.memory_space<vmem>>, vector<8x8xf32>,
    %154 = vector.extract_strided_slice %85 {offsets = [8, 0], sizes = [8, 8], strides = [1, 1]} : vector<16x32xf32> to vector<8x8xf32>
    %155 = vector.extract_strided_slice %55 {offsets = [8, 0], sizes = [8, 8], strides = [1, 1]} : vector<16x32xf32> to vector<8x8xf32>
    %156 = vector.extract_strided_slice %55 {offsets = [8, 8], sizes = [8, 8], strides = [1, 1]} : vector<16x32xf32> to vector<8x8xf32>
    %cst_43 = arith.constant dense<0.000000e+00> : vector<8x8xf32>
    %157 = tpu.matmul %154, %155, %cst_43 {dimension_numbers = #tpu.dot_dimension_numbers<[1], [1], [0], [0], [0, 0, 1, 0], [], []>} : vector<8x8xf32>, vector<8x8xf32>, vector<8x8xf32> -> vector<8x8xf32>
    %158 = arith.addf %157, %16 : vector<8x8xf32>
    %cst_44 = arith.constant dense<0xFF800000> : vector<8xf32>
    %159 = vector.multi_reduction <maximumf>, %158, %cst_44 [1] : vector<8x8xf32> to vector<8xf32>
    %160 = vector.shape_cast %159 : vector<8xf32> to vector<8x1xf32>
    %161 = vector.broadcast %160 : vector<8x1xf32> to vector<8x8xf32>
    %162 = arith.subf %158, %161 : vector<8x8xf32>
    %163 = math.exp %162 : vector<8x8xf32>
    %cst_45 = arith.constant dense<0.000000e+00> : vector<8xf32>
    %164 = vector.multi_reduction <add>, %163, %cst_45 [1] : vector<8x8xf32> to vector<8xf32>
    %165 = vector.shape_cast %164 : vector<8xf32> to vector<8x1xf32>
    %166 = tpu.reciprocal %165 {approx = true} : vector<8x1xf32> -> vector<8x1xf32>
    %167 = vector.broadcast %166 : vector<8x1xf32> to vector<8x8xf32>
    %168 = arith.mulf %163, %167 : vector<8x8xf32>
    %cst_46 = arith.constant dense<0.000000e+00> : vector<8x8xf32>
    %169 = tpu.matmul %168, %156, %cst_46 {dimension_numbers = #tpu.dot_dimension_numbers<[1], [0], [0], [1], [0, 0, 1, 1], [], []>} : vector<8x8xf32>, vector<8x8xf32>, vector<8x8xf32> -> vector<8x8xf32>
    %c8_47 = arith.constant 8 : index
    %c0_48 = arith.constant 0 : index
    %170 = vector.load %arg6[%c8_47, %c0_48] : memref<16x32xf32, #tpu.memory_space<vmem>>, vector<8x8xf32>
    tpu.vector_store %arg6[%c8_47, %c0_48], %169 {strides = array<i32>} : memref<16x32xf32, #tpu.memory_space<vmem>>, vector<8x8xf32>,
    %171 = vector.extract_strided_slice %85 {offsets = [8, 8], sizes = [8, 8], strides = [1, 1]} : vector<16x32xf32> to vector<8x8xf32>
    %172 = vector.extract_strided_slice %55 {offsets = [8, 0], sizes = [8, 8], strides = [1, 1]} : vector<16x32xf32> to vector<8x8xf32>
    %173 = vector.extract_strided_slice %55 {offsets = [8, 8], sizes = [8, 8], strides = [1, 1]} : vector<16x32xf32> to vector<8x8xf32>
    %cst_49 = arith.constant dense<0.000000e+00> : vector<8x8xf32>
    %174 = tpu.matmul %171, %172, %cst_49 {dimension_numbers = #tpu.dot_dimension_numbers<[1], [1], [0], [0], [0, 0, 1, 0], [], []>} : vector<8x8xf32>, vector<8x8xf32>, vector<8x8xf32> -> vector<8x8xf32>
    %175 = arith.addf %174, %16 : vector<8x8xf32>
    %cst_50 = arith.constant dense<0xFF800000> : vector<8xf32>
    %176 = vector.multi_reduction <maximumf>, %175, %cst_50 [1] : vector<8x8xf32> to vector<8xf32>
    %177 = vector.shape_cast %176 : vector<8xf32> to vector<8x1xf32>
    %178 = vector.broadcast %177 : vector<8x1xf32> to vector<8x8xf32>
    %179 = arith.subf %175, %178 : vector<8x8xf32>
    %180 = math.exp %179 : vector<8x8xf32>
    %cst_51 = arith.constant dense<0.000000e+00> : vector<8xf32>
    %181 = vector.multi_reduction <add>, %180, %cst_51 [1] : vector<8x8xf32> to vector<8xf32>
    %182 = vector.shape_cast %181 : vector<8xf32> to vector<8x1xf32>
    %183 = tpu.reciprocal %182 {approx = true} : vector<8x1xf32> -> vector<8x1xf32>
    %184 = vector.broadcast %183 : vector<8x1xf32> to vector<8x8xf32>
    %185 = arith.mulf %180, %184 : vector<8x8xf32>
    %cst_52 = arith.constant dense<0.000000e+00> : vector<8x8xf32>
    %186 = tpu.matmul %185, %173, %cst_52 {dimension_numbers = #tpu.dot_dimension_numbers<[1], [0], [0], [1], [0, 0, 1, 1], [], []>} : vector<8x8xf32>, vector<8x8xf32>, vector<8x8xf32> -> vector<8x8xf32>
    %c8_53 = arith.constant 8 : index
    %c8_54 = arith.constant 8 : index
    %187 = vector.load %arg6[%c8_53, %c8_54] : memref<16x32xf32, #tpu.memory_space<vmem>>, vector<8x8xf32>
    tpu.vector_store %arg6[%c8_53, %c8_54], %186 {strides = array<i32>} : memref<16x32xf32, #tpu.memory_space<vmem>>, vector<8x8xf32>,
    %188 = vector.extract_strided_slice %85 {offsets = [8, 16], sizes = [8, 8], strides = [1, 1]} : vector<16x32xf32> to vector<8x8xf32>
    %189 = vector.extract_strided_slice %55 {offsets = [8, 16], sizes = [8, 8], strides = [1, 1]} : vector<16x32xf32> to vector<8x8xf32>
    %190 = vector.extract_strided_slice %55 {offsets = [8, 24], sizes = [8, 8], strides = [1, 1]} : vector<16x32xf32> to vector<8x8xf32>
    %cst_55 = arith.constant dense<0.000000e+00> : vector<8x8xf32>
    %191 = tpu.matmul %188, %189, %cst_55 {dimension_numbers = #tpu.dot_dimension_numbers<[1], [1], [0], [0], [0, 0, 1, 0], [], []>} : vector<8x8xf32>, vector<8x8xf32>, vector<8x8xf32> -> vector<8x8xf32>
    %192 = arith.addf %191, %16 : vector<8x8xf32>
    %cst_56 = arith.constant dense<0xFF800000> : vector<8xf32>
    %193 = vector.multi_reduction <maximumf>, %192, %cst_56 [1] : vector<8x8xf32> to vector<8xf32>
    %194 = vector.shape_cast %193 : vector<8xf32> to vector<8x1xf32>
    %195 = vector.broadcast %194 : vector<8x1xf32> to vector<8x8xf32>
    %196 = arith.subf %192, %195 : vector<8x8xf32>
    %197 = math.exp %196 : vector<8x8xf32>
    %cst_57 = arith.constant dense<0.000000e+00> : vector<8xf32>
    %198 = vector.multi_reduction <add>, %197, %cst_57 [1] : vector<8x8xf32> to vector<8xf32>
    %199 = vector.shape_cast %198 : vector<8xf32> to vector<8x1xf32>
    %200 = tpu.reciprocal %199 {approx = true} : vector<8x1xf32> -> vector<8x1xf32>
    %201 = vector.broadcast %200 : vector<8x1xf32> to vector<8x8xf32>
    %202 = arith.mulf %197, %201 : vector<8x8xf32>
    %cst_58 = arith.constant dense<0.000000e+00> : vector<8x8xf32>
    %203 = tpu.matmul %202, %190, %cst_58 {dimension_numbers = #tpu.dot_dimension_numbers<[1], [0], [0], [1], [0, 0, 1, 1], [], []>} : vector<8x8xf32>, vector<8x8xf32>, vector<8x8xf32> -> vector<8x8xf32>
    %c8_59 = arith.constant 8 : index
    %c16_60 = arith.constant 16 : index
    %204 = vector.load %arg6[%c8_59, %c16_60] : memref<16x32xf32, #tpu.memory_space<vmem>>, vector<8x8xf32>
    tpu.vector_store %arg6[%c8_59, %c16_60], %203 {strides = array<i32>} : memref<16x32xf32, #tpu.memory_space<vmem>>, vector<8x8xf32>,
    %205 = vector.extract_strided_slice %85 {offsets = [8, 24], sizes = [8, 8], strides = [1, 1]} : vector<16x32xf32> to vector<8x8xf32>
    %206 = vector.extract_strided_slice %55 {offsets = [8, 16], sizes = [8, 8], strides = [1, 1]} : vector<16x32xf32> to vector<8x8xf32>
    %207 = vector.extract_strided_slice %55 {offsets = [8, 24], sizes = [8, 8], strides = [1, 1]} : vector<16x32xf32> to vector<8x8xf32>
    %cst_61 = arith.constant dense<0.000000e+00> : vector<8x8xf32>
    %208 = tpu.matmul %205, %206, %cst_61 {dimension_numbers = #tpu.dot_dimension_numbers<[1], [1], [0], [0], [0, 0, 1, 0], [], []>} : vector<8x8xf32>, vector<8x8xf32>, vector<8x8xf32> -> vector<8x8xf32>
    %209 = arith.addf %208, %16 : vector<8x8xf32>
    %cst_62 = arith.constant dense<0xFF800000> : vector<8xf32>
    %210 = vector.multi_reduction <maximumf>, %209, %cst_62 [1] : vector<8x8xf32> to vector<8xf32>
    %211 = vector.shape_cast %210 : vector<8xf32> to vector<8x1xf32>
    %212 = vector.broadcast %211 : vector<8x1xf32> to vector<8x8xf32>
    %213 = arith.subf %209, %212 : vector<8x8xf32>
    %214 = math.exp %213 : vector<8x8xf32>
    %cst_63 = arith.constant dense<0.000000e+00> : vector<8xf32>
    %215 = vector.multi_reduction <add>, %214, %cst_63 [1] : vector<8x8xf32> to vector<8xf32>
    %216 = vector.shape_cast %215 : vector<8xf32> to vector<8x1xf32>
    %217 = tpu.reciprocal %216 {approx = true} : vector<8x1xf32> -> vector<8x1xf32>
    %218 = vector.broadcast %217 : vector<8x1xf32> to vector<8x8xf32>
    %219 = arith.mulf %214, %218 : vector<8x8xf32>
    %cst_64 = arith.constant dense<0.000000e+00> : vector<8x8xf32>
    %220 = tpu.matmul %219, %207, %cst_64 {dimension_numbers = #tpu.dot_dimension_numbers<[1], [0], [0], [1], [0, 0, 1, 1], [], []>} : vector<8x8xf32>, vector<8x8xf32>, vector<8x8xf32> -> vector<8x8xf32>
    %c8_65 = arith.constant 8 : index
    %c24_66 = arith.constant 24 : index
    %221 = vector.load %arg6[%c8_65, %c24_66] : memref<16x32xf32, #tpu.memory_space<vmem>>, vector<8x8xf32>
    tpu.vector_store %arg6[%c8_65, %c24_66], %220 {strides = array<i32>} : memref<16x32xf32, #tpu.memory_space<vmem>>, vector<8x8xf32>,
    %c0_67 = arith.constant 0 : index
    %c0_68 = arith.constant 0 : index
    %222 = vector.load %arg6[%c0_67, %c0_68] : memref<16x32xf32, #tpu.memory_space<vmem>>, vector<16x32xf32>
    %cst_69 = arith.constant dense<0.000000e+00> : vector<16x32xf32>
    %223 = tpu.matmul %222, %4, %cst_69 {dimension_numbers = #tpu.dot_dimension_numbers<[1], [0], [0], [1], [0, 0, 1, 1], [], []>} : vector<16x32xf32>, vector<32x32xf32>, vector<16x32xf32> -> vector<16x32xf32>
    %224 = vector.broadcast %25 : vector<1x32xf32> to vector<16x32xf32>
    %225 = arith.addf %223, %224 : vector<16x32xf32>
    %226 = arith.addf %0, %225 : vector<16x32xf32>
    %cst_70 = arith.constant dense<0.000000e+00> : vector<16xf32>
    %227 = vector.multi_reduction <add>, %226, %cst_70 [1] : vector<16x32xf32> to vector<16xf32>
    %228 = vector.shape_cast %227 : vector<16xf32> to vector<16x1xf32>
    %cst_71 = arith.constant 3.200000e+01 : f32
    %229 = vector.broadcast %cst_71 : f32 to vector<16x1xf32>
    %230 = arith.divf %228, %229 : vector<16x1xf32>
    %231 = vector.broadcast %230 : vector<16x1xf32> to vector<16x32xf32>
    %232 = arith.subf %226, %231 : vector<16x32xf32>
    %233 = arith.mulf %232, %232 : vector<16x32xf32>
    %cst_72 = arith.constant dense<0.000000e+00> : vector<16xf32>
    %234 = vector.multi_reduction <add>, %233, %cst_72 [1] : vector<16x32xf32> to vector<16xf32>
    %235 = vector.shape_cast %234 : vector<16xf32> to vector<16x1xf32>
    %cst_73 = arith.constant 3.200000e+01 : f32
    %236 = vector.broadcast %cst_73 : f32 to vector<16x1xf32>
    %237 = arith.divf %235, %236 : vector<16x1xf32>
    %238 = vector.broadcast %230 : vector<16x1xf32> to vector<16x32xf32>
    %239 = arith.subf %226, %238 : vector<16x32xf32>
    %cst_74 = arith.constant 9.99999974E-6 : f32
    %240 = vector.broadcast %cst_74 : f32 to vector<16x1xf32>
    %241 = arith.addf %237, %240 : vector<16x1xf32>
    %242 = math.rsqrt %241 : vector<16x1xf32>
    %243 = vector.broadcast %242 : vector<16x1xf32> to vector<16x32xf32>
    %244 = arith.mulf %239, %243 : vector<16x32xf32>
    %245 = vector.broadcast %21 : vector<1x32xf32> to vector<16x32xf32>
    %246 = arith.mulf %244, %245 : vector<16x32xf32>
    %247 = vector.broadcast %22 : vector<1x32xf32> to vector<16x32xf32>
    %248 = arith.addf %246, %247 : vector<16x32xf32>
    %cst_75 = arith.constant dense<0.000000e+00> : vector<16x128xf32>
    %249 = tpu.matmul %248, %8, %cst_75 {dimension_numbers = #tpu.dot_dimension_numbers<[1], [0], [0], [1], [0, 0, 1, 1], [], []>} : vector<16x32xf32>, vector<32x128xf32>, vector<16x128xf32> -> vector<16x128xf32>
    %250 = vector.broadcast %10 : vector<1x128xf32> to vector<16x128xf32>
    %251 = arith.addf %249, %250 : vector<16x128xf32>
    %252 = arith.mulf %251, %251 : vector<16x128xf32>
    %253 = arith.mulf %251, %252 : vector<16x128xf32>
    %cst_76 = arith.constant 4.471500e-02 : f32
    %254 = vector.broadcast %cst_76 : f32 to vector<16x128xf32>
    %255 = arith.mulf %254, %253 : vector<16x128xf32>
    %256 = arith.addf %251, %255 : vector<16x128xf32>
    %cst_77 = arith.constant 0.797884583 : f32
    %257 = vector.broadcast %cst_77 : f32 to vector<16x128xf32>
    %258 = arith.mulf %257, %256 : vector<16x128xf32>
    %259 = math.tanh %258 : vector<16x128xf32>
    %cst_78 = arith.constant 1.000000e+00 : f32
    %260 = vector.broadcast %cst_78 : f32 to vector<16x128xf32>
    %261 = arith.addf %260, %259 : vector<16x128xf32>
    %cst_79 = arith.constant 5.000000e-01 : f32
    %262 = vector.broadcast %cst_79 : f32 to vector<16x128xf32>
    %263 = arith.mulf %262, %261 : vector<16x128xf32>
    %264 = arith.mulf %251, %263 : vector<16x128xf32>
    %cst_80 = arith.constant dense<0.000000e+00> : vector<16x32xf32>
    %265 = tpu.matmul %264, %9, %cst_80 {dimension_numbers = #tpu.dot_dimension_numbers<[1], [1], [0], [0], [0, 0, 1, 0], [], []>} : vector<16x128xf32>, vector<32x128xf32>, vector<16x32xf32> -> vector<16x32xf32>
    %266 = vector.broadcast %26 : vector<1x32xf32> to vector<16x32xf32>
    %267 = arith.addf %265, %266 : vector<16x32xf32>
    %268 = arith.addf %226, %267 : vector<16x32xf32>
    %c0_81 = arith.constant 0 : index
    %c0_82 = arith.constant 0 : index
    %269 = vector.load %arg4[%c0_81, %c0_82] : memref<16x32xf32, #tpu.memory_space<vmem>>, vector<16x32xf32>
    tpu.vector_store %arg4[%c0_81, %c0_82], %268 {strides = array<i32>} : memref<16x32xf32, #tpu.memory_space<vmem>>, vector<16x32xf32>,
    return
  }
}

</mosaic_0001>

<llo_original>
// kernel: tile.23
$region0: #{tile.23}
  #allocation0 [shape = 's32[1]{0}', space=sflag, size = 0x4, scoped, tag = 'scoped memory for tile.23']
  %s0 = inlined_call_operand.vmem [shape: f32[8,8], index: 0, kind: input, shape index: {}]
  %s1 = inlined_call_operand.vmem [shape: f32[2,8,4,8], index: 1, kind: output, shape index: {}]
  // Predicated region
  $region2: #{tile.23} parent=0 // pred_check
    _
  $region3: #{tile.23} parent=0 // pred_check_branch
    %3 = sbr.rel (0) target = $region5
  $region4: #{tile.23} parent=0 // pred_region
    _
  $region5: #{tile.23} parent=0 // pred_fallthru
    _
  %v4 = vld [vmem:[%s0] ss:$0 sm:$0xff]
  %5 = vst [vmem:[%s1] sm:$0xf] %v4
  %s6 = scalar_lea.vmem %s1, 32
  %7 = vst [vmem:[%s6] sm:$0xf] %v4
  %s8 = scalar_lea.vmem %s0, 1
  %v9 = vld [vmem:[%s8] ss:$0 sm:$0xff]
  %s10 = scalar_lea.vmem %s1, 4
  %11 = vst [vmem:[%s10] sm:$0xf] %v9
  %s12 = scalar_lea.vmem %s1, 36
  %13 = vst [vmem:[%s12] sm:$0xf] %v9
  %s14 = scalar_lea.vmem %s0, 2
  %v15 = vld [vmem:[%s14] ss:$0 sm:$0xff]
  %s16 = scalar_lea.vmem %s1, 8
  %17 = vst [vmem:[%s16] sm:$0xf] %v15
  %s18 = scalar_lea.vmem %s1, 40
  %19 = vst [vmem:[%s18] sm:$0xf] %v15
  %s20 = scalar_lea.vmem %s0, 3
  %v21 = vld [vmem:[%s20] ss:$0 sm:$0xff]
  %s22 = scalar_lea.vmem %s1, 12
  %23 = vst [vmem:[%s22] sm:$0xf] %v21
  %s24 = scalar_lea.vmem %s1, 44
  %25 = vst [vmem:[%s24] sm:$0xf] %v21
  %s26 = scalar_lea.vmem %s0, 4
  %v27 = vld [vmem:[%s26] ss:$0 sm:$0xff]
  %s28 = scalar_lea.vmem %s1, 16
  %29 = vst [vmem:[%s28] sm:$0xf] %v27
  %s30 = scalar_lea.vmem %s1, 48
  %31 = vst [vmem:[%s30] sm:$0xf] %v27
  %s32 = scalar_lea.vmem %s0, 5
  %v33 = vld [vmem:[%s32] ss:$0 sm:$0xff]
  %s34 = scalar_lea.vmem %s1, 20
  %35 = vst [vmem:[%s34] sm:$0xf] %v33
  %s36 = scalar_lea.vmem %s1, 52
  %37 = vst [vmem:[%s36] sm:$0xf] %v33
  %s38 = scalar_lea.vmem %s0, 6
  %v39 = vld [vmem:[%s38] ss:$0 sm:$0xff]
  %s40 = scalar_lea.vmem %s1, 24
  %41 = vst [vmem:[%s40] sm:$0xf] %v39
  %s42 = scalar_lea.vmem %s1, 56
  %43 = vst [vmem:[%s42] sm:$0xf] %v39
  %s44 = scalar_lea.vmem %s0, 7
  %v45 = vld [vmem:[%s44] ss:$0 sm:$0xff]
  %s46 = scalar_lea.vmem %s1, 28
  %47 = vst [vmem:[%s46] sm:$0xf] %v45
  %s48 = scalar_lea.vmem %s1, 60
  %49 = vst [vmem:[%s48] sm:$0xf] %v45

// kernel: tile.24
$region0: #{tile.24}
  %s0 = inlined_call_operand.vmem [shape: f32[2,8,4,8], index: 0, kind: input, shape index: {}]
  %s1 = inlined_call_operand.vmem [shape: f32[16,32], index: 1, kind: output, shape index: {}]
  $region1: #{tile.24} parent=0
    #allocation0 [shape = 'u8[65536]{0}', space=vmem, size = 0x10000, scoped, tag = 'scoped mem for input reshape']
    %s3 = sshllo.u32 0, 4
    %s4 = smul.addr 4, 15
    %s5 = scalar_lea.vmem %s0, %s4
    %v6 = vld [vmem:[%s5] sm:%s3]
    %s7 = scalar_lea.vmem [#allocation0], 120
    %8 = vst [vmem:[%s7] sm:%s3] %v6
    %s9 = smul.addr 4, 14
    %s10 = scalar_lea.vmem %s0, %s9
    %v11 = vld [vmem:[%s10] sm:%s3]
    %s12 = scalar_lea.vmem [#allocation0], 112
    %13 = vst [vmem:[%s12] sm:%s3] %v11
    %s14 = smul.addr 4, 13
    %s15 = scalar_lea.vmem %s0, %s14
    %v16 = vld [vmem:[%s15] sm:%s3]
    %s17 = scalar_lea.vmem [#allocation0], 104
    %18 = vst [vmem:[%s17] sm:%s3] %v16
    %s19 = smul.addr 4, 12
    %s20 = scalar_lea.vmem %s0, %s19
    %v21 = vld [vmem:[%s20] sm:%s3]
    %s22 = scalar_lea.vmem [#allocation0], 96
    %23 = vst [vmem:[%s22] sm:%s3] %v21
    %s24 = smul.addr 4, 11
    %s25 = scalar_lea.vmem %s0, %s24
    %v26 = vld [vmem:[%s25] sm:%s3]
    %s27 = scalar_lea.vmem [#allocation0], 88
    %28 = vst [vmem:[%s27] sm:%s3] %v26
    %s29 = smul.addr 4, 10
    %s30 = scalar_lea.vmem %s0, %s29
    %v31 = vld [vmem:[%s30] sm:%s3]
    %s32 = scalar_lea.vmem [#allocation0], 80
    %33 = vst [vmem:[%s32] sm:%s3] %v31
    %s34 = smul.addr 4, 9
    %s35 = scalar_lea.vmem %s0, %s34
    %v36 = vld [vmem:[%s35] sm:%s3]
    %s37 = scalar_lea.vmem [#allocation0], 72
    %38 = vst [vmem:[%s37] sm:%s3] %v36
    %s39 = smul.addr 4, 8
    %s40 = scalar_lea.vmem %s0, %s39
    %v41 = vld [vmem:[%s40] sm:%s3]
    %s42 = scalar_lea.vmem [#allocation0], 64
    %43 = vst [vmem:[%s42] sm:%s3] %v41
    %s44 = smul.addr 4, 7
    %s45 = scalar_lea.vmem %s0, %s44
    %v46 = vld [vmem:[%s45] sm:%s3]
    %s47 = scalar_lea.vmem [#allocation0], 56
    %48 = vst [vmem:[%s47] sm:%s3] %v46
    %s49 = smul.addr 4, 6
    %s50 = scalar_lea.vmem %s0, %s49
    %v51 = vld [vmem:[%s50] sm:%s3]
    %s52 = scalar_lea.vmem [#allocation0], 48
    %53 = vst [vmem:[%s52] sm:%s3] %v51
    %s54 = smul.addr 4, 5
    %s55 = scalar_lea.vmem %s0, %s54
    %v56 = vld [vmem:[%s55] sm:%s3]
    %s57 = scalar_lea.vmem [#allocation0], 40
    %58 = vst [vmem:[%s57] sm:%s3] %v56
    %s59 = smul.addr 4, 4
    %s60 = scalar_lea.vmem %s0, %s59
    %v61 = vld [vmem:[%s60] sm:%s3]
    %s62 = scalar_lea.vmem [#allocation0], 32
    %63 = vst [vmem:[%s62] sm:%s3] %v61
    %s64 = smul.addr 4, 3
    %s65 = scalar_lea.vmem %s0, %s64
    %v66 = vld [vmem:[%s65] sm:%s3]
    %s67 = scalar_lea.vmem [#allocation0], 24
    %68 = vst [vmem:[%s67] sm:%s3] %v66
    %s69 = smul.addr 4, 2
    %s70 = scalar_lea.vmem %s0, %s69
    %v71 = vld [vmem:[%s70] sm:%s3]
    %s72 = scalar_lea.vmem [#allocation0], 16
    %73 = vst [vmem:[%s72] sm:%s3] %v71
    %s74 = scalar_lea.vmem %s0, 4
    %v75 = vld [vmem:[%s74] sm:%s3]
    %s76 = scalar_lea.vmem [#allocation0], 8
    %77 = vst [vmem:[%s76] sm:%s3] %v75
    %v78 = vld [vmem:[%s0] sm:%s3]
    %79 = vst [vmem:[#allocation0] sm:%s3] %v78
    %v80 = vld [vmem:[#allocation0] ss:$8 sm:$0xf]
    %v81 = vld [vmem:[#allocation0] ss:$8 sm:$0xf0]
    %vm82 = vcmask 1047556
    %v83 = vsel %vm82, %v81, %v80
    %vm84 = vcmask 64512
    %85 = vst.msk [vmem:[%s1] sm:$0xff] %vm84, %v83
    %s86 = scalar_lea.vmem [#allocation0], 64
    %v87 = vld [vmem:[%s86] ss:$8 sm:$0xf]
    %s88 = scalar_lea.vmem [#allocation0], 64
    %v89 = vld [vmem:[%s88] ss:$8 sm:$0xf0]
    %vm90 = vcmask 1047556
    %v91 = vsel %vm90, %v89, %v87
    %vm92 = vcmask 64512
    %s93 = scalar_lea.vmem %s1, 8
    %94 = vst.msk [vmem:[%s93] sm:$0xff] %vm92, %v91
    %s95 = scalar_lea.vmem [#allocation0], 3
    %v96 = vld [vmem:[%s95] ss:$8 sm:$0xf]
    %s97 = scalar_lea.vmem [#allocation0], 3
    %v98 = vld [vmem:[%s97] ss:$8 sm:$0xf0]
    %vm99 = vcmask 1047556
    %v100 = vsel %vm99, %v98, %v96
    %101 = vrot.lane.b32.xlu0 %v100, 24
    %v102 = vpop.permute.xlu0 %101
    %vm103 = vcmask 261312
    %104 = vst.msk [vmem:[%s1] sm:$0xff] %vm103, %v102
    %s105 = scalar_lea.vmem [#allocation0], 67
    %v106 = vld [vmem:[%s105] ss:$8 sm:$0xf]
    %s107 = scalar_lea.vmem [#allocation0], 67
    %v108 = vld [vmem:[%s107] ss:$8 sm:$0xf0]
    %vm109 = vcmask 1047556
    %v110 = vsel %vm109, %v108, %v106
    %111 = vrot.lane.b32.xlu0 %v110, 24
    %v112 = vpop.permute.xlu0 %111
    %vm113 = vcmask 261312
    %s114 = scalar_lea.vmem %s1, 8
    %115 = vst.msk [vmem:[%s114] sm:$0xff] %vm113, %v112
    %s116 = scalar_lea.vmem [#allocation0], 2
    %v117 = vld [vmem:[%s116] ss:$8 sm:$0xf]
    %s118 = scalar_lea.vmem [#allocation0], 2
    %v119 = vld [vmem:[%s118] ss:$8 sm:$0xf0]
    %vm120 = vcmask 1047556
    %v121 = vsel %vm120, %v119, %v117
    %122 = vrot.lane.b32.xlu0 %v121, 16
    %v123 = vpop.permute.xlu0 %122
    %vm124 = vcmask 195712
    %125 = vst.msk [vmem:[%s1] sm:$0xff] %vm124, %v123
    %s126 = scalar_lea.vmem [#allocation0], 66
    %v127 = vld [vmem:[%s126] ss:$8 sm:$0xf]
    %s128 = scalar_lea.vmem [#allocation0], 66
    %v129 = vld [vmem:[%s128] ss:$8 sm:$0xf0]
    %vm130 = vcmask 1047556
    %v131 = vsel %vm130, %v129, %v127
    %132 = vrot.lane.b32.xlu0 %v131, 16
    %v133 = vpop.permute.xlu0 %132
    %vm134 = vcmask 195712
    %s135 = scalar_lea.vmem %s1, 8
    %136 = vst.msk [vmem:[%s135] sm:$0xff] %vm134, %v133
    %s137 = scalar_lea.vmem [#allocation0], 1
    %v138 = vld [vmem:[%s137] ss:$8 sm:$0xf]
    %s139 = scalar_lea.vmem [#allocation0], 1
    %v140 = vld [vmem:[%s139] ss:$8 sm:$0xf0]
    %vm141 = vcmask 1047556
    %v142 = vsel %vm141, %v140, %v138
    %143 = vrot.lane.b32.xlu0 %v142, 8
    %v144 = vpop.permute.xlu0 %143
    %vm145 = vcmask 130112
    %146 = vst.msk [vmem:[%s1] sm:$0xff] %vm145, %v144
    %s147 = scalar_lea.vmem [#allocation0], 65
    %v148 = vld [vmem:[%s147] ss:$8 sm:$0xf]
    %s149 = scalar_lea.vmem [#allocation0], 65
    %v150 = vld [vmem:[%s149] ss:$8 sm:$0xf0]
    %vm151 = vcmask 1047556
    %v152 = vsel %vm151, %v150, %v148
    %153 = vrot.lane.b32.xlu0 %v152, 8
    %v154 = vpop.permute.xlu0 %153
    %vm155 = vcmask 130112
    %s156 = scalar_lea.vmem %s1, 8
    %157 = vst.msk [vmem:[%s156] sm:$0xff] %vm155, %v154

// kernel: tile.33
$region0: #{tile.33}
  #allocation0 [shape = 's32[1]{0}', space=sflag, size = 0x4, scoped, tag = 'scoped memory for tile.33']
  %s0 = inlined_call_operand.vmem [shape: f32[8,16], index: 0, kind: input, shape index: {}]
  %s1 = inlined_call_operand.vmem [shape: f32[2,8,2,16], index: 1, kind: output, shape index: {}]
  // Predicated region
  $region2: #{tile.33} parent=0 // pred_check
    _
  $region3: #{tile.33} parent=0 // pred_check_branch
    %3 = sbr.rel (0) target = $region5
  $region4: #{tile.33} parent=0 // pred_region
    _
  $region5: #{tile.33} parent=0 // pred_fallthru
    _
  %v4 = vld [vmem:[%s0] ss:$0 sm:$0xff]
  %5 = vst [vmem:[%s1] sm:$0x3] %v4
  %s6 = scalar_lea.vmem %s1, 16
  %7 = vst [vmem:[%s6] sm:$0x3] %v4
  %s8 = scalar_lea.vmem %s0, 1
  %v9 = vld [vmem:[%s8] ss:$0 sm:$0xff]
  %s10 = scalar_lea.vmem %s1, 2
  %11 = vst [vmem:[%s10] sm:$0x3] %v9
  %s12 = scalar_lea.vmem %s1, 18
  %13 = vst [vmem:[%s12] sm:$0x3] %v9
  %s14 = scalar_lea.vmem %s0, 2
  %v15 = vld [vmem:[%s14] ss:$0 sm:$0xff]
  %s16 = scalar_lea.vmem %s1, 4
  %17 = vst [vmem:[%s16] sm:$0x3] %v15
  %s18 = scalar_lea.vmem %s1, 20
  %19 = vst [vmem:[%s18] sm:$0x3] %v15
  %s20 = scalar_lea.vmem %s0, 3
  %v21 = vld [vmem:[%s20] ss:$0 sm:$0xff]
  %s22 = scalar_lea.vmem %s1, 6
  %23 = vst [vmem:[%s22] sm:$0x3] %v21
  %s24 = scalar_lea.vmem %s1, 22
  %25 = vst [vmem:[%s24] sm:$0x3] %v21
  %s26 = scalar_lea.vmem %s0, 4
  %v27 = vld [vmem:[%s26] ss:$0 sm:$0xff]
  %s28 = scalar_lea.vmem %s1, 8
  %29 = vst [vmem:[%s28] sm:$0x3] %v27
  %s30 = scalar_lea.vmem %s1, 24
  %31 = vst [vmem:[%s30] sm:$0x3] %v27
  %s32 = scalar_lea.vmem %s0, 5
  %v33 = vld [vmem:[%s32] ss:$0 sm:$0xff]
  %s34 = scalar_lea.vmem %s1, 10
  %35 = vst [vmem:[%s34] sm:$0x3] %v33
  %s36 = scalar_lea.vmem %s1, 26
  %37 = vst [vmem:[%s36] sm:$0x3] %v33
  %s38 = scalar_lea.vmem %s0, 6
  %v39 = vld [vmem:[%s38] ss:$0 sm:$0xff]
  %s40 = scalar_lea.vmem %s1, 12
  %41 = vst [vmem:[%s40] sm:$0x3] %v39
  %s42 = scalar_lea.vmem %s1, 28
  %43 = vst [vmem:[%s42] sm:$0x3] %v39
  %s44 = scalar_lea.vmem %s0, 7
  %v45 = vld [vmem:[%s44] ss:$0 sm:$0xff]
  %s46 = scalar_lea.vmem %s1, 14
  %47 = vst [vmem:[%s46] sm:$0x3] %v45
  %s48 = scalar_lea.vmem %s1, 30
  %49 = vst [vmem:[%s48] sm:$0x3] %v45

// kernel: tile.34
$region0: #{tile.34}
  %s0 = inlined_call_operand.vmem [shape: f32[2,8,2,16], index: 0, kind: input, shape index: {}]
  %s1 = inlined_call_operand.vmem [shape: f32[16,32], index: 1, kind: output, shape index: {}]
  $region1: #{tile.34} parent=0
    #allocation0 [shape = 'u8[65536]{0}', space=vmem, size = 0x10000, scoped, tag = 'scoped mem for input reshape']
    %s3 = sshllo.u32 0, 2
    %s4 = smul.addr 2, 15
    %s5 = scalar_lea.vmem %s0, %s4
    %v6 = vld [vmem:[%s5] sm:%s3]
    %s7 = scalar_lea.vmem [#allocation0], 120
    %8 = vst [vmem:[%s7] sm:%s3] %v6
    %s9 = smul.addr 2, 14
    %s10 = scalar_lea.vmem %s0, %s9
    %v11 = vld [vmem:[%s10] sm:%s3]
    %s12 = scalar_lea.vmem [#allocation0], 112
    %13 = vst [vmem:[%s12] sm:%s3] %v11
    %s14 = smul.addr 2, 13
    %s15 = scalar_lea.vmem %s0, %s14
    %v16 = vld [vmem:[%s15] sm:%s3]
    %s17 = scalar_lea.vmem [#allocation0], 104
    %18 = vst [vmem:[%s17] sm:%s3] %v16
    %s19 = smul.addr 2, 12
    %s20 = scalar_lea.vmem %s0, %s19
    %v21 = vld [vmem:[%s20] sm:%s3]
    %s22 = scalar_lea.vmem [#allocation0], 96
    %23 = vst [vmem:[%s22] sm:%s3] %v21
    %s24 = smul.addr 2, 11
    %s25 = scalar_lea.vmem %s0, %s24
    %v26 = vld [vmem:[%s25] sm:%s3]
    %s27 = scalar_lea.vmem [#allocation0], 88
    %28 = vst [vmem:[%s27] sm:%s3] %v26
    %s29 = smul.addr 2, 10
    %s30 = scalar_lea.vmem %s0, %s29
    %v31 = vld [vmem:[%s30] sm:%s3]
    %s32 = scalar_lea.vmem [#allocation0], 80
    %33 = vst [vmem:[%s32] sm:%s3] %v31
    %s34 = smul.addr 2, 9
    %s35 = scalar_lea.vmem %s0, %s34
    %v36 = vld [vmem:[%s35] sm:%s3]
    %s37 = scalar_lea.vmem [#allocation0], 72
    %38 = vst [vmem:[%s37] sm:%s3] %v36
    %s39 = smul.addr 2, 8
    %s40 = scalar_lea.vmem %s0, %s39
    %v41 = vld [vmem:[%s40] sm:%s3]
    %s42 = scalar_lea.vmem [#allocation0], 64
    %43 = vst [vmem:[%s42] sm:%s3] %v41
    %s44 = smul.addr 2, 7
    %s45 = scalar_lea.vmem %s0, %s44
    %v46 = vld [vmem:[%s45] sm:%s3]
    %s47 = scalar_lea.vmem [#allocation0], 56
    %48 = vst [vmem:[%s47] sm:%s3] %v46
    %s49 = smul.addr 2, 6
    %s50 = scalar_lea.vmem %s0, %s49
    %v51 = vld [vmem:[%s50] sm:%s3]
    %s52 = scalar_lea.vmem [#allocation0], 48
    %53 = vst [vmem:[%s52] sm:%s3] %v51
    %s54 = smul.addr 2, 5
    %s55 = scalar_lea.vmem %s0, %s54
    %v56 = vld [vmem:[%s55] sm:%s3]
    %s57 = scalar_lea.vmem [#allocation0], 40
    %58 = vst [vmem:[%s57] sm:%s3] %v56
    %s59 = smul.addr 2, 4
    %s60 = scalar_lea.vmem %s0, %s59
    %v61 = vld [vmem:[%s60] sm:%s3]
    %s62 = scalar_lea.vmem [#allocation0], 32
    %63 = vst [vmem:[%s62] sm:%s3] %v61
    %s64 = smul.addr 2, 3
    %s65 = scalar_lea.vmem %s0, %s64
    %v66 = vld [vmem:[%s65] sm:%s3]
    %s67 = scalar_lea.vmem [#allocation0], 24
    %68 = vst [vmem:[%s67] sm:%s3] %v66
    %s69 = smul.addr 2, 2
    %s70 = scalar_lea.vmem %s0, %s69
    %v71 = vld [vmem:[%s70] sm:%s3]
    %s72 = scalar_lea.vmem [#allocation0], 16
    %73 = vst [vmem:[%s72] sm:%s3] %v71
    %s74 = scalar_lea.vmem %s0, 2
    %v75 = vld [vmem:[%s74] sm:%s3]
    %s76 = scalar_lea.vmem [#allocation0], 8
    %77 = vst [vmem:[%s76] sm:%s3] %v75
    %v78 = vld [vmem:[%s0] sm:%s3]
    %79 = vst [vmem:[#allocation0] sm:%s3] %v78
    %v80 = vld [vmem:[#allocation0] ss:$8 sm:$0xf]
    %v81 = vld [vmem:[#allocation0] ss:$8 sm:$0xf0]
    %vm82 = vcmask 1047556
    %v83 = vsel %vm82, %v81, %v80
    %vm84 = vcmask 130048
    %85 = vst.msk [vmem:[%s1] sm:$0xff] %vm84, %v83
    %s86 = scalar_lea.vmem [#allocation0], 64
    %v87 = vld [vmem:[%s86] ss:$8 sm:$0xf]
    %s88 = scalar_lea.vmem [#allocation0], 64
    %v89 = vld [vmem:[%s88] ss:$8 sm:$0xf0]
    %vm90 = vcmask 1047556
    %v91 = vsel %vm90, %v89, %v87
    %vm92 = vcmask 130048
    %s93 = scalar_lea.vmem %s1, 8
    %94 = vst.msk [vmem:[%s93] sm:$0xff] %vm92, %v91
    %s95 = scalar_lea.vmem [#allocation0], 1
    %v96 = vld [vmem:[%s95] ss:$8 sm:$0xf]
    %s97 = scalar_lea.vmem [#allocation0], 1
    %v98 = vld [vmem:[%s97] ss:$8 sm:$0xf0]
    %vm99 = vcmask 1047556
    %v100 = vsel %vm99, %v98, %v96
    %101 = vrot.lane.b32.xlu0 %v100, 16
    %v102 = vpop.permute.xlu0 %101
    %vm103 = vcmask 261248
    %104 = vst.msk [vmem:[%s1] sm:$0xff] %vm103, %v102
    %s105 = scalar_lea.vmem [#allocation0], 65
    %v106 = vld [vmem:[%s105] ss:$8 sm:$0xf]
    %s107 = scalar_lea.vmem [#allocation0], 65
    %v108 = vld [vmem:[%s107] ss:$8 sm:$0xf0]
    %vm109 = vcmask 1047556
    %v110 = vsel %vm109, %v108, %v106
    %111 = vrot.lane.b32.xlu0 %v110, 16
    %v112 = vpop.permute.xlu0 %111
    %vm113 = vcmask 261248
    %s114 = scalar_lea.vmem %s1, 8
    %115 = vst.msk [vmem:[%s114] sm:$0xff] %vm113, %v112

// kernel: gpt_crosslayer_block.1
$region0: #{gpt_crosslayer_block.1}
  #allocation0 [shape = 'u32[]', space=smem, size = 0x4, offset = 0x4, fixed_abs, tag = 'smem constant byte address 0x4 - core index']
  #allocation1 [shape = 'u32[144,128]{1,0:T(1,128)}', space=vmem, size = 0x12000, scoped, tag = 'internal scratch']
  #allocation2 [shape = 'f32[16,32]{1,0:T(8,128)}', space=vmem, size = 0x2000, scoped, tag = 'scratch operand']
  %s0 = inlined_call_operand.vmem [shape: f32[16,32], index: 0, kind: input, shape index: {}]
  %s1 = inlined_call_operand.vmem [shape: f32[160,32], index: 1, kind: input, shape index: {}]
  %s2 = inlined_call_operand.vmem [shape: f32[65,128], index: 2, kind: input, shape index: {}]
  %s3 = inlined_call_operand.vmem [shape: f32[82,32], index: 3, kind: input, shape index: {}]
  %s4 = inlined_call_operand.hbm [shape: f32[16,32], index: 4, kind: output, shape index: {0}]
  %s5 = inlined_call_operand.vmem [shape: f32[16,32], index: 5, kind: output, shape index: {1}]
  %6 = xla_tuple %s4, %s5
  %s7 = sld [smem:[#allocation0]]
  $region34: #{gpt_crosslayer_block.1} parent=0
    _
  %s9 = ssub.s32 1, %s7
  %s10 = scalar_select 0, %s9, %s7
  $region1: #{gpt_crosslayer_block.1} parent=0
    #allocation3 [shape = 'u8[8192]{0}', space=vmem, size = 0x2000, scoped, tag = 'output window, operand 0, single buffered']
    #allocation4 [shape = 's32[1]{0}', space=sflag, size = 0x4, scoped, tag = 'scoped memory for gpt_crosslayer_block.1']
    %11 = vsyncpa [#allocation4], 0
    // Predicated region
    $region2: #{gpt_crosslayer_block.1} parent=1 // pred_check
      _
    $region3: #{gpt_crosslayer_block.1} parent=1 // pred_check_branch
      %13 = sbr.rel (0) target = $region5
    $region4: #{gpt_crosslayer_block.1} parent=1 // pred_region
      _
    $region5: #{gpt_crosslayer_block.1} parent=1 // pred_fallthru
      _
    // Predicated region
    $region6: #{gpt_crosslayer_block.1} parent=1 // pred_check
      _
    $region7: #{gpt_crosslayer_block.1} parent=1 // pred_check_branch
      %15 = sbr.rel (0) target = $region9
    $region8: #{gpt_crosslayer_block.1} parent=1 // pred_region
      _
    $region9: #{gpt_crosslayer_block.1} parent=1 // pred_fallthru
      _
    // Predicated region
    $region10: #{gpt_crosslayer_block.1} parent=1 // pred_check
      _
    $region11: #{gpt_crosslayer_block.1} parent=1 // pred_check_branch
      %17 = sbr.rel (0) target = $region13
    $region12: #{gpt_crosslayer_block.1} parent=1 // pred_region
      _
    $region13: #{gpt_crosslayer_block.1} parent=1 // pred_fallthru
      _
    // Predicated region
    $region14: #{gpt_crosslayer_block.1} parent=1 // pred_check
      _
    $region15: #{gpt_crosslayer_block.1} parent=1 // pred_check_branch
      %19 = sbr.rel (0) target = $region17
    $region16: #{gpt_crosslayer_block.1} parent=1 // pred_region
      _
    $region17: #{gpt_crosslayer_block.1} parent=1 // pred_fallthru
      _
    %v20 = vld [vmem:[%s0] sm:$0xff]
    %v21 = vld [vmem:[%s0 + $0x8] sm:$0xff]
    %v22 = vld [vmem:[%s1] sm:$0xff]
    %v23 = vld [vmem:[%s1 + $0x8] sm:$0xff]
    %v24 = vld [vmem:[%s1 + $0x10] sm:$0xff]
    %v25 = vld [vmem:[%s1 + $0x18] sm:$0xff]
    %v26 = vld [vmem:[%s1 + $0x20] sm:$0xff]
    %v27 = vld [vmem:[%s1 + $0x28] sm:$0xff]
    %v28 = vld [vmem:[%s1 + $0x30] sm:$0xff]
    %v29 = vld [vmem:[%s1 + $0x38] sm:$0xff]
    %v30 = vld [vmem:[%s1 + $0x40] sm:$0xff]
    %v31 = vld [vmem:[%s1 + $0x48] sm:$0xff]
    %v32 = vld [vmem:[%s1 + $0x50] sm:$0xff]
    %v33 = vld [vmem:[%s1 + $0x58] sm:$0xff]
    %v34 = vld [vmem:[%s1 + $0x60] sm:$0xff]
    %v35 = vld [vmem:[%s1 + $0x68] sm:$0xff]
    %v36 = vld [vmem:[%s1 + $0x70] sm:$0xff]
    %v37 = vld [vmem:[%s1 + $0x78] sm:$0xff]
    %v38 = vld [vmem:[%s1 + $0x80] sm:$0xff]
    %v39 = vld [vmem:[%s1 + $0x88] sm:$0xff]
    %v40 = vld [vmem:[%s1 + $0x90] sm:$0xff]
    %v41 = vld [vmem:[%s1 + $0x98] sm:$0xff]
    %v42 = vld [vmem:[%s2] sm:$0xff]
    %v43 = vld [vmem:[%s2 + $0x8] sm:$0xff]
    %v44 = vld [vmem:[%s2 + $0x10] sm:$0xff]
    %v45 = vld [vmem:[%s2 + $0x18] sm:$0xff]
    %v46 = vld [vmem:[%s2 + $0x20] sm:$0xff]
    %v47 = vld [vmem:[%s2 + $0x28] sm:$0xff]
    %v48 = vld [vmem:[%s2 + $0x30] sm:$0xff]
    %v49 = vld [vmem:[%s2 + $0x38] sm:$0xff]
    %v50 = vld [vmem:[%s2 + $0x40] sm:$0x1]
    %v51 = vld [vmem:[%s3] sm:$0xff]
    %v52 = vld [vmem:[%s3 + $0x8] sm:$0xff]
    %v53 = vld [vmem:[%s3 + $0x10] sm:$0xff]
    %v54 = vld [vmem:[%s3 + $0x18] sm:$0xff]
    %v55 = vld [vmem:[%s3 + $0x20] sm:$0xff]
    %v56 = vld [vmem:[%s3 + $0x28] sm:$0xff]
    %v57 = vld [vmem:[%s3 + $0x30] sm:$0xff]
    %v58 = vld [vmem:[%s3 + $0x38] sm:$0xff]
    %v59 = vld [vmem:[%s3 + $0x40] sm:$0xff]
    %v60 = vld [vmem:[%s3 + $0x48] sm:$0xff]
    %v61 = vld [vmem:[%s3 + $0x50] sm:$0x3]
    %vm62 = vcmask 261120
    %v63 = vsel %vm62, %v20, 0.0
    %64 = vadd.xlane.f32.xlu0 %v63
    %v65 = vpop.xlane.xlu0 %64
    %v66 = vsel %vm62, %v21, 0.0
    %67 = vadd.xlane.f32.xlu0 %v66
    %v68 = vpop.xlane.xlu0 %67
    %v69 = vrcp.pop 32.0
    %v70 = vmul.f32 %v65, %v69
    %v71 = vmul.f32 %v68, %v69
    %v72 = vsub.f32 %v20, %v70
    %v73 = vsub.f32 %v21, %v71
    %v74 = vmul.f32 %v72, %v72
    %v75 = vmul.f32 %v73, %v73
    %v76 = vsel %vm62, %v74, 0.0
    %77 = vadd.xlane.f32.xlu0 %v76
    %v78 = vpop.xlane.xlu0 %77
    %v79 = vsel %vm62, %v75, 0.0
    %80 = vadd.xlane.f32.xlu0 %v79
    %v81 = vpop.xlane.xlu0 %80
    %v82 = vmul.f32 %v78, %v69
    %v83 = vmul.f32 %v81, %v69
    %v84 = vadd.f32 %v82, 1e-05
    %v85 = vadd.f32 %v83, 1e-05
    %v86 = vrsqrt.pop %v84
    %v87 = vrsqrt.pop %v85
    %v88 = vmul.f32 %v72, %v86
    %v89 = vmul.f32 %v73, %v87
    %v90 = vlaneseq
    %v91 = vshrl.u32 %v90, 7
    %v92 = vsub.s32 0, %v91
    %v93 = vrot.slane %v60, %v92
    %v94 = vmul.f32 %v88, %v93
    %v95 = vmul.f32 %v89, %v93
    %v96 = vlaneseq
    %v97 = vshrl.u32 %v96, 7
    %v98 = vsub.s32 1, %v97
    %v99 = vrot.slane %v60, %v98
    %v100 = vadd.f32 %v94, %v99
    %v101 = vadd.f32 %v95, %v99
    %v102 = vlaneseq
    %v103 = vshrl.u32 %v102, 7
    %v104 = vsub.s32 6, %v103
    %v105 = vrot.slane %v60, %v104
    %v107 = vsel %vm62, %v100, 0
    %v110 = vsel %vm62, %v101, 0
    %112 = vmatprep.subr.mxu0 0.0
    %113 = vmatpush1.msra.mxu0 %v22
    %114 = vmatprep.subr.mxu0 0.0
    %115 = vmatpush1.msra.mxu0 %v23
    %116 = vmatprep.subr.mxu0 0.0
    %117 = vmatpush1.msra.mxu0 %v24
    %118 = vmatprep.subr.mxu0 0.0
    %119 = vmatpush1.msra.mxu0 %v25
    %120 = vmatprep.subr.mxu0 0.0
    %121 = vmatpush1.msra.mxu0 0.0
    %122 = vmatprep.subr.mxu0 0.0
    %123 = vmatpush1.msra.mxu0 0.0
    %124 = vmatprep.subr.mxu0 0.0
    %125 = vmatpush1.msra.mxu0 0.0
    %126 = vmatprep.subr.mxu0 0.0
    %127 = vmatpush1.msra.mxu0 0.0
    %128 = vmatprep.subr.mxu0 0.0
    %129 = vmatpush1.msra.mxu0 0.0
    %130 = vmatprep.subr.mxu0 0.0
    %131 = vmatpush1.msra.mxu0 0.0
    %132 = vmatprep.subr.mxu0 0.0
    %133 = vmatpush1.msra.mxu0 0.0
    %134 = vmatprep.subr.mxu0 0.0
    %135 = vmatpush1.msra.mxu0 0.0
    %136 = vmatprep.subr.mxu0 0.0
    %137 = vmatpush1.msra.mxu0 0.0
    %138 = vmatprep.subr.mxu0 0.0
    %139 = vmatpush1.msra.mxu0 0.0
    %140 = vmatprep.subr.mxu0 0.0
    %141 = vmatpush1.msra.mxu0 0.0
    %142 = vmatprep.subr.mxu0 0.0
    %143 = vmatpush1.msra.mxu0 0.0
    %144 = vmatprep.subr.mxu0 0.0
    %145 = vmatpush1.msra.mxu0 0.0
    %146 = vmatprep.subr.mxu0 0.0
    %147 = vmatpush1.msra.mxu0 0.0
    %148 = vmatprep.subr.mxu0 0.0
    %149 = vmatpush1.msra.mxu0 0.0
    %150 = vmatprep.subr.mxu0 0.0
    %151 = vmatpush1.msra.mxu0 0.0
    %152 = vmatprep.subr.mxu0 0.0
    %153 = vmatpush1.msra.mxu0 0.0
    %154 = vmatprep.subr.mxu0 0.0
    %155 = vmatpush1.msra.mxu0 0.0
    %156 = vmatprep.subr.mxu0 0.0
    %157 = vmatpush1.msra.mxu0 0.0
    %158 = vmatprep.subr.mxu0 0.0
    %159 = vmatpush1.msra.mxu0 0.0
    %160 = vmatprep.subr.mxu0 0.0
    %161 = vmatpush1.msra.mxu0 0.0
    %162 = vmatprep.subr.mxu0 0.0
    %163 = vmatpush1.msra.mxu0 0.0
    %164 = vmatprep.subr.mxu0 0.0
    %165 = vmatpush1.msra.mxu0 0.0
    %166 = vmatprep.subr.mxu0 0.0
    %167 = vmatpush1.msra.mxu0 0.0
    %168 = vmatprep.subr.mxu0 0.0
    %169 = vmatpush1.msra.mxu0 0.0
    %170 = vmatprep.subr.mxu0 0.0
    %171 = vmatpush1.msra.mxu0 0.0
    %172 = vmatprep.subr.mxu0 0.0
    %173 = vmatpush1.msra.mxu0 0.0
    %174 = vmatprep.subr.mxu0 0.0
    %175 = vmatpush1.msra.mxu0 0.0
    %176 = vmatprep.mubr.f32.mxu0 0.0
    %177 = vmatmul.mubr.f32.gmra.mrb[0].mxu0 %v107
    %v178 = vpop.f32.mrb[0].mxu0
    %v179 = vadd.f32 %v105, %v178
    %v180 = vpop.f32.mrb[0].mxu0
    %181 = vmatprep.mubr.f32.mxu0 0.0
    %182 = vmatmul.mubr.f32.gmra.mrb[0].mxu0 %v110
    %v183 = vpop.f32.mrb[0].mxu0
    %v184 = vadd.f32 %v105, %v183
    %v185 = vpop.f32.mrb[0].mxu0
    %186 = vdwg.mxu0
    %v187 = vmul.f32 %v179, %v55
    %v188 = vmul.f32 %v184, %v56
    %v190 = vsel %vm62, %v179, 0
    %v193 = vsel %vm62, %v184, 0
    %195 = vmatprep.subr.mxu0 0.0
    %196 = vmatpush1.msra.mxu0 %v38
    %197 = vmatprep.subr.mxu0 0.0
    %198 = vmatpush1.msra.mxu0 %v39
    %199 = vmatprep.subr.mxu0 0.0
    %200 = vmatpush1.msra.mxu0 %v40
    %201 = vmatprep.subr.mxu0 0.0
    %202 = vmatpush1.msra.mxu0 %v41
    %203 = vmatprep.subr.mxu0 0.0
    %204 = vmatpush1.msra.mxu0 0.0
    %205 = vmatprep.subr.mxu0 0.0
    %206 = vmatpush1.msra.mxu0 0.0
    %207 = vmatprep.subr.mxu0 0.0
    %208 = vmatpush1.msra.mxu0 0.0
    %209 = vmatprep.subr.mxu0 0.0
    %210 = vmatpush1.msra.mxu0 0.0
    %211 = vmatprep.subr.mxu0 0.0
    %212 = vmatpush1.msra.mxu0 0.0
    %213 = vmatprep.subr.mxu0 0.0
    %214 = vmatpush1.msra.mxu0 0.0
    %215 = vmatprep.subr.mxu0 0.0
    %216 = vmatpush1.msra.mxu0 0.0
    %217 = vmatprep.subr.mxu0 0.0
    %218 = vmatpush1.msra.mxu0 0.0
    %219 = vmatprep.subr.mxu0 0.0
    %220 = vmatpush1.msra.mxu0 0.0
    %221 = vmatprep.subr.mxu0 0.0
    %222 = vmatpush1.msra.mxu0 0.0
    %223 = vmatprep.subr.mxu0 0.0
    %224 = vmatpush1.msra.mxu0 0.0
    %225 = vmatprep.subr.mxu0 0.0
    %226 = vmatpush1.msra.mxu0 0.0
    %227 = vmatprep.subr.mxu0 0.0
    %228 = vmatpush1.msra.mxu0 0.0
    %229 = vmatprep.subr.mxu0 0.0
    %230 = vmatpush1.msra.mxu0 0.0
    %231 = vmatprep.subr.mxu0 0.0
    %232 = vmatpush1.msra.mxu0 0.0
    %233 = vmatprep.subr.mxu0 0.0
    %234 = vmatpush1.msra.mxu0 0.0
    %235 = vmatprep.subr.mxu0 0.0
    %236 = vmatpush1.msra.mxu0 0.0
    %237 = vmatprep.subr.mxu0 0.0
    %238 = vmatpush1.msra.mxu0 0.0
    %239 = vmatprep.subr.mxu0 0.0
    %240 = vmatpush1.msra.mxu0 0.0
    %241 = vmatprep.subr.mxu0 0.0
    %242 = vmatpush1.msra.mxu0 0.0
    %243 = vmatprep.subr.mxu0 0.0
    %244 = vmatpush1.msra.mxu0 0.0
    %245 = vmatprep.subr.mxu0 0.0
    %246 = vmatpush1.msra.mxu0 0.0
    %247 = vmatprep.subr.mxu0 0.0
    %248 = vmatpush1.msra.mxu0 0.0
    %249 = vmatprep.subr.mxu0 0.0
    %250 = vmatpush1.msra.mxu0 0.0
    %251 = vmatprep.subr.mxu0 0.0
    %252 = vmatpush1.msra.mxu0 0.0
    %253 = vmatprep.subr.mxu0 0.0
    %254 = vmatpush1.msra.mxu0 0.0
    %255 = vmatprep.subr.mxu0 0.0
    %256 = vmatpush1.msra.mxu0 0.0
    %257 = vmatprep.subr.mxu0 0.0
    %258 = vmatpush1.msra.mxu0 0.0
    %259 = vmatprep.mubr.f32.mxu0 0.0
    %260 = vmatmul.mubr.f32.gmra.mrb[0].mxu0 %v190
    %v261 = vpop.f32.mrb[0].mxu0
    %v262 = vadd.f32 0.0, %v261
    %v263 = vpop.f32.mrb[0].mxu0
    %264 = vmatprep.mubr.f32.mxu0 0.0
    %265 = vmatmul.mubr.f32.gmra.mrb[0].mxu0 %v193
    %v266 = vpop.f32.mrb[0].mxu0
    %v267 = vadd.f32 0.0, %v266
    %v268 = vpop.f32.mrb[0].mxu0
    %269 = vdwg.mxu0
    %v270 = vmul.f32 %v262, %v57
    %v271 = vmul.f32 %v267, %v58
    %v272 = vadd.f32 %v187, %v270
    %v273 = vadd.f32 %v188, %v271
    %274 = vst.msk [vmem:[%s5] sm:$0xff] %vm62, %v272
    %275 = vst.msk [vmem:[%s5 + $0x8] sm:$0xff] %vm62, %v273
    %v276 = vlaneseq
    %v277 = vshrl.u32 %v276, 7
    %v278 = vsub.s32 2, %v277
    %v279 = vrot.slane %v60, %v278
    %v280 = vmul.f32 %v88, %v279
    %v281 = vmul.f32 %v89, %v279
    %v282 = vlaneseq
    %v283 = vshrl.u32 %v282, 7
    %v284 = vsub.s32 3, %v283
    %v285 = vrot.slane %v60, %v284
    %v286 = vadd.f32 %v280, %v285
    %v287 = vadd.f32 %v281, %v285
    %v288 = vlaneseq
    %v289 = vshrl.u32 %v288, 7
    %v290 = vsub.s32 7, %v289
    %v291 = vrot.slane %v60, %v290
    %v293 = vsel %vm62, %v286, 0
    %v296 = vsel %vm62, %v287, 0
    %298 = vmatprep.subr.mxu0 0.0
    %299 = vmatpush1.msra.mxu0 %v26
    %300 = vmatprep.subr.mxu0 0.0
    %301 = vmatpush1.msra.mxu0 %v27
    %302 = vmatprep.subr.mxu0 0.0
    %303 = vmatpush1.msra.mxu0 %v28
    %304 = vmatprep.subr.mxu0 0.0
    %305 = vmatpush1.msra.mxu0 %v29
    %306 = vmatprep.subr.mxu0 0.0
    %307 = vmatpush1.msra.mxu0 0.0
    %308 = vmatprep.subr.mxu0 0.0
    %309 = vmatpush1.msra.mxu0 0.0
    %310 = vmatprep.subr.mxu0 0.0
    %311 = vmatpush1.msra.mxu0 0.0
    %312 = vmatprep.subr.mxu0 0.0
    %313 = vmatpush1.msra.mxu0 0.0
    %314 = vmatprep.subr.mxu0 0.0
    %315 = vmatpush1.msra.mxu0 0.0
    %316 = vmatprep.subr.mxu0 0.0
    %317 = vmatpush1.msra.mxu0 0.0
    %318 = vmatprep.subr.mxu0 0.0
    %319 = vmatpush1.msra.mxu0 0.0
    %320 = vmatprep.subr.mxu0 0.0
    %321 = vmatpush1.msra.mxu0 0.0
    %322 = vmatprep.subr.mxu0 0.0
    %323 = vmatpush1.msra.mxu0 0.0
    %324 = vmatprep.subr.mxu0 0.0
    %325 = vmatpush1.msra.mxu0 0.0
    %326 = vmatprep.subr.mxu0 0.0
    %327 = vmatpush1.msra.mxu0 0.0
    %328 = vmatprep.subr.mxu0 0.0
    %329 = vmatpush1.msra.mxu0 0.0
    %330 = vmatprep.subr.mxu0 0.0
    %331 = vmatpush1.msra.mxu0 0.0
    %332 = vmatprep.subr.mxu0 0.0
    %333 = vmatpush1.msra.mxu0 0.0
    %334 = vmatprep.subr.mxu0 0.0
    %335 = vmatpush1.msra.mxu0 0.0
    %336 = vmatprep.subr.mxu0 0.0
    %337 = vmatpush1.msra.mxu0 0.0
    %338 = vmatprep.subr.mxu0 0.0
    %339 = vmatpush1.msra.mxu0 0.0
    %340 = vmatprep.subr.mxu0 0.0
    %341 = vmatpush1.msra.mxu0 0.0
    %342 = vmatprep.subr.mxu0 0.0
    %343 = vmatpush1.msra.mxu0 0.0
    %344 = vmatprep.subr.mxu0 0.0
    %345 = vmatpush1.msra.mxu0 0.0
    %346 = vmatprep.subr.mxu0 0.0
    %347 = vmatpush1.msra.mxu0 0.0
    %348 = vmatprep.subr.mxu0 0.0
    %349 = vmatpush1.msra.mxu0 0.0
    %350 = vmatprep.subr.mxu0 0.0
    %351 = vmatpush1.msra.mxu0 0.0
    %352 = vmatprep.subr.mxu0 0.0
    %353 = vmatpush1.msra.mxu0 0.0
    %354 = vmatprep.subr.mxu0 0.0
    %355 = vmatpush1.msra.mxu0 0.0
    %356 = vmatprep.subr.mxu0 0.0
    %357 = vmatpush1.msra.mxu0 0.0
    %358 = vmatprep.subr.mxu0 0.0
    %359 = vmatpush1.msra.mxu0 0.0
    %360 = vmatprep.subr.mxu0 0.0
    %361 = vmatpush1.msra.mxu0 0.0
    %362 = vmatprep.mubr.f32.mxu0 0.0
    %363 = vmatmul.mubr.f32.gmra.mrb[0].mxu0 %v293
    %v364 = vpop.f32.mrb[0].mxu0
    %v365 = vadd.f32 %v291, %v364
    %v366 = vpop.f32.mrb[0].mxu0
    %367 = vmatprep.mubr.f32.mxu0 0.0
    %368 = vmatmul.mubr.f32.gmra.mrb[0].mxu0 %v296
    %v369 = vpop.f32.mrb[0].mxu0
    %v370 = vadd.f32 %v291, %v369
    %v371 = vpop.f32.mrb[0].mxu0
    %372 = vdwg.mxu0
    %v373 = vmul.f32 %v365, %v51
    %v374 = vmul.f32 %v370, %v52
    %v376 = vsel %vm62, %v365, 0
    %v379 = vsel %vm62, %v370, 0
    %381 = vmatprep.subr.mxu0 0.0
    %382 = vmatpush1.msra.mxu0 %v34
    %383 = vmatprep.subr.mxu0 0.0
    %384 = vmatpush1.msra.mxu0 %v35
    %385 = vmatprep.subr.mxu0 0.0
    %386 = vmatpush1.msra.mxu0 %v36
    %387 = vmatprep.subr.mxu0 0.0
    %388 = vmatpush1.msra.mxu0 %v37
    %389 = vmatprep.subr.mxu0 0.0
    %390 = vmatpush1.msra.mxu0 0.0
    %391 = vmatprep.subr.mxu0 0.0
    %392 = vmatpush1.msra.mxu0 0.0
    %393 = vmatprep.subr.mxu0 0.0
    %394 = vmatpush1.msra.mxu0 0.0
    %395 = vmatprep.subr.mxu0 0.0
    %396 = vmatpush1.msra.mxu0 0.0
    %397 = vmatprep.subr.mxu0 0.0
    %398 = vmatpush1.msra.mxu0 0.0
    %399 = vmatprep.subr.mxu0 0.0
    %400 = vmatpush1.msra.mxu0 0.0
    %401 = vmatprep.subr.mxu0 0.0
    %402 = vmatpush1.msra.mxu0 0.0
    %403 = vmatprep.subr.mxu0 0.0
    %404 = vmatpush1.msra.mxu0 0.0
    %405 = vmatprep.subr.mxu0 0.0
    %406 = vmatpush1.msra.mxu0 0.0
    %407 = vmatprep.subr.mxu0 0.0
    %408 = vmatpush1.msra.mxu0 0.0
    %409 = vmatprep.subr.mxu0 0.0
    %410 = vmatpush1.msra.mxu0 0.0
    %411 = vmatprep.subr.mxu0 0.0
    %412 = vmatpush1.msra.mxu0 0.0
    %413 = vmatprep.subr.mxu0 0.0
    %414 = vmatpush1.msra.mxu0 0.0
    %415 = vmatprep.subr.mxu0 0.0
    %416 = vmatpush1.msra.mxu0 0.0
    %417 = vmatprep.subr.mxu0 0.0
    %418 = vmatpush1.msra.mxu0 0.0
    %419 = vmatprep.subr.mxu0 0.0
    %420 = vmatpush1.msra.mxu0 0.0
    %421 = vmatprep.subr.mxu0 0.0
    %422 = vmatpush1.msra.mxu0 0.0
    %423 = vmatprep.subr.mxu0 0.0
    %424 = vmatpush1.msra.mxu0 0.0
    %425 = vmatprep.subr.mxu0 0.0
    %426 = vmatpush1.msra.mxu0 0.0
    %427 = vmatprep.subr.mxu0 0.0
    %428 = vmatpush1.msra.mxu0 0.0
    %429 = vmatprep.subr.mxu0 0.0
    %430 = vmatpush1.msra.mxu0 0.0
    %431 = vmatprep.subr.mxu0 0.0
    %432 = vmatpush1.msra.mxu0 0.0
    %433 = vmatprep.subr.mxu0 0.0
    %434 = vmatpush1.msra.mxu0 0.0
    %435 = vmatprep.subr.mxu0 0.0
    %436 = vmatpush1.msra.mxu0 0.0
    %437 = vmatprep.subr.mxu0 0.0
    %438 = vmatpush1.msra.mxu0 0.0
    %439 = vmatprep.subr.mxu0 0.0
    %440 = vmatpush1.msra.mxu0 0.0
    %441 = vmatprep.subr.mxu0 0.0
    %442 = vmatpush1.msra.mxu0 0.0
    %443 = vmatprep.subr.mxu0 0.0
    %444 = vmatpush1.msra.mxu0 0.0
    %445 = vmatprep.mubr.f32.mxu0 0.0
    %446 = vmatmul.mubr.f32.gmra.mrb[0].mxu0 %v376
    %v447 = vpop.f32.mrb[0].mxu0
    %v448 = vadd.f32 0.0, %v447
    %v449 = vpop.f32.mrb[0].mxu0
    %450 = vmatprep.mubr.f32.mxu0 0.0
    %451 = vmatmul.mubr.f32.gmra.mrb[0].mxu0 %v379
    %v452 = vpop.f32.mrb[0].mxu0
    %v453 = vadd.f32 0.0, %v452
    %v454 = vpop.f32.mrb[0].mxu0
    %455 = vdwg.mxu0
    %v456 = vmul.f32 %v448, %v53
    %v457 = vmul.f32 %v453, %v54
    %v458 = vadd.f32 %v373, %v456
    %v459 = vadd.f32 %v374, %v457
    %vm460 = vcmask 64512
    %v462 = vsel %vm460, %v458, 0
    %v465 = vsel %vm460, %v272, 0
    %467 = vmatprep.subr.mxu0 0.0
    %468 = vmatpush1.xpose.msra.mxu0 %v465
    %469 = vmatprep.subr.mxu0 0.0
    %470 = vmatpush1.xpose.msra.mxu0 0.0
    %471 = vmatprep.subr.mxu0 0.0
    %472 = vmatpush1.xpose.msra.mxu0 0.0
    %473 = vmatprep.subr.mxu0 0.0
    %474 = vmatpush1.xpose.msra.mxu0 0.0
    %475 = vmatprep.subr.mxu0 0.0
    %476 = vmatpush1.xpose.msra.mxu0 0.0
    %477 = vmatprep.subr.mxu0 0.0
    %478 = vmatpush1.xpose.msra.mxu0 0.0
    %479 = vmatprep.subr.mxu0 0.0
    %480 = vmatpush1.xpose.msra.mxu0 0.0
    %481 = vmatprep.subr.mxu0 0.0
    %482 = vmatpush1.xpose.msra.mxu0 0.0
    %483 = vmatprep.subr.mxu0 0.0
    %484 = vmatpush1.xpose.msra.mxu0 0.0
    %485 = vmatprep.subr.mxu0 0.0
    %486 = vmatpush1.xpose.msra.mxu0 0.0
    %487 = vmatprep.subr.mxu0 0.0
    %488 = vmatpush1.xpose.msra.mxu0 0.0
    %489 = vmatprep.subr.mxu0 0.0
    %490 = vmatpush1.xpose.msra.mxu0 0.0
    %491 = vmatprep.subr.mxu0 0.0
    %492 = vmatpush1.xpose.msra.mxu0 0.0
    %493 = vmatprep.subr.mxu0 0.0
    %494 = vmatpush1.xpose.msra.mxu0 0.0
    %495 = vmatprep.subr.mxu0 0.0
    %496 = vmatpush1.xpose.msra.mxu0 0.0
    %497 = vmatprep.subr.mxu0 0.0
    %498 = vmatpush1.xpose.msra.mxu0 0.0
    %499 = vmatprep.subr.mxu0 0.0
    %500 = vmatpush1.xpose.msra.mxu0 0.0
    %501 = vmatprep.subr.mxu0 0.0
    %502 = vmatpush1.xpose.msra.mxu0 0.0
    %503 = vmatprep.subr.mxu0 0.0
    %504 = vmatpush1.xpose.msra.mxu0 0.0
    %505 = vmatprep.subr.mxu0 0.0
    %506 = vmatpush1.xpose.msra.mxu0 0.0
    %507 = vmatprep.subr.mxu0 0.0
    %508 = vmatpush1.xpose.msra.mxu0 0.0
    %509 = vmatprep.subr.mxu0 0.0
    %510 = vmatpush1.xpose.msra.mxu0 0.0
    %511 = vmatprep.subr.mxu0 0.0
    %512 = vmatpush1.xpose.msra.mxu0 0.0
    %513 = vmatprep.subr.mxu0 0.0
    %514 = vmatpush1.xpose.msra.mxu0 0.0
    %515 = vmatprep.subr.mxu0 0.0
    %516 = vmatpush1.xpose.msra.mxu0 0.0
    %517 = vmatprep.subr.mxu0 0.0
    %518 = vmatpush1.xpose.msra.mxu0 0.0
    %519 = vmatprep.subr.mxu0 0.0
    %520 = vmatpush1.xpose.msra.mxu0 0.0
    %521 = vmatprep.subr.mxu0 0.0
    %522 = vmatpush1.xpose.msra.mxu0 0.0
    %523 = vmatprep.subr.mxu0 0.0
    %524 = vmatpush1.xpose.msra.mxu0 0.0
    %525 = vmatprep.subr.mxu0 0.0
    %526 = vmatpush1.xpose.msra.mxu0 0.0
    %527 = vmatprep.subr.mxu0 0.0
    %528 = vmatpush1.xpose.msra.mxu0 0.0
    %529 = vmatprep.subr.mxu0 0.0
    %530 = vmatpush1.xpose.msra.mxu0 0.0
    %531 = vmatprep.mubr.f32.mxu0 0.0
    %532 = vmatmul.mubr.f32.gmra.mrb[0].mxu0 %v462
    %v533 = vpop.f32.mrb[0].mxu0
    %v534 = vadd.f32 %v59, %v533
    %v535 = vpop.f32.mrb[0].mxu0
    %536 = vdwg.mxu0
    %v537 = vsel %vm460, %v534, -inf
    %538 = vmax.xlane.f32.xlu0 %v537
    %v539 = vpop.xlane.xlu0 %538
    %v540 = vsub.f32 %v534, %v539
    %v541 = vmul.f32 %v540, 1.442695
    %v542 = vpow.pop %v541
    %v543 = vsel %vm460, %v542, 0.0
    %544 = vadd.xlane.f32.xlu0 %v543
    %v545 = vpop.xlane.xlu0 %544
    %v546 = vrcp.pop %v545
    %v547 = vmul.f32 %v542, %v546
    %548 = vrot.lane.b32.xlu0 %v272, 120
    %v549 = vpop.permute.xlu0 %548
    %v552 = vsel %vm460, %v547, 0
    %554 = vmatprep.subr.mxu0 0.0
    %555 = vmatpush1.msra.mxu0 %v549
    %556 = vmatprep.subr.mxu0 0.0
    %557 = vmatpush1.msra.mxu0 0.0
    %558 = vmatprep.subr.mxu0 0.0
    %559 = vmatpush1.msra.mxu0 0.0
    %560 = vmatprep.subr.mxu0 0.0
    %561 = vmatpush1.msra.mxu0 0.0
    %562 = vmatprep.subr.mxu0 0.0
    %563 = vmatpush1.msra.mxu0 0.0
    %564 = vmatprep.subr.mxu0 0.0
    %565 = vmatpush1.msra.mxu0 0.0
    %566 = vmatprep.subr.mxu0 0.0
    %567 = vmatpush1.msra.mxu0 0.0
    %568 = vmatprep.subr.mxu0 0.0
    %569 = vmatpush1.msra.mxu0 0.0
    %570 = vmatprep.subr.mxu0 0.0
    %571 = vmatpush1.msra.mxu0 0.0
    %572 = vmatprep.subr.mxu0 0.0
    %573 = vmatpush1.msra.mxu0 0.0
    %574 = vmatprep.subr.mxu0 0.0
    %575 = vmatpush1.msra.mxu0 0.0
    %576 = vmatprep.subr.mxu0 0.0
    %577 = vmatpush1.msra.mxu0 0.0
    %578 = vmatprep.subr.mxu0 0.0
    %579 = vmatpush1.msra.mxu0 0.0
    %580 = vmatprep.subr.mxu0 0.0
    %581 = vmatpush1.msra.mxu0 0.0
    %582 = vmatprep.subr.mxu0 0.0
    %583 = vmatpush1.msra.mxu0 0.0
    %584 = vmatprep.subr.mxu0 0.0
    %585 = vmatpush1.msra.mxu0 0.0
    %586 = vmatprep.subr.mxu0 0.0
    %587 = vmatpush1.msra.mxu0 0.0
    %588 = vmatprep.subr.mxu0 0.0
    %589 = vmatpush1.msra.mxu0 0.0
    %590 = vmatprep.subr.mxu0 0.0
    %591 = vmatpush1.msra.mxu0 0.0
    %592 = vmatprep.subr.mxu0 0.0
    %593 = vmatpush1.msra.mxu0 0.0
    %594 = vmatprep.subr.mxu0 0.0
    %595 = vmatpush1.msra.mxu0 0.0
    %596 = vmatprep.subr.mxu0 0.0
    %597 = vmatpush1.msra.mxu0 0.0
    %598 = vmatprep.subr.mxu0 0.0
    %599 = vmatpush1.msra.mxu0 0.0
    %600 = vmatprep.subr.mxu0 0.0
    %601 = vmatpush1.msra.mxu0 0.0
    %602 = vmatprep.subr.mxu0 0.0
    %603 = vmatpush1.msra.mxu0 0.0
    %604 = vmatprep.subr.mxu0 0.0
    %605 = vmatpush1.msra.mxu0 0.0
    %606 = vmatprep.subr.mxu0 0.0
    %607 = vmatpush1.msra.mxu0 0.0
    %608 = vmatprep.subr.mxu0 0.0
    %609 = vmatpush1.msra.mxu0 0.0
    %610 = vmatprep.subr.mxu0 0.0
    %611 = vmatpush1.msra.mxu0 0.0
    %612 = vmatprep.subr.mxu0 0.0
    %613 = vmatpush1.msra.mxu0 0.0
    %614 = vmatprep.subr.mxu0 0.0
    %615 = vmatpush1.msra.mxu0 0.0
    %616 = vmatprep.subr.mxu0 0.0
    %617 = vmatpush1.msra.mxu0 0.0
    %618 = vmatprep.mubr.f32.mxu0 0.0
    %619 = vmatmul.mubr.f32.gmra.mrb[0].mxu0 %v552
    %v620 = vpop.f32.mrb[0].mxu0
    %v621 = vadd.f32 0.0, %v620
    %v622 = vpop.f32.mrb[0].mxu0
    %623 = vdwg.mxu0
    %624 = vst.msk [vmem:[#allocation2] sm:$0xff] %vm460, %v621
    %625 = vrot.lane.b32.xlu0 %v458, 120
    %v626 = vpop.permute.xlu0 %625
    %v627 = vsel %vm460, %v626, 0
    %629 = vmatprep.subr.mxu0 0.0
    %630 = vmatpush1.xpose.msra.mxu0 %v465
    %631 = vmatprep.subr.mxu0 0.0
    %632 = vmatpush1.xpose.msra.mxu0 0.0
    %633 = vmatprep.subr.mxu0 0.0
    %634 = vmatpush1.xpose.msra.mxu0 0.0
    %635 = vmatprep.subr.mxu0 0.0
    %636 = vmatpush1.xpose.msra.mxu0 0.0
    %637 = vmatprep.subr.mxu0 0.0
    %638 = vmatpush1.xpose.msra.mxu0 0.0
    %639 = vmatprep.subr.mxu0 0.0
    %640 = vmatpush1.xpose.msra.mxu0 0.0
    %641 = vmatprep.subr.mxu0 0.0
    %642 = vmatpush1.xpose.msra.mxu0 0.0
    %643 = vmatprep.subr.mxu0 0.0
    %644 = vmatpush1.xpose.msra.mxu0 0.0
    %645 = vmatprep.subr.mxu0 0.0
    %646 = vmatpush1.xpose.msra.mxu0 0.0
    %647 = vmatprep.subr.mxu0 0.0
    %648 = vmatpush1.xpose.msra.mxu0 0.0
    %649 = vmatprep.subr.mxu0 0.0
    %650 = vmatpush1.xpose.msra.mxu0 0.0
    %651 = vmatprep.subr.mxu0 0.0
    %652 = vmatpush1.xpose.msra.mxu0 0.0
    %653 = vmatprep.subr.mxu0 0.0
    %654 = vmatpush1.xpose.msra.mxu0 0.0
    %655 = vmatprep.subr.mxu0 0.0
    %656 = vmatpush1.xpose.msra.mxu0 0.0
    %657 = vmatprep.subr.mxu0 0.0
    %658 = vmatpush1.xpose.msra.mxu0 0.0
    %659 = vmatprep.subr.mxu0 0.0
    %660 = vmatpush1.xpose.msra.mxu0 0.0
    %661 = vmatprep.subr.mxu0 0.0
    %662 = vmatpush1.xpose.msra.mxu0 0.0
    %663 = vmatprep.subr.mxu0 0.0
    %664 = vmatpush1.xpose.msra.mxu0 0.0
    %665 = vmatprep.subr.mxu0 0.0
    %666 = vmatpush1.xpose.msra.mxu0 0.0
    %667 = vmatprep.subr.mxu0 0.0
    %668 = vmatpush1.xpose.msra.mxu0 0.0
    %669 = vmatprep.subr.mxu0 0.0
    %670 = vmatpush1.xpose.msra.mxu0 0.0
    %671 = vmatprep.subr.mxu0 0.0
    %672 = vmatpush1.xpose.msra.mxu0 0.0
    %673 = vmatprep.subr.mxu0 0.0
    %674 = vmatpush1.xpose.msra.mxu0 0.0
    %675 = vmatprep.subr.mxu0 0.0
    %676 = vmatpush1.xpose.msra.mxu0 0.0
    %677 = vmatprep.subr.mxu0 0.0
    %678 = vmatpush1.xpose.msra.mxu0 0.0
    %679 = vmatprep.subr.mxu0 0.0
    %680 = vmatpush1.xpose.msra.mxu0 0.0
    %681 = vmatprep.subr.mxu0 0.0
    %682 = vmatpush1.xpose.msra.mxu0 0.0
    %683 = vmatprep.subr.mxu0 0.0
    %684 = vmatpush1.xpose.msra.mxu0 0.0
    %685 = vmatprep.subr.mxu0 0.0
    %686 = vmatpush1.xpose.msra.mxu0 0.0
    %687 = vmatprep.subr.mxu0 0.0
    %688 = vmatpush1.xpose.msra.mxu0 0.0
    %689 = vmatprep.subr.mxu0 0.0
    %690 = vmatpush1.xpose.msra.mxu0 0.0
    %691 = vmatprep.subr.mxu0 0.0
    %692 = vmatpush1.xpose.msra.mxu0 0.0
    %693 = vmatprep.mubr.f32.mxu0 0.0
    %694 = vmatmul.mubr.f32.gmra.mrb[0].mxu0 %v627
    %v695 = vpop.f32.mrb[0].mxu0
    %v696 = vadd.f32 %v59, %v695
    %v697 = vpop.f32.mrb[0].mxu0
    %698 = vdwg.mxu0
    %v699 = vsel %vm460, %v696, -inf
    %700 = vmax.xlane.f32.xlu0 %v699
    %v701 = vpop.xlane.xlu0 %700
    %v702 = vsub.f32 %v696, %v701
    %v703 = vmul.f32 %v702, 1.442695
    %v704 = vpow.pop %v703
    %v705 = vsel %vm460, %v704, 0.0
    %706 = vadd.xlane.f32.xlu0 %v705
    %v707 = vpop.xlane.xlu0 %706
    %v708 = vrcp.pop %v707
    %v709 = vmul.f32 %v704, %v708
    %v711 = vsel %vm460, %v709, 0
    %713 = vmatprep.subr.mxu0 0.0
    %714 = vmatpush1.msra.mxu0 %v549
    %715 = vmatprep.subr.mxu0 0.0
    %716 = vmatpush1.msra.mxu0 0.0
    %717 = vmatprep.subr.mxu0 0.0
    %718 = vmatpush1.msra.mxu0 0.0
    %719 = vmatprep.subr.mxu0 0.0
    %720 = vmatpush1.msra.mxu0 0.0
    %721 = vmatprep.subr.mxu0 0.0
    %722 = vmatpush1.msra.mxu0 0.0
    %723 = vmatprep.subr.mxu0 0.0
    %724 = vmatpush1.msra.mxu0 0.0
    %725 = vmatprep.subr.mxu0 0.0
    %726 = vmatpush1.msra.mxu0 0.0
    %727 = vmatprep.subr.mxu0 0.0
    %728 = vmatpush1.msra.mxu0 0.0
    %729 = vmatprep.subr.mxu0 0.0
    %730 = vmatpush1.msra.mxu0 0.0
    %731 = vmatprep.subr.mxu0 0.0
    %732 = vmatpush1.msra.mxu0 0.0
    %733 = vmatprep.subr.mxu0 0.0
    %734 = vmatpush1.msra.mxu0 0.0
    %735 = vmatprep.subr.mxu0 0.0
    %736 = vmatpush1.msra.mxu0 0.0
    %737 = vmatprep.subr.mxu0 0.0
    %738 = vmatpush1.msra.mxu0 0.0
    %739 = vmatprep.subr.mxu0 0.0
    %740 = vmatpush1.msra.mxu0 0.0
    %741 = vmatprep.subr.mxu0 0.0
    %742 = vmatpush1.msra.mxu0 0.0
    %743 = vmatprep.subr.mxu0 0.0
    %744 = vmatpush1.msra.mxu0 0.0
    %745 = vmatprep.subr.mxu0 0.0
    %746 = vmatpush1.msra.mxu0 0.0
    %747 = vmatprep.subr.mxu0 0.0
    %748 = vmatpush1.msra.mxu0 0.0
    %749 = vmatprep.subr.mxu0 0.0
    %750 = vmatpush1.msra.mxu0 0.0
    %751 = vmatprep.subr.mxu0 0.0
    %752 = vmatpush1.msra.mxu0 0.0
    %753 = vmatprep.subr.mxu0 0.0
    %754 = vmatpush1.msra.mxu0 0.0
    %755 = vmatprep.subr.mxu0 0.0
    %756 = vmatpush1.msra.mxu0 0.0
    %757 = vmatprep.subr.mxu0 0.0
    %758 = vmatpush1.msra.mxu0 0.0
    %759 = vmatprep.subr.mxu0 0.0
    %760 = vmatpush1.msra.mxu0 0.0
    %761 = vmatprep.subr.mxu0 0.0
    %762 = vmatpush1.msra.mxu0 0.0
    %763 = vmatprep.subr.mxu0 0.0
    %764 = vmatpush1.msra.mxu0 0.0
    %765 = vmatprep.subr.mxu0 0.0
    %766 = vmatpush1.msra.mxu0 0.0
    %767 = vmatprep.subr.mxu0 0.0
    %768 = vmatpush1.msra.mxu0 0.0
    %769 = vmatprep.subr.mxu0 0.0
    %770 = vmatpush1.msra.mxu0 0.0
    %771 = vmatprep.subr.mxu0 0.0
    %772 = vmatpush1.msra.mxu0 0.0
    %773 = vmatprep.subr.mxu0 0.0
    %774 = vmatpush1.msra.mxu0 0.0
    %775 = vmatprep.subr.mxu0 0.0
    %776 = vmatpush1.msra.mxu0 0.0
    %777 = vmatprep.mubr.f32.mxu0 0.0
    %778 = vmatmul.mubr.f32.gmra.mrb[0].mxu0 %v711
    %v779 = vpop.f32.mrb[0].mxu0
    %v780 = vadd.f32 0.0, %v779
    %v781 = vpop.f32.mrb[0].mxu0
    %782 = vdwg.mxu0
    %784 = vrot.lane.b32.xlu0 %v780, 8
    %v785 = vpop.permute.xlu0 %784
    %vm787 = vcmask 130112
    %788 = vst.msk [vmem:[#allocation2] sm:$0xff] %vm787, %v785
    %789 = vrot.lane.b32.xlu0 %v458, 112
    %v790 = vpop.permute.xlu0 %789
    %791 = vrot.lane.b32.xlu0 %v272, 112
    %v792 = vpop.permute.xlu0 %791
    %v793 = vsel %vm460, %v790, 0
    %v795 = vsel %vm460, %v792, 0
    %797 = vmatprep.subr.mxu0 0.0
    %798 = vmatpush1.xpose.msra.mxu0 %v795
    %799 = vmatprep.subr.mxu0 0.0
    %800 = vmatpush1.xpose.msra.mxu0 0.0
    %801 = vmatprep.subr.mxu0 0.0
    %802 = vmatpush1.xpose.msra.mxu0 0.0
    %803 = vmatprep.subr.mxu0 0.0
    %804 = vmatpush1.xpose.msra.mxu0 0.0
    %805 = vmatprep.subr.mxu0 0.0
    %806 = vmatpush1.xpose.msra.mxu0 0.0
    %807 = vmatprep.subr.mxu0 0.0
    %808 = vmatpush1.xpose.msra.mxu0 0.0
    %809 = vmatprep.subr.mxu0 0.0
    %810 = vmatpush1.xpose.msra.mxu0 0.0
    %811 = vmatprep.subr.mxu0 0.0
    %812 = vmatpush1.xpose.msra.mxu0 0.0
    %813 = vmatprep.subr.mxu0 0.0
    %814 = vmatpush1.xpose.msra.mxu0 0.0
    %815 = vmatprep.subr.mxu0 0.0
    %816 = vmatpush1.xpose.msra.mxu0 0.0
    %817 = vmatprep.subr.mxu0 0.0
    %818 = vmatpush1.xpose.msra.mxu0 0.0
    %819 = vmatprep.subr.mxu0 0.0
    %820 = vmatpush1.xpose.msra.mxu0 0.0
    %821 = vmatprep.subr.mxu0 0.0
    %822 = vmatpush1.xpose.msra.mxu0 0.0
    %823 = vmatprep.subr.mxu0 0.0
    %824 = vmatpush1.xpose.msra.mxu0 0.0
    %825 = vmatprep.subr.mxu0 0.0
    %826 = vmatpush1.xpose.msra.mxu0 0.0
    %827 = vmatprep.subr.mxu0 0.0
    %828 = vmatpush1.xpose.msra.mxu0 0.0
    %829 = vmatprep.subr.mxu0 0.0
    %830 = vmatpush1.xpose.msra.mxu0 0.0
    %831 = vmatprep.subr.mxu0 0.0
    %832 = vmatpush1.xpose.msra.mxu0 0.0
    %833 = vmatprep.subr.mxu0 0.0
    %834 = vmatpush1.xpose.msra.mxu0 0.0
    %835 = vmatprep.subr.mxu0 0.0
    %836 = vmatpush1.xpose.msra.mxu0 0.0
    %837 = vmatprep.subr.mxu0 0.0
    %838 = vmatpush1.xpose.msra.mxu0 0.0
    %839 = vmatprep.subr.mxu0 0.0
    %840 = vmatpush1.xpose.msra.mxu0 0.0
    %841 = vmatprep.subr.mxu0 0.0
    %842 = vmatpush1.xpose.msra.mxu0 0.0
    %843 = vmatprep.subr.mxu0 0.0
    %844 = vmatpush1.xpose.msra.mxu0 0.0
    %845 = vmatprep.subr.mxu0 0.0
    %846 = vmatpush1.xpose.msra.mxu0 0.0
    %847 = vmatprep.subr.mxu0 0.0
    %848 = vmatpush1.xpose.msra.mxu0 0.0
    %849 = vmatprep.subr.mxu0 0.0
    %850 = vmatpush1.xpose.msra.mxu0 0.0
    %851 = vmatprep.subr.mxu0 0.0
    %852 = vmatpush1.xpose.msra.mxu0 0.0
    %853 = vmatprep.subr.mxu0 0.0
    %854 = vmatpush1.xpose.msra.mxu0 0.0
    %855 = vmatprep.subr.mxu0 0.0
    %856 = vmatpush1.xpose.msra.mxu0 0.0
    %857 = vmatprep.subr.mxu0 0.0
    %858 = vmatpush1.xpose.msra.mxu0 0.0
    %859 = vmatprep.subr.mxu0 0.0
    %860 = vmatpush1.xpose.msra.mxu0 0.0
    %861 = vmatprep.mubr.f32.mxu0 0.0
    %862 = vmatmul.mubr.f32.gmra.mrb[0].mxu0 %v793
    %v863 = vpop.f32.mrb[0].mxu0
    %v864 = vadd.f32 %v59, %v863
    %v865 = vpop.f32.mrb[0].mxu0
    %866 = vdwg.mxu0
    %v867 = vsel %vm460, %v864, -inf
    %868 = vmax.xlane.f32.xlu0 %v867
    %v869 = vpop.xlane.xlu0 %868
    %v870 = vsub.f32 %v864, %v869
    %v871 = vmul.f32 %v870, 1.442695
    %v872 = vpow.pop %v871
    %v873 = vsel %vm460, %v872, 0.0
    %874 = vadd.xlane.f32.xlu0 %v873
    %v875 = vpop.xlane.xlu0 %874
    %v876 = vrcp.pop %v875
    %v877 = vmul.f32 %v872, %v876
    %878 = vrot.lane.b32.xlu0 %v272, 104
    %v879 = vpop.permute.xlu0 %878
    %v882 = vsel %vm460, %v877, 0
    %884 = vmatprep.subr.mxu0 0.0
    %885 = vmatpush1.msra.mxu0 %v879
    %886 = vmatprep.subr.mxu0 0.0
    %887 = vmatpush1.msra.mxu0 0.0
    %888 = vmatprep.subr.mxu0 0.0
    %889 = vmatpush1.msra.mxu0 0.0
    %890 = vmatprep.subr.mxu0 0.0
    %891 = vmatpush1.msra.mxu0 0.0
    %892 = vmatprep.subr.mxu0 0.0
    %893 = vmatpush1.msra.mxu0 0.0
    %894 = vmatprep.subr.mxu0 0.0
    %895 = vmatpush1.msra.mxu0 0.0
    %896 = vmatprep.subr.mxu0 0.0
    %897 = vmatpush1.msra.mxu0 0.0
    %898 = vmatprep.subr.mxu0 0.0
    %899 = vmatpush1.msra.mxu0 0.0
    %900 = vmatprep.subr.mxu0 0.0
    %901 = vmatpush1.msra.mxu0 0.0
    %902 = vmatprep.subr.mxu0 0.0
    %903 = vmatpush1.msra.mxu0 0.0
    %904 = vmatprep.subr.mxu0 0.0
    %905 = vmatpush1.msra.mxu0 0.0
    %906 = vmatprep.subr.mxu0 0.0
    %907 = vmatpush1.msra.mxu0 0.0
    %908 = vmatprep.subr.mxu0 0.0
    %909 = vmatpush1.msra.mxu0 0.0
    %910 = vmatprep.subr.mxu0 0.0
    %911 = vmatpush1.msra.mxu0 0.0
    %912 = vmatprep.subr.mxu0 0.0
    %913 = vmatpush1.msra.mxu0 0.0
    %914 = vmatprep.subr.mxu0 0.0
    %915 = vmatpush1.msra.mxu0 0.0
    %916 = vmatprep.subr.mxu0 0.0
    %917 = vmatpush1.msra.mxu0 0.0
    %918 = vmatprep.subr.mxu0 0.0
    %919 = vmatpush1.msra.mxu0 0.0
    %920 = vmatprep.subr.mxu0 0.0
    %921 = vmatpush1.msra.mxu0 0.0
    %922 = vmatprep.subr.mxu0 0.0
    %923 = vmatpush1.msra.mxu0 0.0
    %924 = vmatprep.subr.mxu0 0.0
    %925 = vmatpush1.msra.mxu0 0.0
    %926 = vmatprep.subr.mxu0 0.0
    %927 = vmatpush1.msra.mxu0 0.0
    %928 = vmatprep.subr.mxu0 0.0
    %929 = vmatpush1.msra.mxu0 0.0
    %930 = vmatprep.subr.mxu0 0.0
    %931 = vmatpush1.msra.mxu0 0.0
    %932 = vmatprep.subr.mxu0 0.0
    %933 = vmatpush1.msra.mxu0 0.0
    %934 = vmatprep.subr.mxu0 0.0
    %935 = vmatpush1.msra.mxu0 0.0
    %936 = vmatprep.subr.mxu0 0.0
    %937 = vmatpush1.msra.mxu0 0.0
    %938 = vmatprep.subr.mxu0 0.0
    %939 = vmatpush1.msra.mxu0 0.0
    %940 = vmatprep.subr.mxu0 0.0
    %941 = vmatpush1.msra.mxu0 0.0
    %942 = vmatprep.subr.mxu0 0.0
    %943 = vmatpush1.msra.mxu0 0.0
    %944 = vmatprep.subr.mxu0 0.0
    %945 = vmatpush1.msra.mxu0 0.0
    %946 = vmatprep.subr.mxu0 0.0
    %947 = vmatpush1.msra.mxu0 0.0
    %948 = vmatprep.mubr.f32.mxu0 0.0
    %949 = vmatmul.mubr.f32.gmra.mrb[0].mxu0 %v882
    %v950 = vpop.f32.mrb[0].mxu0
    %v951 = vadd.f32 0.0, %v950
    %v952 = vpop.f32.mrb[0].mxu0
    %953 = vdwg.mxu0
    %955 = vrot.lane.b32.xlu0 %v951, 16
    %v956 = vpop.permute.xlu0 %955
    %vm958 = vcmask 195712
    %959 = vst.msk [vmem:[#allocation2] sm:$0xff] %vm958, %v956
    %960 = vrot.lane.b32.xlu0 %v458, 104
    %v961 = vpop.permute.xlu0 %960
    %v962 = vsel %vm460, %v961, 0
    %964 = vmatprep.subr.mxu0 0.0
    %965 = vmatpush1.xpose.msra.mxu0 %v795
    %966 = vmatprep.subr.mxu0 0.0
    %967 = vmatpush1.xpose.msra.mxu0 0.0
    %968 = vmatprep.subr.mxu0 0.0
    %969 = vmatpush1.xpose.msra.mxu0 0.0
    %970 = vmatprep.subr.mxu0 0.0
    %971 = vmatpush1.xpose.msra.mxu0 0.0
    %972 = vmatprep.subr.mxu0 0.0
    %973 = vmatpush1.xpose.msra.mxu0 0.0
    %974 = vmatprep.subr.mxu0 0.0
    %975 = vmatpush1.xpose.msra.mxu0 0.0
    %976 = vmatprep.subr.mxu0 0.0
    %977 = vmatpush1.xpose.msra.mxu0 0.0
    %978 = vmatprep.subr.mxu0 0.0
    %979 = vmatpush1.xpose.msra.mxu0 0.0
    %980 = vmatprep.subr.mxu0 0.0
    %981 = vmatpush1.xpose.msra.mxu0 0.0
    %982 = vmatprep.subr.mxu0 0.0
    %983 = vmatpush1.xpose.msra.mxu0 0.0
    %984 = vmatprep.subr.mxu0 0.0
    %985 = vmatpush1.xpose.msra.mxu0 0.0
    %986 = vmatprep.subr.mxu0 0.0
    %987 = vmatpush1.xpose.msra.mxu0 0.0
    %988 = vmatprep.subr.mxu0 0.0
    %989 = vmatpush1.xpose.msra.mxu0 0.0
    %990 = vmatprep.subr.mxu0 0.0
    %991 = vmatpush1.xpose.msra.mxu0 0.0
    %992 = vmatprep.subr.mxu0 0.0
    %993 = vmatpush1.xpose.msra.mxu0 0.0
    %994 = vmatprep.subr.mxu0 0.0
    %995 = vmatpush1.xpose.msra.mxu0 0.0
    %996 = vmatprep.subr.mxu0 0.0
    %997 = vmatpush1.xpose.msra.mxu0 0.0
    %998 = vmatprep.subr.mxu0 0.0
    %999 = vmatpush1.xpose.msra.mxu0 0.0
    %1000 = vmatprep.subr.mxu0 0.0
    %1001 = vmatpush1.xpose.msra.mxu0 0.0
    %1002 = vmatprep.subr.mxu0 0.0
    %1003 = vmatpush1.xpose.msra.mxu0 0.0
    %1004 = vmatprep.subr.mxu0 0.0
    %1005 = vmatpush1.xpose.msra.mxu0 0.0
    %1006 = vmatprep.subr.mxu0 0.0
    %1007 = vmatpush1.xpose.msra.mxu0 0.0
    %1008 = vmatprep.subr.mxu0 0.0
    %1009 = vmatpush1.xpose.msra.mxu0 0.0
    %1010 = vmatprep.subr.mxu0 0.0
    %1011 = vmatpush1.xpose.msra.mxu0 0.0
    %1012 = vmatprep.subr.mxu0 0.0
    %1013 = vmatpush1.xpose.msra.mxu0 0.0
    %1014 = vmatprep.subr.mxu0 0.0
    %1015 = vmatpush1.xpose.msra.mxu0 0.0
    %1016 = vmatprep.subr.mxu0 0.0
    %1017 = vmatpush1.xpose.msra.mxu0 0.0
    %1018 = vmatprep.subr.mxu0 0.0
    %1019 = vmatpush1.xpose.msra.mxu0 0.0
    %1020 = vmatprep.subr.mxu0 0.0
    %1021 = vmatpush1.xpose.msra.mxu0 0.0
    %1022 = vmatprep.subr.mxu0 0.0
    %1023 = vmatpush1.xpose.msra.mxu0 0.0
    %1024 = vmatprep.subr.mxu0 0.0
    %1025 = vmatpush1.xpose.msra.mxu0 0.0
    %1026 = vmatprep.subr.mxu0 0.0
    %1027 = vmatpush1.xpose.msra.mxu0 0.0
    %1028 = vmatprep.mubr.f32.mxu0 0.0
    %1029 = vmatmul.mubr.f32.gmra.mrb[0].mxu0 %v962
    %v1030 = vpop.f32.mrb[0].mxu0
    %v1031 = vadd.f32 %v59, %v1030
    %v1032 = vpop.f32.mrb[0].mxu0
    %1033 = vdwg.mxu0
    %v1034 = vsel %vm460, %v1031, -inf
    %1035 = vmax.xlane.f32.xlu0 %v1034
    %v1036 = vpop.xlane.xlu0 %1035
    %v1037 = vsub.f32 %v1031, %v1036
    %v1038 = vmul.f32 %v1037, 1.442695
    %v1039 = vpow.pop %v1038
    %v1040 = vsel %vm460, %v1039, 0.0
    %1041 = vadd.xlane.f32.xlu0 %v1040
    %v1042 = vpop.xlane.xlu0 %1041
    %v1043 = vrcp.pop %v1042
    %v1044 = vmul.f32 %v1039, %v1043
    %v1046 = vsel %vm460, %v1044, 0
    %1048 = vmatprep.subr.mxu0 0.0
    %1049 = vmatpush1.msra.mxu0 %v879
    %1050 = vmatprep.subr.mxu0 0.0
    %1051 = vmatpush1.msra.mxu0 0.0
    %1052 = vmatprep.subr.mxu0 0.0
    %1053 = vmatpush1.msra.mxu0 0.0
    %1054 = vmatprep.subr.mxu0 0.0
    %1055 = vmatpush1.msra.mxu0 0.0
    %1056 = vmatprep.subr.mxu0 0.0
    %1057 = vmatpush1.msra.mxu0 0.0
    %1058 = vmatprep.subr.mxu0 0.0
    %1059 = vmatpush1.msra.mxu0 0.0
    %1060 = vmatprep.subr.mxu0 0.0
    %1061 = vmatpush1.msra.mxu0 0.0
    %1062 = vmatprep.subr.mxu0 0.0
    %1063 = vmatpush1.msra.mxu0 0.0
    %1064 = vmatprep.subr.mxu0 0.0
    %1065 = vmatpush1.msra.mxu0 0.0
    %1066 = vmatprep.subr.mxu0 0.0
    %1067 = vmatpush1.msra.mxu0 0.0
    %1068 = vmatprep.subr.mxu0 0.0
    %1069 = vmatpush1.msra.mxu0 0.0
    %1070 = vmatprep.subr.mxu0 0.0
    %1071 = vmatpush1.msra.mxu0 0.0
    %1072 = vmatprep.subr.mxu0 0.0
    %1073 = vmatpush1.msra.mxu0 0.0
    %1074 = vmatprep.subr.mxu0 0.0
    %1075 = vmatpush1.msra.mxu0 0.0
    %1076 = vmatprep.subr.mxu0 0.0
    %1077 = vmatpush1.msra.mxu0 0.0
    %1078 = vmatprep.subr.mxu0 0.0
    %1079 = vmatpush1.msra.mxu0 0.0
    %1080 = vmatprep.subr.mxu0 0.0
    %1081 = vmatpush1.msra.mxu0 0.0
    %1082 = vmatprep.subr.mxu0 0.0
    %1083 = vmatpush1.msra.mxu0 0.0
    %1084 = vmatprep.subr.mxu0 0.0
    %1085 = vmatpush1.msra.mxu0 0.0
    %1086 = vmatprep.subr.mxu0 0.0
    %1087 = vmatpush1.msra.mxu0 0.0
    %1088 = vmatprep.subr.mxu0 0.0
    %1089 = vmatpush1.msra.mxu0 0.0
    %1090 = vmatprep.subr.mxu0 0.0
    %1091 = vmatpush1.msra.mxu0 0.0
    %1092 = vmatprep.subr.mxu0 0.0
    %1093 = vmatpush1.msra.mxu0 0.0
    %1094 = vmatprep.subr.mxu0 0.0
    %1095 = vmatpush1.msra.mxu0 0.0
    %1096 = vmatprep.subr.mxu0 0.0
    %1097 = vmatpush1.msra.mxu0 0.0
    %1098 = vmatprep.subr.mxu0 0.0
    %1099 = vmatpush1.msra.mxu0 0.0
    %1100 = vmatprep.subr.mxu0 0.0
    %1101 = vmatpush1.msra.mxu0 0.0
    %1102 = vmatprep.subr.mxu0 0.0
    %1103 = vmatpush1.msra.mxu0 0.0
    %1104 = vmatprep.subr.mxu0 0.0
    %1105 = vmatpush1.msra.mxu0 0.0
    %1106 = vmatprep.subr.mxu0 0.0
    %1107 = vmatpush1.msra.mxu0 0.0
    %1108 = vmatprep.subr.mxu0 0.0
    %1109 = vmatpush1.msra.mxu0 0.0
    %1110 = vmatprep.subr.mxu0 0.0
    %1111 = vmatpush1.msra.mxu0 0.0
    %1112 = vmatprep.mubr.f32.mxu0 0.0
    %1113 = vmatmul.mubr.f32.gmra.mrb[0].mxu0 %v1046
    %v1114 = vpop.f32.mrb[0].mxu0
    %v1115 = vadd.f32 0.0, %v1114
    %v1116 = vpop.f32.mrb[0].mxu0
    %1117 = vdwg.mxu0
    %1119 = vrot.lane.b32.xlu0 %v1115, 24
    %v1120 = vpop.permute.xlu0 %1119
    %vm1122 = vcmask 261312
    %1123 = vst.msk [vmem:[#allocation2] sm:$0xff] %vm1122, %v1120
    %v1125 = vsel %vm460, %v459, 0
    %v1128 = vsel %vm460, %v273, 0
    %1130 = vmatprep.subr.mxu0 0.0
    %1131 = vmatpush1.xpose.msra.mxu0 %v1128
    %1132 = vmatprep.subr.mxu0 0.0
    %1133 = vmatpush1.xpose.msra.mxu0 0.0
    %1134 = vmatprep.subr.mxu0 0.0
    %1135 = vmatpush1.xpose.msra.mxu0 0.0
    %1136 = vmatprep.subr.mxu0 0.0
    %1137 = vmatpush1.xpose.msra.mxu0 0.0
    %1138 = vmatprep.subr.mxu0 0.0
    %1139 = vmatpush1.xpose.msra.mxu0 0.0
    %1140 = vmatprep.subr.mxu0 0.0
    %1141 = vmatpush1.xpose.msra.mxu0 0.0
    %1142 = vmatprep.subr.mxu0 0.0
    %1143 = vmatpush1.xpose.msra.mxu0 0.0
    %1144 = vmatprep.subr.mxu0 0.0
    %1145 = vmatpush1.xpose.msra.mxu0 0.0
    %1146 = vmatprep.subr.mxu0 0.0
    %1147 = vmatpush1.xpose.msra.mxu0 0.0
    %1148 = vmatprep.subr.mxu0 0.0
    %1149 = vmatpush1.xpose.msra.mxu0 0.0
    %1150 = vmatprep.subr.mxu0 0.0
    %1151 = vmatpush1.xpose.msra.mxu0 0.0
    %1152 = vmatprep.subr.mxu0 0.0
    %1153 = vmatpush1.xpose.msra.mxu0 0.0
    %1154 = vmatprep.subr.mxu0 0.0
    %1155 = vmatpush1.xpose.msra.mxu0 0.0
    %1156 = vmatprep.subr.mxu0 0.0
    %1157 = vmatpush1.xpose.msra.mxu0 0.0
    %1158 = vmatprep.subr.mxu0 0.0
    %1159 = vmatpush1.xpose.msra.mxu0 0.0
    %1160 = vmatprep.subr.mxu0 0.0
    %1161 = vmatpush1.xpose.msra.mxu0 0.0
    %1162 = vmatprep.subr.mxu0 0.0
    %1163 = vmatpush1.xpose.msra.mxu0 0.0
    %1164 = vmatprep.subr.mxu0 0.0
    %1165 = vmatpush1.xpose.msra.mxu0 0.0
    %1166 = vmatprep.subr.mxu0 0.0
    %1167 = vmatpush1.xpose.msra.mxu0 0.0
    %1168 = vmatprep.subr.mxu0 0.0
    %1169 = vmatpush1.xpose.msra.mxu0 0.0
    %1170 = vmatprep.subr.mxu0 0.0
    %1171 = vmatpush1.xpose.msra.mxu0 0.0
    %1172 = vmatprep.subr.mxu0 0.0
    %1173 = vmatpush1.xpose.msra.mxu0 0.0
    %1174 = vmatprep.subr.mxu0 0.0
    %1175 = vmatpush1.xpose.msra.mxu0 0.0
    %1176 = vmatprep.subr.mxu0 0.0
    %1177 = vmatpush1.xpose.msra.mxu0 0.0
    %1178 = vmatprep.subr.mxu0 0.0
    %1179 = vmatpush1.xpose.msra.mxu0 0.0
    %1180 = vmatprep.subr.mxu0 0.0
    %1181 = vmatpush1.xpose.msra.mxu0 0.0
    %1182 = vmatprep.subr.mxu0 0.0
    %1183 = vmatpush1.xpose.msra.mxu0 0.0
    %1184 = vmatprep.subr.mxu0 0.0
    %1185 = vmatpush1.xpose.msra.mxu0 0.0
    %1186 = vmatprep.subr.mxu0 0.0
    %1187 = vmatpush1.xpose.msra.mxu0 0.0
    %1188 = vmatprep.subr.mxu0 0.0
    %1189 = vmatpush1.xpose.msra.mxu0 0.0
    %1190 = vmatprep.subr.mxu0 0.0
    %1191 = vmatpush1.xpose.msra.mxu0 0.0
    %1192 = vmatprep.subr.mxu0 0.0
    %1193 = vmatpush1.xpose.msra.mxu0 0.0
    %1194 = vmatprep.mubr.f32.mxu0 0.0
    %1195 = vmatmul.mubr.f32.gmra.mrb[0].mxu0 %v1125
    %v1196 = vpop.f32.mrb[0].mxu0
    %v1197 = vadd.f32 %v59, %v1196
    %v1198 = vpop.f32.mrb[0].mxu0
    %1199 = vdwg.mxu0
    %v1200 = vsel %vm460, %v1197, -inf
    %1201 = vmax.xlane.f32.xlu0 %v1200
    %v1202 = vpop.xlane.xlu0 %1201
    %v1203 = vsub.f32 %v1197, %v1202
    %v1204 = vmul.f32 %v1203, 1.442695
    %v1205 = vpow.pop %v1204
    %v1206 = vsel %vm460, %v1205, 0.0
    %1207 = vadd.xlane.f32.xlu0 %v1206
    %v1208 = vpop.xlane.xlu0 %1207
    %v1209 = vrcp.pop %v1208
    %v1210 = vmul.f32 %v1205, %v1209
    %1211 = vrot.lane.b32.xlu0 %v273, 120
    %v1212 = vpop.permute.xlu0 %1211
    %v1215 = vsel %vm460, %v1210, 0
    %1217 = vmatprep.subr.mxu0 0.0
    %1218 = vmatpush1.msra.mxu0 %v1212
    %1219 = vmatprep.subr.mxu0 0.0
    %1220 = vmatpush1.msra.mxu0 0.0
    %1221 = vmatprep.subr.mxu0 0.0
    %1222 = vmatpush1.msra.mxu0 0.0
    %1223 = vmatprep.subr.mxu0 0.0
    %1224 = vmatpush1.msra.mxu0 0.0
    %1225 = vmatprep.subr.mxu0 0.0
    %1226 = vmatpush1.msra.mxu0 0.0
    %1227 = vmatprep.subr.mxu0 0.0
    %1228 = vmatpush1.msra.mxu0 0.0
    %1229 = vmatprep.subr.mxu0 0.0
    %1230 = vmatpush1.msra.mxu0 0.0
    %1231 = vmatprep.subr.mxu0 0.0
    %1232 = vmatpush1.msra.mxu0 0.0
    %1233 = vmatprep.subr.mxu0 0.0
    %1234 = vmatpush1.msra.mxu0 0.0
    %1235 = vmatprep.subr.mxu0 0.0
    %1236 = vmatpush1.msra.mxu0 0.0
    %1237 = vmatprep.subr.mxu0 0.0
    %1238 = vmatpush1.msra.mxu0 0.0
    %1239 = vmatprep.subr.mxu0 0.0
    %1240 = vmatpush1.msra.mxu0 0.0
    %1241 = vmatprep.subr.mxu0 0.0
    %1242 = vmatpush1.msra.mxu0 0.0
    %1243 = vmatprep.subr.mxu0 0.0
    %1244 = vmatpush1.msra.mxu0 0.0
    %1245 = vmatprep.subr.mxu0 0.0
    %1246 = vmatpush1.msra.mxu0 0.0
    %1247 = vmatprep.subr.mxu0 0.0
    %1248 = vmatpush1.msra.mxu0 0.0
    %1249 = vmatprep.subr.mxu0 0.0
    %1250 = vmatpush1.msra.mxu0 0.0
    %1251 = vmatprep.subr.mxu0 0.0
    %1252 = vmatpush1.msra.mxu0 0.0
    %1253 = vmatprep.subr.mxu0 0.0
    %1254 = vmatpush1.msra.mxu0 0.0
    %1255 = vmatprep.subr.mxu0 0.0
    %1256 = vmatpush1.msra.mxu0 0.0
    %1257 = vmatprep.subr.mxu0 0.0
    %1258 = vmatpush1.msra.mxu0 0.0
    %1259 = vmatprep.subr.mxu0 0.0
    %1260 = vmatpush1.msra.mxu0 0.0
    %1261 = vmatprep.subr.mxu0 0.0
    %1262 = vmatpush1.msra.mxu0 0.0
    %1263 = vmatprep.subr.mxu0 0.0
    %1264 = vmatpush1.msra.mxu0 0.0
    %1265 = vmatprep.subr.mxu0 0.0
    %1266 = vmatpush1.msra.mxu0 0.0
    %1267 = vmatprep.subr.mxu0 0.0
    %1268 = vmatpush1.msra.mxu0 0.0
    %1269 = vmatprep.subr.mxu0 0.0
    %1270 = vmatpush1.msra.mxu0 0.0
    %1271 = vmatprep.subr.mxu0 0.0
    %1272 = vmatpush1.msra.mxu0 0.0
    %1273 = vmatprep.subr.mxu0 0.0
    %1274 = vmatpush1.msra.mxu0 0.0
    %1275 = vmatprep.subr.mxu0 0.0
    %1276 = vmatpush1.msra.mxu0 0.0
    %1277 = vmatprep.subr.mxu0 0.0
    %1278 = vmatpush1.msra.mxu0 0.0
    %1279 = vmatprep.subr.mxu0 0.0
    %1280 = vmatpush1.msra.mxu0 0.0
    %1281 = vmatprep.mubr.f32.mxu0 0.0
    %1282 = vmatmul.mubr.f32.gmra.mrb[0].mxu0 %v1215
    %v1283 = vpop.f32.mrb[0].mxu0
    %v1284 = vadd.f32 0.0, %v1283
    %v1285 = vpop.f32.mrb[0].mxu0
    %1286 = vdwg.mxu0
    %1287 = vst.msk [vmem:[#allocation2 + $0x8] sm:$0xff] %vm460, %v1284
    %1288 = vrot.lane.b32.xlu0 %v459, 120
    %v1289 = vpop.permute.xlu0 %1288
    %v1290 = vsel %vm460, %v1289, 0
    %1292 = vmatprep.subr.mxu0 0.0
    %1293 = vmatpush1.xpose.msra.mxu0 %v1128
    %1294 = vmatprep.subr.mxu0 0.0
    %1295 = vmatpush1.xpose.msra.mxu0 0.0
    %1296 = vmatprep.subr.mxu0 0.0
    %1297 = vmatpush1.xpose.msra.mxu0 0.0
    %1298 = vmatprep.subr.mxu0 0.0
    %1299 = vmatpush1.xpose.msra.mxu0 0.0
    %1300 = vmatprep.subr.mxu0 0.0
    %1301 = vmatpush1.xpose.msra.mxu0 0.0
    %1302 = vmatprep.subr.mxu0 0.0
    %1303 = vmatpush1.xpose.msra.mxu0 0.0
    %1304 = vmatprep.subr.mxu0 0.0
    %1305 = vmatpush1.xpose.msra.mxu0 0.0
    %1306 = vmatprep.subr.mxu0 0.0
    %1307 = vmatpush1.xpose.msra.mxu0 0.0
    %1308 = vmatprep.subr.mxu0 0.0
    %1309 = vmatpush1.xpose.msra.mxu0 0.0
    %1310 = vmatprep.subr.mxu0 0.0
    %1311 = vmatpush1.xpose.msra.mxu0 0.0
    %1312 = vmatprep.subr.mxu0 0.0
    %1313 = vmatpush1.xpose.msra.mxu0 0.0
    %1314 = vmatprep.subr.mxu0 0.0
    %1315 = vmatpush1.xpose.msra.mxu0 0.0
    %1316 = vmatprep.subr.mxu0 0.0
    %1317 = vmatpush1.xpose.msra.mxu0 0.0
    %1318 = vmatprep.subr.mxu0 0.0
    %1319 = vmatpush1.xpose.msra.mxu0 0.0
    %1320 = vmatprep.subr.mxu0 0.0
    %1321 = vmatpush1.xpose.msra.mxu0 0.0
    %1322 = vmatprep.subr.mxu0 0.0
    %1323 = vmatpush1.xpose.msra.mxu0 0.0
    %1324 = vmatprep.subr.mxu0 0.0
    %1325 = vmatpush1.xpose.msra.mxu0 0.0
    %1326 = vmatprep.subr.mxu0 0.0
    %1327 = vmatpush1.xpose.msra.mxu0 0.0
    %1328 = vmatprep.subr.mxu0 0.0
    %1329 = vmatpush1.xpose.msra.mxu0 0.0
    %1330 = vmatprep.subr.mxu0 0.0
    %1331 = vmatpush1.xpose.msra.mxu0 0.0
    %1332 = vmatprep.subr.mxu0 0.0
    %1333 = vmatpush1.xpose.msra.mxu0 0.0
    %1334 = vmatprep.subr.mxu0 0.0
    %1335 = vmatpush1.xpose.msra.mxu0 0.0
    %1336 = vmatprep.subr.mxu0 0.0
    %1337 = vmatpush1.xpose.msra.mxu0 0.0
    %1338 = vmatprep.subr.mxu0 0.0
    %1339 = vmatpush1.xpose.msra.mxu0 0.0
    %1340 = vmatprep.subr.mxu0 0.0
    %1341 = vmatpush1.xpose.msra.mxu0 0.0
    %1342 = vmatprep.subr.mxu0 0.0
    %1343 = vmatpush1.xpose.msra.mxu0 0.0
    %1344 = vmatprep.subr.mxu0 0.0
    %1345 = vmatpush1.xpose.msra.mxu0 0.0
    %1346 = vmatprep.subr.mxu0 0.0
    %1347 = vmatpush1.xpose.msra.mxu0 0.0
    %1348 = vmatprep.subr.mxu0 0.0
    %1349 = vmatpush1.xpose.msra.mxu0 0.0
    %1350 = vmatprep.subr.mxu0 0.0
    %1351 = vmatpush1.xpose.msra.mxu0 0.0
    %1352 = vmatprep.subr.mxu0 0.0
    %1353 = vmatpush1.xpose.msra.mxu0 0.0
    %1354 = vmatprep.subr.mxu0 0.0
    %1355 = vmatpush1.xpose.msra.mxu0 0.0
    %1356 = vmatprep.mubr.f32.mxu0 0.0
    %1357 = vmatmul.mubr.f32.gmra.mrb[0].mxu0 %v1290
    %v1358 = vpop.f32.mrb[0].mxu0
    %v1359 = vadd.f32 %v59, %v1358
    %v1360 = vpop.f32.mrb[0].mxu0
    %1361 = vdwg.mxu0
    %v1362 = vsel %vm460, %v1359, -inf
    %1363 = vmax.xlane.f32.xlu0 %v1362
    %v1364 = vpop.xlane.xlu0 %1363
    %v1365 = vsub.f32 %v1359, %v1364
    %v1366 = vmul.f32 %v1365, 1.442695
    %v1367 = vpow.pop %v1366
    %v1368 = vsel %vm460, %v1367, 0.0
    %1369 = vadd.xlane.f32.xlu0 %v1368
    %v1370 = vpop.xlane.xlu0 %1369
    %v1371 = vrcp.pop %v1370
    %v1372 = vmul.f32 %v1367, %v1371
    %v1374 = vsel %vm460, %v1372, 0
    %1376 = vmatprep.subr.mxu0 0.0
    %1377 = vmatpush1.msra.mxu0 %v1212
    %1378 = vmatprep.subr.mxu0 0.0
    %1379 = vmatpush1.msra.mxu0 0.0
    %1380 = vmatprep.subr.mxu0 0.0
    %1381 = vmatpush1.msra.mxu0 0.0
    %1382 = vmatprep.subr.mxu0 0.0
    %1383 = vmatpush1.msra.mxu0 0.0
    %1384 = vmatprep.subr.mxu0 0.0
    %1385 = vmatpush1.msra.mxu0 0.0
    %1386 = vmatprep.subr.mxu0 0.0
    %1387 = vmatpush1.msra.mxu0 0.0
    %1388 = vmatprep.subr.mxu0 0.0
    %1389 = vmatpush1.msra.mxu0 0.0
    %1390 = vmatprep.subr.mxu0 0.0
    %1391 = vmatpush1.msra.mxu0 0.0
    %1392 = vmatprep.subr.mxu0 0.0
    %1393 = vmatpush1.msra.mxu0 0.0
    %1394 = vmatprep.subr.mxu0 0.0
    %1395 = vmatpush1.msra.mxu0 0.0
    %1396 = vmatprep.subr.mxu0 0.0
    %1397 = vmatpush1.msra.mxu0 0.0
    %1398 = vmatprep.subr.mxu0 0.0
    %1399 = vmatpush1.msra.mxu0 0.0
    %1400 = vmatprep.subr.mxu0 0.0
    %1401 = vmatpush1.msra.mxu0 0.0
    %1402 = vmatprep.subr.mxu0 0.0
    %1403 = vmatpush1.msra.mxu0 0.0
    %1404 = vmatprep.subr.mxu0 0.0
    %1405 = vmatpush1.msra.mxu0 0.0
    %1406 = vmatprep.subr.mxu0 0.0
    %1407 = vmatpush1.msra.mxu0 0.0
    %1408 = vmatprep.subr.mxu0 0.0
    %1409 = vmatpush1.msra.mxu0 0.0
    %1410 = vmatprep.subr.mxu0 0.0
    %1411 = vmatpush1.msra.mxu0 0.0
    %1412 = vmatprep.subr.mxu0 0.0
    %1413 = vmatpush1.msra.mxu0 0.0
    %1414 = vmatprep.subr.mxu0 0.0
    %1415 = vmatpush1.msra.mxu0 0.0
    %1416 = vmatprep.subr.mxu0 0.0
    %1417 = vmatpush1.msra.mxu0 0.0
    %1418 = vmatprep.subr.mxu0 0.0
    %1419 = vmatpush1.msra.mxu0 0.0
    %1420 = vmatprep.subr.mxu0 0.0
    %1421 = vmatpush1.msra.mxu0 0.0
    %1422 = vmatprep.subr.mxu0 0.0
    %1423 = vmatpush1.msra.mxu0 0.0
    %1424 = vmatprep.subr.mxu0 0.0
    %1425 = vmatpush1.msra.mxu0 0.0
    %1426 = vmatprep.subr.mxu0 0.0
    %1427 = vmatpush1.msra.mxu0 0.0
    %1428 = vmatprep.subr.mxu0 0.0
    %1429 = vmatpush1.msra.mxu0 0.0
    %1430 = vmatprep.subr.mxu0 0.0
    %1431 = vmatpush1.msra.mxu0 0.0
    %1432 = vmatprep.subr.mxu0 0.0
    %1433 = vmatpush1.msra.mxu0 0.0
    %1434 = vmatprep.subr.mxu0 0.0
    %1435 = vmatpush1.msra.mxu0 0.0
    %1436 = vmatprep.subr.mxu0 0.0
    %1437 = vmatpush1.msra.mxu0 0.0
    %1438 = vmatprep.subr.mxu0 0.0
    %1439 = vmatpush1.msra.mxu0 0.0
    %1440 = vmatprep.mubr.f32.mxu0 0.0
    %1441 = vmatmul.mubr.f32.gmra.mrb[0].mxu0 %v1374
    %v1442 = vpop.f32.mrb[0].mxu0
    %v1443 = vadd.f32 0.0, %v1442
    %v1444 = vpop.f32.mrb[0].mxu0
    %1445 = vdwg.mxu0
    %1447 = vrot.lane.b32.xlu0 %v1443, 8
    %v1448 = vpop.permute.xlu0 %1447
    %1450 = vst.msk [vmem:[#allocation2 + $0x8] sm:$0xff] %vm787, %v1448
    %1451 = vrot.lane.b32.xlu0 %v459, 112
    %v1452 = vpop.permute.xlu0 %1451
    %1453 = vrot.lane.b32.xlu0 %v273, 112
    %v1454 = vpop.permute.xlu0 %1453
    %v1455 = vsel %vm460, %v1452, 0
    %v1457 = vsel %vm460, %v1454, 0
    %1459 = vmatprep.subr.mxu0 0.0
    %1460 = vmatpush1.xpose.msra.mxu0 %v1457
    %1461 = vmatprep.subr.mxu0 0.0
    %1462 = vmatpush1.xpose.msra.mxu0 0.0
    %1463 = vmatprep.subr.mxu0 0.0
    %1464 = vmatpush1.xpose.msra.mxu0 0.0
    %1465 = vmatprep.subr.mxu0 0.0
    %1466 = vmatpush1.xpose.msra.mxu0 0.0
    %1467 = vmatprep.subr.mxu0 0.0
    %1468 = vmatpush1.xpose.msra.mxu0 0.0
    %1469 = vmatprep.subr.mxu0 0.0
    %1470 = vmatpush1.xpose.msra.mxu0 0.0
    %1471 = vmatprep.subr.mxu0 0.0
    %1472 = vmatpush1.xpose.msra.mxu0 0.0
    %1473 = vmatprep.subr.mxu0 0.0
    %1474 = vmatpush1.xpose.msra.mxu0 0.0
    %1475 = vmatprep.subr.mxu0 0.0
    %1476 = vmatpush1.xpose.msra.mxu0 0.0
    %1477 = vmatprep.subr.mxu0 0.0
    %1478 = vmatpush1.xpose.msra.mxu0 0.0
    %1479 = vmatprep.subr.mxu0 0.0
    %1480 = vmatpush1.xpose.msra.mxu0 0.0
    %1481 = vmatprep.subr.mxu0 0.0
    %1482 = vmatpush1.xpose.msra.mxu0 0.0
    %1483 = vmatprep.subr.mxu0 0.0
    %1484 = vmatpush1.xpose.msra.mxu0 0.0
    %1485 = vmatprep.subr.mxu0 0.0
    %1486 = vmatpush1.xpose.msra.mxu0 0.0
    %1487 = vmatprep.subr.mxu0 0.0
    %1488 = vmatpush1.xpose.msra.mxu0 0.0
    %1489 = vmatprep.subr.mxu0 0.0
    %1490 = vmatpush1.xpose.msra.mxu0 0.0
    %1491 = vmatprep.subr.mxu0 0.0
    %1492 = vmatpush1.xpose.msra.mxu0 0.0
    %1493 = vmatprep.subr.mxu0 0.0
    %1494 = vmatpush1.xpose.msra.mxu0 0.0
    %1495 = vmatprep.subr.mxu0 0.0
    %1496 = vmatpush1.xpose.msra.mxu0 0.0
    %1497 = vmatprep.subr.mxu0 0.0
    %1498 = vmatpush1.xpose.msra.mxu0 0.0
    %1499 = vmatprep.subr.mxu0 0.0
    %1500 = vmatpush1.xpose.msra.mxu0 0.0
    %1501 = vmatprep.subr.mxu0 0.0
    %1502 = vmatpush1.xpose.msra.mxu0 0.0
    %1503 = vmatprep.subr.mxu0 0.0
    %1504 = vmatpush1.xpose.msra.mxu0 0.0
    %1505 = vmatprep.subr.mxu0 0.0
    %1506 = vmatpush1.xpose.msra.mxu0 0.0
    %1507 = vmatprep.subr.mxu0 0.0
    %1508 = vmatpush1.xpose.msra.mxu0 0.0
    %1509 = vmatprep.subr.mxu0 0.0
    %1510 = vmatpush1.xpose.msra.mxu0 0.0
    %1511 = vmatprep.subr.mxu0 0.0
    %1512 = vmatpush1.xpose.msra.mxu0 0.0
    %1513 = vmatprep.subr.mxu0 0.0
    %1514 = vmatpush1.xpose.msra.mxu0 0.0
    %1515 = vmatprep.subr.mxu0 0.0
    %1516 = vmatpush1.xpose.msra.mxu0 0.0
    %1517 = vmatprep.subr.mxu0 0.0
    %1518 = vmatpush1.xpose.msra.mxu0 0.0
    %1519 = vmatprep.subr.mxu0 0.0
    %1520 = vmatpush1.xpose.msra.mxu0 0.0
    %1521 = vmatprep.subr.mxu0 0.0
    %1522 = vmatpush1.xpose.msra.mxu0 0.0
    %1523 = vmatprep.mubr.f32.mxu0 0.0
    %1524 = vmatmul.mubr.f32.gmra.mrb[0].mxu0 %v1455
    %v1525 = vpop.f32.mrb[0].mxu0
    %v1526 = vadd.f32 %v59, %v1525
    %v1527 = vpop.f32.mrb[0].mxu0
    %1528 = vdwg.mxu0
    %v1529 = vsel %vm460, %v1526, -inf
    %1530 = vmax.xlane.f32.xlu0 %v1529
    %v1531 = vpop.xlane.xlu0 %1530
    %v1532 = vsub.f32 %v1526, %v1531
    %v1533 = vmul.f32 %v1532, 1.442695
    %v1534 = vpow.pop %v1533
    %v1535 = vsel %vm460, %v1534, 0.0
    %1536 = vadd.xlane.f32.xlu0 %v1535
    %v1537 = vpop.xlane.xlu0 %1536
    %v1538 = vrcp.pop %v1537
    %v1539 = vmul.f32 %v1534, %v1538
    %1540 = vrot.lane.b32.xlu0 %v273, 104
    %v1541 = vpop.permute.xlu0 %1540
    %v1544 = vsel %vm460, %v1539, 0
    %1546 = vmatprep.subr.mxu0 0.0
    %1547 = vmatpush1.msra.mxu0 %v1541
    %1548 = vmatprep.subr.mxu0 0.0
    %1549 = vmatpush1.msra.mxu0 0.0
    %1550 = vmatprep.subr.mxu0 0.0
    %1551 = vmatpush1.msra.mxu0 0.0
    %1552 = vmatprep.subr.mxu0 0.0
    %1553 = vmatpush1.msra.mxu0 0.0
    %1554 = vmatprep.subr.mxu0 0.0
    %1555 = vmatpush1.msra.mxu0 0.0
    %1556 = vmatprep.subr.mxu0 0.0
    %1557 = vmatpush1.msra.mxu0 0.0
    %1558 = vmatprep.subr.mxu0 0.0
    %1559 = vmatpush1.msra.mxu0 0.0
    %1560 = vmatprep.subr.mxu0 0.0
    %1561 = vmatpush1.msra.mxu0 0.0
    %1562 = vmatprep.subr.mxu0 0.0
    %1563 = vmatpush1.msra.mxu0 0.0
    %1564 = vmatprep.subr.mxu0 0.0
    %1565 = vmatpush1.msra.mxu0 0.0
    %1566 = vmatprep.subr.mxu0 0.0
    %1567 = vmatpush1.msra.mxu0 0.0
    %1568 = vmatprep.subr.mxu0 0.0
    %1569 = vmatpush1.msra.mxu0 0.0
    %1570 = vmatprep.subr.mxu0 0.0
    %1571 = vmatpush1.msra.mxu0 0.0
    %1572 = vmatprep.subr.mxu0 0.0
    %1573 = vmatpush1.msra.mxu0 0.0
    %1574 = vmatprep.subr.mxu0 0.0
    %1575 = vmatpush1.msra.mxu0 0.0
    %1576 = vmatprep.subr.mxu0 0.0
    %1577 = vmatpush1.msra.mxu0 0.0
    %1578 = vmatprep.subr.mxu0 0.0
    %1579 = vmatpush1.msra.mxu0 0.0
    %1580 = vmatprep.subr.mxu0 0.0
    %1581 = vmatpush1.msra.mxu0 0.0
    %1582 = vmatprep.subr.mxu0 0.0
    %1583 = vmatpush1.msra.mxu0 0.0
    %1584 = vmatprep.subr.mxu0 0.0
    %1585 = vmatpush1.msra.mxu0 0.0
    %1586 = vmatprep.subr.mxu0 0.0
    %1587 = vmatpush1.msra.mxu0 0.0
    %1588 = vmatprep.subr.mxu0 0.0
    %1589 = vmatpush1.msra.mxu0 0.0
    %1590 = vmatprep.subr.mxu0 0.0
    %1591 = vmatpush1.msra.mxu0 0.0
    %1592 = vmatprep.subr.mxu0 0.0
    %1593 = vmatpush1.msra.mxu0 0.0
    %1594 = vmatprep.subr.mxu0 0.0
    %1595 = vmatpush1.msra.mxu0 0.0
    %1596 = vmatprep.subr.mxu0 0.0
    %1597 = vmatpush1.msra.mxu0 0.0
    %1598 = vmatprep.subr.mxu0 0.0
    %1599 = vmatpush1.msra.mxu0 0.0
    %1600 = vmatprep.subr.mxu0 0.0
    %1601 = vmatpush1.msra.mxu0 0.0
    %1602 = vmatprep.subr.mxu0 0.0
    %1603 = vmatpush1.msra.mxu0 0.0
    %1604 = vmatprep.subr.mxu0 0.0
    %1605 = vmatpush1.msra.mxu0 0.0
    %1606 = vmatprep.subr.mxu0 0.0
    %1607 = vmatpush1.msra.mxu0 0.0
    %1608 = vmatprep.subr.mxu0 0.0
    %1609 = vmatpush1.msra.mxu0 0.0
    %1610 = vmatprep.mubr.f32.mxu0 0.0
    %1611 = vmatmul.mubr.f32.gmra.mrb[0].mxu0 %v1544
    %v1612 = vpop.f32.mrb[0].mxu0
    %v1613 = vadd.f32 0.0, %v1612
    %v1614 = vpop.f32.mrb[0].mxu0
    %1615 = vdwg.mxu0
    %1617 = vrot.lane.b32.xlu0 %v1613, 16
    %v1618 = vpop.permute.xlu0 %1617
    %1620 = vst.msk [vmem:[#allocation2 + $0x8] sm:$0xff] %vm958, %v1618
    %1621 = vrot.lane.b32.xlu0 %v459, 104
    %v1622 = vpop.permute.xlu0 %1621
    %v1623 = vsel %vm460, %v1622, 0
    %1625 = vmatprep.subr.mxu0 0.0
    %1626 = vmatpush1.xpose.msra.mxu0 %v1457
    %1627 = vmatprep.subr.mxu0 0.0
    %1628 = vmatpush1.xpose.msra.mxu0 0.0
    %1629 = vmatprep.subr.mxu0 0.0
    %1630 = vmatpush1.xpose.msra.mxu0 0.0
    %1631 = vmatprep.subr.mxu0 0.0
    %1632 = vmatpush1.xpose.msra.mxu0 0.0
    %1633 = vmatprep.subr.mxu0 0.0
    %1634 = vmatpush1.xpose.msra.mxu0 0.0
    %1635 = vmatprep.subr.mxu0 0.0
    %1636 = vmatpush1.xpose.msra.mxu0 0.0
    %1637 = vmatprep.subr.mxu0 0.0
    %1638 = vmatpush1.xpose.msra.mxu0 0.0
    %1639 = vmatprep.subr.mxu0 0.0
    %1640 = vmatpush1.xpose.msra.mxu0 0.0
    %1641 = vmatprep.subr.mxu0 0.0
    %1642 = vmatpush1.xpose.msra.mxu0 0.0
    %1643 = vmatprep.subr.mxu0 0.0
    %1644 = vmatpush1.xpose.msra.mxu0 0.0
    %1645 = vmatprep.subr.mxu0 0.0
    %1646 = vmatpush1.xpose.msra.mxu0 0.0
    %1647 = vmatprep.subr.mxu0 0.0
    %1648 = vmatpush1.xpose.msra.mxu0 0.0
    %1649 = vmatprep.subr.mxu0 0.0
    %1650 = vmatpush1.xpose.msra.mxu0 0.0
    %1651 = vmatprep.subr.mxu0 0.0
    %1652 = vmatpush1.xpose.msra.mxu0 0.0
    %1653 = vmatprep.subr.mxu0 0.0
    %1654 = vmatpush1.xpose.msra.mxu0 0.0
    %1655 = vmatprep.subr.mxu0 0.0
    %1656 = vmatpush1.xpose.msra.mxu0 0.0
    %1657 = vmatprep.subr.mxu0 0.0
    %1658 = vmatpush1.xpose.msra.mxu0 0.0
    %1659 = vmatprep.subr.mxu0 0.0
    %1660 = vmatpush1.xpose.msra.mxu0 0.0
    %1661 = vmatprep.subr.mxu0 0.0
    %1662 = vmatpush1.xpose.msra.mxu0 0.0
    %1663 = vmatprep.subr.mxu0 0.0
    %1664 = vmatpush1.xpose.msra.mxu0 0.0
    %1665 = vmatprep.subr.mxu0 0.0
    %1666 = vmatpush1.xpose.msra.mxu0 0.0
    %1667 = vmatprep.subr.mxu0 0.0
    %1668 = vmatpush1.xpose.msra.mxu0 0.0
    %1669 = vmatprep.subr.mxu0 0.0
    %1670 = vmatpush1.xpose.msra.mxu0 0.0
    %1671 = vmatprep.subr.mxu0 0.0
    %1672 = vmatpush1.xpose.msra.mxu0 0.0
    %1673 = vmatprep.subr.mxu0 0.0
    %1674 = vmatpush1.xpose.msra.mxu0 0.0
    %1675 = vmatprep.subr.mxu0 0.0
    %1676 = vmatpush1.xpose.msra.mxu0 0.0
    %1677 = vmatprep.subr.mxu0 0.0
    %1678 = vmatpush1.xpose.msra.mxu0 0.0
    %1679 = vmatprep.subr.mxu0 0.0
    %1680 = vmatpush1.xpose.msra.mxu0 0.0
    %1681 = vmatprep.subr.mxu0 0.0
    %1682 = vmatpush1.xpose.msra.mxu0 0.0
    %1683 = vmatprep.subr.mxu0 0.0
    %1684 = vmatpush1.xpose.msra.mxu0 0.0
    %1685 = vmatprep.subr.mxu0 0.0
    %1686 = vmatpush1.xpose.msra.mxu0 0.0
    %1687 = vmatprep.subr.mxu0 0.0
    %1688 = vmatpush1.xpose.msra.mxu0 0.0
    %1689 = vmatprep.mubr.f32.mxu0 0.0
    %1690 = vmatmul.mubr.f32.gmra.mrb[0].mxu0 %v1623
    %v1691 = vpop.f32.mrb[0].mxu0
    %v1692 = vadd.f32 %v59, %v1691
    %v1693 = vpop.f32.mrb[0].mxu0
    %1694 = vdwg.mxu0
    %v1695 = vsel %vm460, %v1692, -inf
    %1696 = vmax.xlane.f32.xlu0 %v1695
    %v1697 = vpop.xlane.xlu0 %1696
    %v1698 = vsub.f32 %v1692, %v1697
    %v1699 = vmul.f32 %v1698, 1.442695
    %v1700 = vpow.pop %v1699
    %v1701 = vsel %vm460, %v1700, 0.0
    %1702 = vadd.xlane.f32.xlu0 %v1701
    %v1703 = vpop.xlane.xlu0 %1702
    %v1704 = vrcp.pop %v1703
    %v1705 = vmul.f32 %v1700, %v1704
    %v1707 = vsel %vm460, %v1705, 0
    %1709 = vmatprep.subr.mxu0 0.0
    %1710 = vmatpush1.msra.mxu0 %v1541
    %1711 = vmatprep.subr.mxu0 0.0
    %1712 = vmatpush1.msra.mxu0 0.0
    %1713 = vmatprep.subr.mxu0 0.0
    %1714 = vmatpush1.msra.mxu0 0.0
    %1715 = vmatprep.subr.mxu0 0.0
    %1716 = vmatpush1.msra.mxu0 0.0
    %1717 = vmatprep.subr.mxu0 0.0
    %1718 = vmatpush1.msra.mxu0 0.0
    %1719 = vmatprep.subr.mxu0 0.0
    %1720 = vmatpush1.msra.mxu0 0.0
    %1721 = vmatprep.subr.mxu0 0.0
    %1722 = vmatpush1.msra.mxu0 0.0
    %1723 = vmatprep.subr.mxu0 0.0
    %1724 = vmatpush1.msra.mxu0 0.0
    %1725 = vmatprep.subr.mxu0 0.0
    %1726 = vmatpush1.msra.mxu0 0.0
    %1727 = vmatprep.subr.mxu0 0.0
    %1728 = vmatpush1.msra.mxu0 0.0
    %1729 = vmatprep.subr.mxu0 0.0
    %1730 = vmatpush1.msra.mxu0 0.0
    %1731 = vmatprep.subr.mxu0 0.0
    %1732 = vmatpush1.msra.mxu0 0.0
    %1733 = vmatprep.subr.mxu0 0.0
    %1734 = vmatpush1.msra.mxu0 0.0
    %1735 = vmatprep.subr.mxu0 0.0
    %1736 = vmatpush1.msra.mxu0 0.0
    %1737 = vmatprep.subr.mxu0 0.0
    %1738 = vmatpush1.msra.mxu0 0.0
    %1739 = vmatprep.subr.mxu0 0.0
    %1740 = vmatpush1.msra.mxu0 0.0
    %1741 = vmatprep.subr.mxu0 0.0
    %1742 = vmatpush1.msra.mxu0 0.0
    %1743 = vmatprep.subr.mxu0 0.0
    %1744 = vmatpush1.msra.mxu0 0.0
    %1745 = vmatprep.subr.mxu0 0.0
    %1746 = vmatpush1.msra.mxu0 0.0
    %1747 = vmatprep.subr.mxu0 0.0
    %1748 = vmatpush1.msra.mxu0 0.0
    %1749 = vmatprep.subr.mxu0 0.0
    %1750 = vmatpush1.msra.mxu0 0.0
    %1751 = vmatprep.subr.mxu0 0.0
    %1752 = vmatpush1.msra.mxu0 0.0
    %1753 = vmatprep.subr.mxu0 0.0
    %1754 = vmatpush1.msra.mxu0 0.0
    %1755 = vmatprep.subr.mxu0 0.0
    %1756 = vmatpush1.msra.mxu0 0.0
    %1757 = vmatprep.subr.mxu0 0.0
    %1758 = vmatpush1.msra.mxu0 0.0
    %1759 = vmatprep.subr.mxu0 0.0
    %1760 = vmatpush1.msra.mxu0 0.0
    %1761 = vmatprep.subr.mxu0 0.0
    %1762 = vmatpush1.msra.mxu0 0.0
    %1763 = vmatprep.subr.mxu0 0.0
    %1764 = vmatpush1.msra.mxu0 0.0
    %1765 = vmatprep.subr.mxu0 0.0
    %1766 = vmatpush1.msra.mxu0 0.0
    %1767 = vmatprep.subr.mxu0 0.0
    %1768 = vmatpush1.msra.mxu0 0.0
    %1769 = vmatprep.subr.mxu0 0.0
    %1770 = vmatpush1.msra.mxu0 0.0
    %1771 = vmatprep.subr.mxu0 0.0
    %1772 = vmatpush1.msra.mxu0 0.0
    %1773 = vmatprep.mubr.f32.mxu0 0.0
    %1774 = vmatmul.mubr.f32.gmra.mrb[0].mxu0 %v1707
    %v1775 = vpop.f32.mrb[0].mxu0
    %v1776 = vadd.f32 0.0, %v1775
    %v1777 = vpop.f32.mrb[0].mxu0
    %1778 = vdwg.mxu0
    %1780 = vrot.lane.b32.xlu0 %v1776, 24
    %v1781 = vpop.permute.xlu0 %1780
    %1783 = vst.msk [vmem:[#allocation2 + $0x8] sm:$0xff] %vm1122, %v1781
    %v1784 = vld [vmem:[#allocation2] sm:$0xff]
    %v1785 = vld [vmem:[#allocation2 + $0x8] sm:$0xff]
    %v1786 = vlaneseq
    %v1787 = vshrl.u32 %v1786, 7
    %v1788 = vsub.s32 0, %v1787
    %v1789 = vrot.slane %v61, %v1788
    %v1791 = vsel %vm62, %v1784, 0
    %v1794 = vsel %vm62, %v1785, 0
    %1796 = vmatprep.subr.mxu0 0.0
    %1797 = vmatpush1.msra.mxu0 %v30
    %1798 = vmatprep.subr.mxu0 0.0
    %1799 = vmatpush1.msra.mxu0 %v31
    %1800 = vmatprep.subr.mxu0 0.0
    %1801 = vmatpush1.msra.mxu0 %v32
    %1802 = vmatprep.subr.mxu0 0.0
    %1803 = vmatpush1.msra.mxu0 %v33
    %1804 = vmatprep.subr.mxu0 0.0
    %1805 = vmatpush1.msra.mxu0 0.0
    %1806 = vmatprep.subr.mxu0 0.0
    %1807 = vmatpush1.msra.mxu0 0.0
    %1808 = vmatprep.subr.mxu0 0.0
    %1809 = vmatpush1.msra.mxu0 0.0
    %1810 = vmatprep.subr.mxu0 0.0
    %1811 = vmatpush1.msra.mxu0 0.0
    %1812 = vmatprep.subr.mxu0 0.0
    %1813 = vmatpush1.msra.mxu0 0.0
    %1814 = vmatprep.subr.mxu0 0.0
    %1815 = vmatpush1.msra.mxu0 0.0
    %1816 = vmatprep.subr.mxu0 0.0
    %1817 = vmatpush1.msra.mxu0 0.0
    %1818 = vmatprep.subr.mxu0 0.0
    %1819 = vmatpush1.msra.mxu0 0.0
    %1820 = vmatprep.subr.mxu0 0.0
    %1821 = vmatpush1.msra.mxu0 0.0
    %1822 = vmatprep.subr.mxu0 0.0
    %1823 = vmatpush1.msra.mxu0 0.0
    %1824 = vmatprep.subr.mxu0 0.0
    %1825 = vmatpush1.msra.mxu0 0.0
    %1826 = vmatprep.subr.mxu0 0.0
    %1827 = vmatpush1.msra.mxu0 0.0
    %1828 = vmatprep.subr.mxu0 0.0
    %1829 = vmatpush1.msra.mxu0 0.0
    %1830 = vmatprep.subr.mxu0 0.0
    %1831 = vmatpush1.msra.mxu0 0.0
    %1832 = vmatprep.subr.mxu0 0.0
    %1833 = vmatpush1.msra.mxu0 0.0
    %1834 = vmatprep.subr.mxu0 0.0
    %1835 = vmatpush1.msra.mxu0 0.0
    %1836 = vmatprep.subr.mxu0 0.0
    %1837 = vmatpush1.msra.mxu0 0.0
    %1838 = vmatprep.subr.mxu0 0.0
    %1839 = vmatpush1.msra.mxu0 0.0
    %1840 = vmatprep.subr.mxu0 0.0
    %1841 = vmatpush1.msra.mxu0 0.0
    %1842 = vmatprep.subr.mxu0 0.0
    %1843 = vmatpush1.msra.mxu0 0.0
    %1844 = vmatprep.subr.mxu0 0.0
    %1845 = vmatpush1.msra.mxu0 0.0
    %1846 = vmatprep.subr.mxu0 0.0
    %1847 = vmatpush1.msra.mxu0 0.0
    %1848 = vmatprep.subr.mxu0 0.0
    %1849 = vmatpush1.msra.mxu0 0.0
    %1850 = vmatprep.subr.mxu0 0.0
    %1851 = vmatpush1.msra.mxu0 0.0
    %1852 = vmatprep.subr.mxu0 0.0
    %1853 = vmatpush1.msra.mxu0 0.0
    %1854 = vmatprep.subr.mxu0 0.0
    %1855 = vmatpush1.msra.mxu0 0.0
    %1856 = vmatprep.subr.mxu0 0.0
    %1857 = vmatpush1.msra.mxu0 0.0
    %1858 = vmatprep.subr.mxu0 0.0
    %1859 = vmatpush1.msra.mxu0 0.0
    %1860 = vmatprep.mubr.f32.mxu0 0.0
    %1861 = vmatmul.mubr.f32.gmra.mrb[0].mxu0 %v1791
    %v1862 = vpop.f32.mrb[0].mxu0
    %v1863 = vadd.f32 %v1789, %v1862
    %v1864 = vpop.f32.mrb[0].mxu0
    %1865 = vmatprep.mubr.f32.mxu0 0.0
    %1866 = vmatmul.mubr.f32.gmra.mrb[0].mxu0 %v1794
    %v1867 = vpop.f32.mrb[0].mxu0
    %v1868 = vadd.f32 %v1789, %v1867
    %v1869 = vpop.f32.mrb[0].mxu0
    %1870 = vdwg.mxu0
    %v1871 = vadd.f32 %v20, %v1863
    %v1872 = vadd.f32 %v21, %v1868
    %v1873 = vsel %vm62, %v1871, 0.0
    %1874 = vadd.xlane.f32.xlu0 %v1873
    %v1875 = vpop.xlane.xlu0 %1874
    %v1876 = vsel %vm62, %v1872, 0.0
    %1877 = vadd.xlane.f32.xlu0 %v1876
    %v1878 = vpop.xlane.xlu0 %1877
    %v1879 = vmul.f32 %v1875, %v69
    %v1880 = vmul.f32 %v1878, %v69
    %v1881 = vsub.f32 %v1871, %v1879
    %v1882 = vsub.f32 %v1872, %v1880
    %v1883 = vmul.f32 %v1881, %v1881
    %v1884 = vmul.f32 %v1882, %v1882
    %v1885 = vsel %vm62, %v1883, 0.0
    %1886 = vadd.xlane.f32.xlu0 %v1885
    %v1887 = vpop.xlane.xlu0 %1886
    %v1888 = vsel %vm62, %v1884, 0.0
    %1889 = vadd.xlane.f32.xlu0 %v1888
    %v1890 = vpop.xlane.xlu0 %1889
    %v1891 = vmul.f32 %v1887, %v69
    %v1892 = vmul.f32 %v1890, %v69
    %v1893 = vadd.f32 %v1891, 1e-05
    %v1894 = vadd.f32 %v1892, 1e-05
    %v1895 = vrsqrt.pop %v1893
    %v1896 = vrsqrt.pop %v1894
    %v1897 = vmul.f32 %v1881, %v1895
    %v1898 = vmul.f32 %v1882, %v1896
    %v1899 = vlaneseq
    %v1900 = vshrl.u32 %v1899, 7
    %v1901 = vsub.s32 4, %v1900
    %v1902 = vrot.slane %v60, %v1901
    %v1903 = vmul.f32 %v1897, %v1902
    %v1904 = vmul.f32 %v1898, %v1902
    %v1905 = vlaneseq
    %v1906 = vshrl.u32 %v1905, 7
    %v1907 = vsub.s32 5, %v1906
    %v1908 = vrot.slane %v60, %v1907
    %v1909 = vadd.f32 %v1903, %v1908
    %v1910 = vadd.f32 %v1904, %v1908
    %v1911 = vlaneseq
    %v1912 = vshrl.u32 %v1911, 7
    %v1913 = vsub.s32 0, %v1912
    %v1914 = vrot.slane %v50, %v1913
    %v1916 = vsel %vm62, %v1909, 0
    %v1919 = vsel %vm62, %v1910, 0
    %1921 = vmatprep.subr.mxu0 0.0
    %1922 = vmatpush1.msra.mxu0 %v42
    %1923 = vmatprep.subr.mxu0 0.0
    %1924 = vmatpush1.msra.mxu0 %v43
    %1925 = vmatprep.subr.mxu0 0.0
    %1926 = vmatpush1.msra.mxu0 %v44
    %1927 = vmatprep.subr.mxu0 0.0
    %1928 = vmatpush1.msra.mxu0 %v45
    %1929 = vmatprep.subr.mxu0 0.0
    %1930 = vmatpush1.msra.mxu0 0.0
    %1931 = vmatprep.subr.mxu0 0.0
    %1932 = vmatpush1.msra.mxu0 0.0
    %1933 = vmatprep.subr.mxu0 0.0
    %1934 = vmatpush1.msra.mxu0 0.0
    %1935 = vmatprep.subr.mxu0 0.0
    %1936 = vmatpush1.msra.mxu0 0.0
    %1937 = vmatprep.subr.mxu0 0.0
    %1938 = vmatpush1.msra.mxu0 0.0
    %1939 = vmatprep.subr.mxu0 0.0
    %1940 = vmatpush1.msra.mxu0 0.0
    %1941 = vmatprep.subr.mxu0 0.0
    %1942 = vmatpush1.msra.mxu0 0.0
    %1943 = vmatprep.subr.mxu0 0.0
    %1944 = vmatpush1.msra.mxu0 0.0
    %1945 = vmatprep.subr.mxu0 0.0
    %1946 = vmatpush1.msra.mxu0 0.0
    %1947 = vmatprep.subr.mxu0 0.0
    %1948 = vmatpush1.msra.mxu0 0.0
    %1949 = vmatprep.subr.mxu0 0.0
    %1950 = vmatpush1.msra.mxu0 0.0
    %1951 = vmatprep.subr.mxu0 0.0
    %1952 = vmatpush1.msra.mxu0 0.0
    %1953 = vmatprep.subr.mxu0 0.0
    %1954 = vmatpush1.msra.mxu0 0.0
    %1955 = vmatprep.subr.mxu0 0.0
    %1956 = vmatpush1.msra.mxu0 0.0
    %1957 = vmatprep.subr.mxu0 0.0
    %1958 = vmatpush1.msra.mxu0 0.0
    %1959 = vmatprep.subr.mxu0 0.0
    %1960 = vmatpush1.msra.mxu0 0.0
    %1961 = vmatprep.subr.mxu0 0.0
    %1962 = vmatpush1.msra.mxu0 0.0
    %1963 = vmatprep.subr.mxu0 0.0
    %1964 = vmatpush1.msra.mxu0 0.0
    %1965 = vmatprep.subr.mxu0 0.0
    %1966 = vmatpush1.msra.mxu0 0.0
    %1967 = vmatprep.subr.mxu0 0.0
    %1968 = vmatpush1.msra.mxu0 0.0
    %1969 = vmatprep.subr.mxu0 0.0
    %1970 = vmatpush1.msra.mxu0 0.0
    %1971 = vmatprep.subr.mxu0 0.0
    %1972 = vmatpush1.msra.mxu0 0.0
    %1973 = vmatprep.subr.mxu0 0.0
    %1974 = vmatpush1.msra.mxu0 0.0
    %1975 = vmatprep.subr.mxu0 0.0
    %1976 = vmatpush1.msra.mxu0 0.0
    %1977 = vmatprep.subr.mxu0 0.0
    %1978 = vmatpush1.msra.mxu0 0.0
    %1979 = vmatprep.subr.mxu0 0.0
    %1980 = vmatpush1.msra.mxu0 0.0
    %1981 = vmatprep.subr.mxu0 0.0
    %1982 = vmatpush1.msra.mxu0 0.0
    %1983 = vmatprep.subr.mxu0 0.0
    %1984 = vmatpush1.msra.mxu0 0.0
    %1985 = vmatprep.mubr.f32.mxu0 0.0
    %1986 = vmatmul.mubr.f32.gmra.mrb[0].mxu0 %v1916
    %v1987 = vpop.f32.mrb[0].mxu0
    %v1988 = vadd.f32 %v1914, %v1987
    %v1989 = vpop.f32.mrb[0].mxu0
    %1990 = vmatprep.mubr.f32.mxu0 0.0
    %1991 = vmatmul.mubr.f32.gmra.mrb[0].mxu0 %v1919
    %v1992 = vpop.f32.mrb[0].mxu0
    %v1993 = vadd.f32 %v1914, %v1992
    %v1994 = vpop.f32.mrb[0].mxu0
    %1995 = vdwg.mxu0
    %v1996 = vmul.f32 %v1988, %v1988
    %v1997 = vmul.f32 %v1993, %v1993
    %v1998 = vmul.f32 %v1988, %v1996
    %v1999 = vmul.f32 %v1993, %v1997
    %v2000 = vmul.f32 %v1998, 0.044715
    %v2001 = vmul.f32 %v1999, 0.044715
    %v2002 = vadd.f32 %v1988, %v2000
    %v2003 = vadd.f32 %v1993, %v2001
    %v2004 = vmul.f32 %v2002, 0.7978846
    %v2005 = vmul.f32 %v2003, 0.7978846
    %v2006 = vtanh.pop %v2004
    %v2007 = vtanh.pop %v2005
    %v2008 = vadd.f32 %v2006, 1.0
    %v2009 = vadd.f32 %v2007, 1.0
    %v2010 = vmul.f32 %v2008, 0.5
    %v2011 = vmul.f32 %v2009, 0.5
    %v2012 = vmul.f32 %v1988, %v2010
    %v2013 = vmul.f32 %v1993, %v2011
    %v2014 = vlaneseq
    %v2015 = vshrl.u32 %v2014, 7
    %v2016 = vsub.s32 1, %v2015
    %v2017 = vrot.slane %v61, %v2016
    %2018 = vmatprep.subr.mxu0 0.0
    %2019 = vmatpush1.xpose.msra.mxu0 %v46
    %2020 = vmatprep.subr.mxu0 0.0
    %2021 = vmatpush1.xpose.msra.mxu0 %v47
    %2022 = vmatprep.subr.mxu0 0.0
    %2023 = vmatpush1.xpose.msra.mxu0 %v48
    %2024 = vmatprep.subr.mxu0 0.0
    %2025 = vmatpush1.xpose.msra.mxu0 %v49
    %2026 = vmatprep.subr.mxu0 0.0
    %2027 = vmatpush1.xpose.msra.mxu0 0.0
    %2028 = vmatprep.subr.mxu0 0.0
    %2029 = vmatpush1.xpose.msra.mxu0 0.0
    %2030 = vmatprep.subr.mxu0 0.0
    %2031 = vmatpush1.xpose.msra.mxu0 0.0
    %2032 = vmatprep.subr.mxu0 0.0
    %2033 = vmatpush1.xpose.msra.mxu0 0.0
    %2034 = vmatprep.subr.mxu0 0.0
    %2035 = vmatpush1.xpose.msra.mxu0 0.0
    %2036 = vmatprep.subr.mxu0 0.0
    %2037 = vmatpush1.xpose.msra.mxu0 0.0
    %2038 = vmatprep.subr.mxu0 0.0
    %2039 = vmatpush1.xpose.msra.mxu0 0.0
    %2040 = vmatprep.subr.mxu0 0.0
    %2041 = vmatpush1.xpose.msra.mxu0 0.0
    %2042 = vmatprep.subr.mxu0 0.0
    %2043 = vmatpush1.xpose.msra.mxu0 0.0
    %2044 = vmatprep.subr.mxu0 0.0
    %2045 = vmatpush1.xpose.msra.mxu0 0.0
    %2046 = vmatprep.subr.mxu0 0.0
    %2047 = vmatpush1.xpose.msra.mxu0 0.0
    %2048 = vmatprep.subr.mxu0 0.0
    %2049 = vmatpush1.xpose.msra.mxu0 0.0
    %2050 = vmatprep.subr.mxu0 0.0
    %2051 = vmatpush1.xpose.msra.mxu0 0.0
    %2052 = vmatprep.subr.mxu0 0.0
    %2053 = vmatpush1.xpose.msra.mxu0 0.0
    %2054 = vmatprep.subr.mxu0 0.0
    %2055 = vmatpush1.xpose.msra.mxu0 0.0
    %2056 = vmatprep.subr.mxu0 0.0
    %2057 = vmatpush1.xpose.msra.mxu0 0.0
    %2058 = vmatprep.subr.mxu0 0.0
    %2059 = vmatpush1.xpose.msra.mxu0 0.0
    %2060 = vmatprep.subr.mxu0 0.0
    %2061 = vmatpush1.xpose.msra.mxu0 0.0
    %2062 = vmatprep.subr.mxu0 0.0
    %2063 = vmatpush1.xpose.msra.mxu0 0.0
    %2064 = vmatprep.subr.mxu0 0.0
    %2065 = vmatpush1.xpose.msra.mxu0 0.0
    %2066 = vmatprep.subr.mxu0 0.0
    %2067 = vmatpush1.xpose.msra.mxu0 0.0
    %2068 = vmatprep.subr.mxu0 0.0
    %2069 = vmatpush1.xpose.msra.mxu0 0.0
    %2070 = vmatprep.subr.mxu0 0.0
    %2071 = vmatpush1.xpose.msra.mxu0 0.0
    %2072 = vmatprep.subr.mxu0 0.0
    %2073 = vmatpush1.xpose.msra.mxu0 0.0
    %2074 = vmatprep.subr.mxu0 0.0
    %2075 = vmatpush1.xpose.msra.mxu0 0.0
    %2076 = vmatprep.subr.mxu0 0.0
    %2077 = vmatpush1.xpose.msra.mxu0 0.0
    %2078 = vmatprep.subr.mxu0 0.0
    %2079 = vmatpush1.xpose.msra.mxu0 0.0
    %2080 = vmatprep.subr.mxu0 0.0
    %2081 = vmatpush1.xpose.msra.mxu0 0.0
    %2082 = vmatprep.mubr.f32.mxu0 0.0
    %2083 = vmatmul.mubr.f32.gmra.mrb[0].mxu0 %v2012
    %v2084 = vpop.f32.mrb[0].mxu0
    %v2085 = vadd.f32 %v2017, %v2084
    %v2086 = vpop.f32.mrb[0].mxu0
    %2087 = vmatprep.mubr.f32.mxu0 0.0
    %2088 = vmatmul.mubr.f32.gmra.mrb[0].mxu0 %v2013
    %v2089 = vpop.f32.mrb[0].mxu0
    %v2090 = vadd.f32 %v2017, %v2089
    %v2091 = vpop.f32.mrb[0].mxu0
    %2092 = vdwg.mxu0
    %v2093 = vadd.f32 %v1871, %v2085
    %v2094 = vadd.f32 %v1872, %v2090
    %2095 = vst.msk [vmem:[#allocation3] sm:$0xff] %vm62, %v2093
    %2096 = vst.msk [vmem:[#allocation3 + $0x8] sm:$0xff] %vm62, %v2094
    // Predicated region
    $region18: #{gpt_crosslayer_block.1} parent=1 // pred_check
      _
    $region19: #{gpt_crosslayer_block.1} parent=1 // pred_check_branch
      %2098 = sbr.rel (0) target = $region21
    $region20: #{gpt_crosslayer_block.1} parent=1 // pred_region
      %s2100 = ssub.s32 256, 256
      %2101 = vsyncadd [#allocation4], %s2100
      %s2102 = sshll.u32 [#allocation3], 4
      %s2103 = int_to_ptr.vmem [resolvable:$true] %s2102
      %2108 = dma.vmem_to_hbm [thread:$0]  %s2103, 256, %s4, [#allocation4], 128, 128, 8
    $region21: #{gpt_crosslayer_block.1} parent=1 // pred_fallthru
      _
    // Predicated region
    $region22: #{gpt_crosslayer_block.1} parent=1 // pred_check
      _
    $region23: #{gpt_crosslayer_block.1} parent=1 // pred_check_branch
      %2110 = sbr.rel (0) target = $region25
    $region24: #{gpt_crosslayer_block.1} parent=1 // pred_region
      _
    $region25: #{gpt_crosslayer_block.1} parent=1 // pred_fallthru
      _
    // Predicated region
    $region26: #{gpt_crosslayer_block.1} parent=1 // pred_check
      _
    $region27: #{gpt_crosslayer_block.1} parent=1 // pred_check_branch
      %2112 = sbr.rel (0) target = $region29
    $region28: #{gpt_crosslayer_block.1} parent=1 // pred_region
      %2113 = dma.done [#allocation4], 256
    $region29: #{gpt_crosslayer_block.1} parent=1 // pred_fallthru
      _
    // Predicated region
    $region30: #{gpt_crosslayer_block.1} parent=1 // pred_check
      _
    $region31: #{gpt_crosslayer_block.1} parent=1 // pred_check_branch
      %2115 = sbr.rel (0) target = $region33
    $region32: #{gpt_crosslayer_block.1} parent=1 // pred_region
      _
    $region33: #{gpt_crosslayer_block.1} parent=1 // pred_fallthru
      _
    %2116 = vsyncpa [#allocation4], 1

</llo_original>
